<compile_context>
chip_gen: v7x
topology: tpu7x:2x2x1
jax: 0.10.0
libtpu: 0.0.40
codegen_flags: <defaults>
</compile_context>

<pallas_src>
import jax
import jax.numpy as jnp
from jax import lax
from jax.experimental import pallas as pl
from jax.experimental.pallas import tpu as pltpu

VMEM_SPEC = pl.BlockSpec(memory_space=pltpu.MemorySpace.VMEM)
VMEM_LIMIT = 32 * 1024 * 1024   # well under v7x's 64 MiB physical VMEM


def _full_spec(shape):
    """Whole-array block (same block every grid step -> stays VMEM-resident)."""
    return pl.BlockSpec(shape, lambda *_: (0,) * len(shape))


def _choose_unroll(S, B):
    """Timesteps per fori_loop iteration; prefer full-sublane (U*B % 8 == 0) stores."""
    for u in (4, 8, 2, 1):
        if S % u == 0 and (u * B) % 8 == 0:
            return u
    for u in (4, 2, 1):
        if S % u == 0:
            return u
    return 1


def _choose_tile_m(M, cap=512):
    """Row tile for the M-tiled FC head: >=2 grid steps (v7x 2-TC sharding),
    a multiple of 8 that divides M (no ragged last tile)."""
    if M >= 16:
        start = min(cap, (M // 2) // 8 * 8)
        for tm in range(start, 7, -8):
            if M % tm == 0:
                return tm
    return min(cap, M)


# ----------------------------------------------------------------------------
# Fused multi-layer GRU scan (grid-less, one kernel for the whole stack).
# PyTorch GRU math (gate order r, z, n), with b_hr/b_hz pre-folded into b_ih:
#   gx = x @ W_ih3^T + (b_ih3 + [b_hr, b_hz, 0])     (layer 0: one big matmul
#                                                      for all timesteps)
#   gh = h_prev @ W_hh3^T                             (no bias)
#   [r, z] = sigmoid(gx_rz + gh_rz)                   (single sigmoid, (B, 2H))
#   n = tanh(gx_n + r * (gh_n + b_hn))
#   h' = n + z * (h_prev - n)                         (== (1-z)*n + z*h_prev)
# ----------------------------------------------------------------------------
def _make_gru_stack_kernel(S, B, E, H, L, U):
    CH = U * B          # rows written per loop iteration
    NC = S // U         # loop trip count

    def kernel(*refs):
        emb_ref = refs[0]                      # (S*B, E) time-major flat
        w_refs = refs[1:1 + 4 * L]
        out_ref = refs[1 + 4 * L]              # (S*B, H)
        gx0_ref = refs[2 + 4 * L]              # VMEM scratch (S*B, 3H)

        # Hoist loop-invariant weight/bias loads out of the scan.
        wih = [w_refs[4 * l + 0][...] for l in range(L)]   # (E or H, 3H)
        bih = [w_refs[4 * l + 1][...] for l in range(L)]   # (1, 3H), b_h{r,z} folded
        whh = [w_refs[4 * l + 2][...] for l in range(L)]   # (H, 3H)
        bhn = [w_refs[4 * l + 3][...] for l in range(L)]   # (1, H)

        # Layer-0 fused 3-gate input projection for ALL timesteps: one MXU matmul.
        gx0_ref[...] = (
            jnp.dot(emb_ref[...], wih[0], preferred_element_type=jnp.float32)
            + bih[0])

        h_init = tuple(jnp.zeros((B, H), jnp.float32) for _ in range(L))

        def chunk_step(c, hs):
            hs = list(hs)
            row0 = pl.multiple_of(c * CH, CH)
            gxc = gx0_ref[pl.ds(row0, CH), :]              # aligned (U*B, 3H) load
            outs = []
            for u in range(U):                             # unrolled timesteps
                # Hidden projections of every layer depend only on the previous
                # step's hidden states -> independent of each other; the
                # scheduler can overlap layer l+1's MXU push with layer l's
                # sigmoid/tanh (EUP) work.
                gh = [jnp.dot(hs[l], whh[l], preferred_element_type=jnp.float32)
                      for l in range(L)]
                below = None
                for l in range(L):
                    if l == 0:
                        gx = gxc[u * B:(u + 1) * B, :]     # (B, 3H) static slice
                    else:
                        gx = (jnp.dot(below, wih[l],
                                      preferred_element_type=jnp.float32)
                              + bih[l])
                    rz = jax.nn.sigmoid(gx[:, :2 * H] + gh[l][:, :2 * H])
                    r = rz[:, :H]
                    z = rz[:, H:]
                    n = jnp.tanh(gx[:, 2 * H:] + r * (gh[l][:, 2 * H:] + bhn[l]))
                    h_new = n + z * (hs[l] - n)
                    hs[l] = h_new
                    below = h_new
                outs.append(hs[-1])
            # One full-sublane (U*B, H) store per U timesteps.
            out_ref[pl.ds(row0, CH), :] = jnp.concatenate(outs, axis=0)
            return tuple(hs)

        lax.fori_loop(0, NC, chunk_step, h_init)

    return kernel


def gru_stack(emb_flat, S, B, gru_params):
    """All GRU layers in one grid-less kernel: (S*B, E) -> (S*B, H), time-major."""
    E = emb_flat.shape[1]
    H = gru_params[0]["whh_t"].shape[0]
    L = len(gru_params)
    U = _choose_unroll(S, B)
    args = [emb_flat]
    for lp in gru_params:
        args += [lp["wih_t"], lp["bih"], lp["whh_t"], lp["bhn"]]
    return pl.pallas_call(
        _make_gru_stack_kernel(S, B, E, H, L, U),
        out_shape=jax.ShapeDtypeStruct((S * B, H), jnp.float32),
        in_specs=[VMEM_SPEC] * len(args),
        out_specs=VMEM_SPEC,
        scratch_shapes=[pltpu.VMEM((S * B, 3 * H), jnp.float32)],
        compiler_params=pltpu.CompilerParams(vmem_limit_bytes=VMEM_LIMIT),
    )(*args)


# ----------------------------------------------------------------------------
# Fused FC head kernel (M-tiled grid over rows):
#   4 x [Linear -> BN(eval, per-row affine) -> ReLU]  ->  Linear(200, emb_dim)
# Rows are time-major (row = s*B + b); BN channels are the sequence positions
# s, so the folded affine is a[s], c[s] -> packed per-row into bn_ref (M, 8).
# ----------------------------------------------------------------------------
def _fc_head_kernel(x_ref, bn_ref,
                    w1_ref, b1_ref, w2_ref, b2_ref, w3_ref, b3_ref,
                    w4_ref, b4_ref, w5_ref, b5_ref, o_ref):
    h = x_ref[...]
    for i, (w_ref, b_ref) in enumerate(((w1_ref, b1_ref), (w2_ref, b2_ref),
                                        (w3_ref, b3_ref), (w4_ref, b4_ref))):
        z = jnp.dot(h, w_ref[...], preferred_element_type=jnp.float32) + b_ref[...]
        a = bn_ref[:, 2 * i:2 * i + 1]
        c = bn_ref[:, 2 * i + 1:2 * i + 2]
        h = jnp.maximum(z * a + c, 0.0)
    o_ref[...] = jnp.dot(h, w5_ref[...], preferred_element_type=jnp.float32) + b5_ref[...]


def fc_head(x_flat, bn_ac, fc_args):
    M, H = x_flat.shape
    emb_dim = fc_args[-2].shape[1]
    tm = _choose_tile_m(M)                      # e.g. 200 for M=400 -> grid of 2
    in_specs = [pl.BlockSpec((tm, H), lambda i: (i, 0)),
                pl.BlockSpec((tm, 8), lambda i: (i, 0))]
    in_specs += [_full_spec(a.shape) for a in fc_args]
    return pl.pallas_call(
        _fc_head_kernel,
        out_shape=jax.ShapeDtypeStruct((M, emb_dim), jnp.float32),
        grid=(pl.cdiv(M, tm),),
        in_specs=in_specs,
        out_specs=pl.BlockSpec((tm, emb_dim), lambda i: (i, 0)),
        compiler_params=pltpu.CompilerParams(
            dimension_semantics=("parallel",),
            vmem_limit_bytes=VMEM_LIMIT),
    )(x_flat, bn_ac, *fc_args)


# ----------------------------------------------------------------------------
# Parameter preparation (hoisted off the forward critical path): transposed GRU
# gate weights, b_hr/b_hz folded into b_ih, transposed FC weights, BN eval fold.
# ----------------------------------------------------------------------------
def prepare_params(params, B, S):
    gru = []
    for lp in params["gru"]:
        H = lp["w_hh"].shape[1]
        bih = lp["b_ih"].at[:2 * H].add(lp["b_hh"][:2 * H])   # fold b_hr, b_hz
        gru.append({
            "wih_t": jnp.transpose(lp["w_ih"]),               # (F, 3H), gates r,z,n
            "bih":   bih.reshape(1, -1),                      # (1, 3H)
            "whh_t": jnp.transpose(lp["w_hh"]),               # (H, 3H)
            "bhn":   lp["b_hh"][2 * H:].reshape(1, H),        # (1, H)
        })

    fc_args, bn_cols = [], []
    for i in range(4):
        W, b = params["fc_w"][i]
        gamma, beta, rm, rv = params["fc_bn"][i]
        a = gamma * lax.rsqrt(rv + 1e-5)                      # eval-mode BN fold
        c = beta - rm * a
        fc_args += [jnp.transpose(W), b.reshape(1, -1)]
        # time-major flat rows: row = s*B + b  ->  per-row affine is a[s], c[s]
        bn_cols += [jnp.repeat(a, B), jnp.repeat(c, B)]
    W5, b5 = params["fc_w"][4]
    fc_args += [jnp.transpose(W5), b5.reshape(1, -1)]

    return {"embed": params["embed"], "gru": gru,
            "fc_args": fc_args, "bn_ac": jnp.stack(bn_cols, axis=1)}  # (S*B, 8)


# ----------------------------------------------------------------------------
# Full forward pass of `Network` (only the branch used by forward()):
#   embedding -> fused GRU stack -> fc head.   conv1/fc1/conv2/fc2 are unused.
# ----------------------------------------------------------------------------
def network_forward(prep, x_idx):
    B, S = x_idx.shape
    # Embedding gather built directly in time-major flat order (S*B, 100).
    # TODO(synk): could be folded into the scan kernel via scalar-prefetched ids
    # with a VMEM-resident table; kept in XLA (vocab-size independent) and its
    # output feeds the fused scan kernel directly.
    emb = jnp.take(prep["embed"], jnp.transpose(x_idx), axis=0)
    h = gru_stack(emb.reshape(S * B, emb.shape[-1]), S, B, prep["gru"])
    out_flat = fc_head(h, prep["bn_ac"], prep["fc_args"])
    emb_dim = out_flat.shape[-1]
    return jnp.transpose(out_flat.reshape(S, B, emb_dim), (1, 0, 2))   # (B, S, emb)


# ----------------------------------------------------------------------------
# Pure-JAX reference (mirrors PyTorch eval semantics) for a sanity check.
# ----------------------------------------------------------------------------
def reference_forward(params, x_idx):
    B, S = x_idx.shape
    h = jnp.take(params["embed"], x_idx, axis=0)              # (B, S, 100)
    for lp in params["gru"]:
        H = lp["w_hh"].shape[1]
        wih, whh, bih, bhh = lp["w_ih"], lp["w_hh"], lp["b_ih"], lp["b_hh"]

        def cell(h_prev, x_t):
            gx = x_t @ wih.T + bih
            gh = h_prev @ whh.T + bhh
            r = jax.nn.sigmoid(gx[:, :H] + gh[:, :H])
            z = jax.nn.sigmoid(gx[:, H:2 * H] + gh[:, H:2 * H])
            n = jnp.tanh(gx[:, 2 * H:] + r * gh[:, 2 * H:])
            h_new = (1.0 - z) * n + z * h_prev
            return h_new, h_new

        _, ys = lax.scan(cell, jnp.zeros((B, H), jnp.float32),
                         jnp.transpose(h, (1, 0, 2)))
        h = jnp.transpose(ys, (1, 0, 2))                      # (B, S, H)
    out = h
    for i in range(4):
        W, b = params["fc_w"][i]
        gamma, beta, rm, rv = params["fc_bn"][i]
        out = out @ W.T + b                                   # (B, S, 200)
        a = gamma * lax.rsqrt(rv + 1e-5)                      # BN1d(200): C = seq dim
        c = beta - rm * a
        out = jnp.maximum(out * a[None, :, None] + c[None, :, None], 0.0)
    W5, b5 = params["fc_w"][4]
    return out @ W5.T + b5


# ----------------------------------------------------------------------------
# Deterministic parameter initialization (shapes from Network.__init__).
# ----------------------------------------------------------------------------
def init_params(key, vocab, emb_dim, hidden_size, layers):
    keys = iter(jax.random.split(key, 64))
    params = {"embed": jax.random.normal(next(keys), (vocab, 100), jnp.float32)}

    gru = []
    in_size = 100
    for _ in range(layers):
        gru.append({
            "w_ih": 0.001 * jax.random.normal(next(keys), (3 * hidden_size, in_size), jnp.float32),
            "w_hh": 0.001 * jax.random.normal(next(keys), (3 * hidden_size, hidden_size), jnp.float32),
            "b_ih": 0.001 * jax.random.normal(next(keys), (3 * hidden_size,), jnp.float32),
            "b_hh": 0.001 * jax.random.normal(next(keys), (3 * hidden_size,), jnp.float32),
        })
        in_size = hidden_size
    params["gru"] = gru

    dims = [(hidden_size, 200), (200, 200), (200, 200), (200, 200), (200, emb_dim)]
    fc_w, fc_bn = [], []
    for i, (din, dout) in enumerate(dims):
        W = 0.05 * jax.random.normal(next(keys), (dout, din), jnp.float32)
        b = 0.05 * jax.random.normal(next(keys), (dout,), jnp.float32)
        fc_w.append((W, b))
        if i < 4:
            gamma = 1.0 + 0.1 * jax.random.normal(next(keys), (200,), jnp.float32)
            beta = 0.1 * jax.random.normal(next(keys), (200,), jnp.float32)
            rm = 0.1 * jax.random.normal(next(keys), (200,), jnp.float32)
            rv = jax.random.uniform(next(keys), (200,), jnp.float32, 0.5, 1.5)
            fc_bn.append((gamma, beta, rm, rv))
    params["fc_w"] = fc_w
    params["fc_bn"] = fc_bn
    return params


if __name__ == "__main__":
    B, S = 2, 200            # S must be 200 (BatchNorm1d(200) over dim 1 of (B,S,200))
    VOCAB = 50
    EMB_DIM = 16
    HIDDEN = 32
    LAYERS = 2

    key = jax.random.PRNGKey(0)
    k_param, k_x = jax.random.split(key)
    params = init_params(k_param, VOCAB, EMB_DIM, HIDDEN, LAYERS)
    prep = prepare_params(params, B, S)
    x = jax.random.randint(k_x, (B, S), 0, VOCAB, dtype=jnp.int32)

    fwd = jax.jit(network_forward)
    out = jax.block_until_ready(fwd(prep, x))
    assert out.shape == (B, S, EMB_DIM), out.shape
    assert bool(jnp.all(jnp.isfinite(out)))

    # Loose-tolerance sanity check against a pure-JAX reference (tolerance
    # covers MXU/XLA f32 matmul precision-path differences, not structure).
    ref = jax.block_until_ready(jax.jit(reference_forward)(params, x))
    assert bool(jnp.allclose(out, ref, rtol=2e-2, atol=2e-2))

    print("KERNEL_OK")
</pallas_src>

<mosaic_0001>
module attributes {stable_mosaic.version = 11 : i64} {
  func.func @kernel(%arg0: memref<400x100xf32, #tpu.memory_space<vmem>>, %arg1: memref<100x96xf32, #tpu.memory_space<vmem>>, %arg2: memref<1x96xf32, #tpu.memory_space<vmem>>, %arg3: memref<32x96xf32, #tpu.memory_space<vmem>>, %arg4: memref<1x32xf32, #tpu.memory_space<vmem>>, %arg5: memref<32x96xf32, #tpu.memory_space<vmem>>, %arg6: memref<1x96xf32, #tpu.memory_space<vmem>>, %arg7: memref<32x96xf32, #tpu.memory_space<vmem>>, %arg8: memref<1x32xf32, #tpu.memory_space<vmem>>, %arg9: memref<400x32xf32, #tpu.memory_space<vmem>>, %arg10: memref<400x96xf32, #tpu.memory_space<vmem>>) attributes {dimension_semantics = [], scalar_prefetch = 0 : i64, scratch_operands = 1 : i64, tpu.core_type = #tpu.core_type<tc>} {
    %c0 = arith.constant 0 : index
    %c0_0 = arith.constant 0 : index
    %0 = vector.load %arg1[%c0, %c0_0] : memref<100x96xf32, #tpu.memory_space<vmem>>, vector<100x96xf32>
    %c0_1 = arith.constant 0 : index
    %c0_2 = arith.constant 0 : index
    %1 = vector.load %arg5[%c0_1, %c0_2] : memref<32x96xf32, #tpu.memory_space<vmem>>, vector<32x96xf32>
    %c0_3 = arith.constant 0 : index
    %c0_4 = arith.constant 0 : index
    %2 = vector.load %arg2[%c0_3, %c0_4] : memref<1x96xf32, #tpu.memory_space<vmem>>, vector<1x96xf32>
    %c0_5 = arith.constant 0 : index
    %c0_6 = arith.constant 0 : index
    %3 = vector.load %arg6[%c0_5, %c0_6] : memref<1x96xf32, #tpu.memory_space<vmem>>, vector<1x96xf32>
    %c0_7 = arith.constant 0 : index
    %c0_8 = arith.constant 0 : index
    %4 = vector.load %arg3[%c0_7, %c0_8] : memref<32x96xf32, #tpu.memory_space<vmem>>, vector<32x96xf32>
    %c0_9 = arith.constant 0 : index
    %c0_10 = arith.constant 0 : index
    %5 = vector.load %arg7[%c0_9, %c0_10] : memref<32x96xf32, #tpu.memory_space<vmem>>, vector<32x96xf32>
    %c0_11 = arith.constant 0 : index
    %c0_12 = arith.constant 0 : index
    %6 = vector.load %arg4[%c0_11, %c0_12] : memref<1x32xf32, #tpu.memory_space<vmem>>, vector<1x32xf32>
    %c0_13 = arith.constant 0 : index
    %c0_14 = arith.constant 0 : index
    %7 = vector.load %arg8[%c0_13, %c0_14] : memref<1x32xf32, #tpu.memory_space<vmem>>, vector<1x32xf32>
    %c0_15 = arith.constant 0 : index
    %c0_16 = arith.constant 0 : index
    %8 = vector.load %arg0[%c0_15, %c0_16] : memref<400x100xf32, #tpu.memory_space<vmem>>, vector<400x100xf32>
    %cst = arith.constant dense<0.000000e+00> : vector<400x96xf32>
    %9 = tpu.matmul %8, %0, %cst {dimension_numbers = #tpu.dot_dimension_numbers<[1], [0], [0], [1], [0, 0, 1, 1], [], []>} : vector<400x100xf32>, vector<100x96xf32>, vector<400x96xf32> -> vector<400x96xf32>
    %10 = vector.broadcast %2 : vector<1x96xf32> to vector<400x96xf32>
    %11 = arith.addf %9, %10 : vector<400x96xf32>
    %c0_17 = arith.constant 0 : index
    %c0_18 = arith.constant 0 : index
    %12 = vector.load %arg10[%c0_17, %c0_18] : memref<400x96xf32, #tpu.memory_space<vmem>>, vector<400x96xf32>
    tpu.vector_store %arg10[%c0_17, %c0_18], %11 {strides = array<i32>} : memref<400x96xf32, #tpu.memory_space<vmem>>, vector<400x96xf32>,
    %cst_19 = arith.constant 0.000000e+00 : f32
    %13 = vector.broadcast %cst_19 : f32 to vector<2x32xf32>
    %cst_20 = arith.constant 0.000000e+00 : f32
    %14 = vector.broadcast %cst_20 : f32 to vector<2x32xf32>
    %c0_i32 = arith.constant 0 : i32
    %c50_i32 = arith.constant 50 : i32
    %15 = arith.addi %c0_i32, %c50_i32 : i32
    %c1_i32 = arith.constant 1 : i32
    %16:2 = scf.for %arg11 = %c0_i32 to %15 step %c1_i32 iter_args(%arg12 = %13, %arg13 = %14) -> (vector<2x32xf32>, vector<2x32xf32>)  : i32 {
      %c8_i32 = arith.constant 8 : i32
      %17 = arith.muli %arg11, %c8_i32 : i32
      %18 = tpu.assume_multiple %17, 8 : i32
      %19 = arith.index_cast %18 : i32 to index
      %c0_22 = arith.constant 0 : index
      %20 = vector.load %arg10[%19, %c0_22] : memref<400x96xf32, #tpu.memory_space<vmem>>, vector<8x96xf32>
      %cst_23 = arith.constant dense<0.000000e+00> : vector<2x96xf32>
      %21 = tpu.matmul %arg12, %4, %cst_23 {dimension_numbers = #tpu.dot_dimension_numbers<[1], [0], [0], [1], [0, 0, 1, 1], [], []>} : vector<2x32xf32>, vector<32x96xf32>, vector<2x96xf32> -> vector<2x96xf32>
      %cst_24 = arith.constant dense<0.000000e+00> : vector<2x96xf32>
      %22 = tpu.matmul %arg13, %5, %cst_24 {dimension_numbers = #tpu.dot_dimension_numbers<[1], [0], [0], [1], [0, 0, 1, 1], [], []>} : vector<2x32xf32>, vector<32x96xf32>, vector<2x96xf32> -> vector<2x96xf32>
      %23 = vector.extract_strided_slice %20 {offsets = [0, 0], sizes = [2, 96], strides = [1, 1]} : vector<8x96xf32> to vector<2x96xf32>
      %24 = vector.extract_strided_slice %23 {offsets = [0, 0], sizes = [2, 64], strides = [1, 1]} : vector<2x96xf32> to vector<2x64xf32>
      %25 = vector.extract_strided_slice %21 {offsets = [0, 0], sizes = [2, 64], strides = [1, 1]} : vector<2x96xf32> to vector<2x64xf32>
      %26 = arith.addf %24, %25 : vector<2x64xf32>
      %27 = arith.negf %26 : vector<2x64xf32>
      %28 = math.exp %27 : vector<2x64xf32>
      %cst_25 = arith.constant 1.000000e+00 : f32
      %29 = vector.broadcast %cst_25 : f32 to vector<2x64xf32>
      %30 = arith.addf %29, %28 : vector<2x64xf32>
      %31 = arith.divf %29, %30 : vector<2x64xf32>
      %32 = vector.extract_strided_slice %31 {offsets = [0, 0], sizes = [2, 32], strides = [1, 1]} : vector<2x64xf32> to vector<2x32xf32>
      %33 = vector.extract_strided_slice %31 {offsets = [0, 32], sizes = [2, 32], strides = [1, 1]} : vector<2x64xf32> to vector<2x32xf32>
      %34 = vector.extract_strided_slice %23 {offsets = [0, 64], sizes = [2, 32], strides = [1, 1]} : vector<2x96xf32> to vector<2x32xf32>
      %35 = vector.extract_strided_slice %21 {offsets = [0, 64], sizes = [2, 32], strides = [1, 1]} : vector<2x96xf32> to vector<2x32xf32>
      %36 = vector.broadcast %6 : vector<1x32xf32> to vector<2x32xf32>
      %37 = arith.addf %35, %36 : vector<2x32xf32>
      %38 = arith.mulf %32, %37 : vector<2x32xf32>
      %39 = arith.addf %34, %38 : vector<2x32xf32>
      %40 = math.tanh %39 : vector<2x32xf32>
      %41 = arith.subf %arg12, %40 : vector<2x32xf32>
      %42 = arith.mulf %33, %41 : vector<2x32xf32>
      %43 = arith.addf %40, %42 : vector<2x32xf32>
      %cst_26 = arith.constant dense<0.000000e+00> : vector<2x96xf32>
      %44 = tpu.matmul %43, %1, %cst_26 {dimension_numbers = #tpu.dot_dimension_numbers<[1], [0], [0], [1], [0, 0, 1, 1], [], []>} : vector<2x32xf32>, vector<32x96xf32>, vector<2x96xf32> -> vector<2x96xf32>
      %45 = vector.broadcast %3 : vector<1x96xf32> to vector<2x96xf32>
      %46 = arith.addf %44, %45 : vector<2x96xf32>
      %47 = vector.extract_strided_slice %46 {offsets = [0, 0], sizes = [2, 64], strides = [1, 1]} : vector<2x96xf32> to vector<2x64xf32>
      %48 = vector.extract_strided_slice %22 {offsets = [0, 0], sizes = [2, 64], strides = [1, 1]} : vector<2x96xf32> to vector<2x64xf32>
      %49 = arith.addf %47, %48 : vector<2x64xf32>
      %50 = arith.negf %49 : vector<2x64xf32>
      %51 = math.exp %50 : vector<2x64xf32>
      %cst_27 = arith.constant 1.000000e+00 : f32
      %52 = vector.broadcast %cst_27 : f32 to vector<2x64xf32>
      %53 = arith.addf %52, %51 : vector<2x64xf32>
      %54 = arith.divf %52, %53 : vector<2x64xf32>
      %55 = vector.extract_strided_slice %54 {offsets = [0, 0], sizes = [2, 32], strides = [1, 1]} : vector<2x64xf32> to vector<2x32xf32>
      %56 = vector.extract_strided_slice %54 {offsets = [0, 32], sizes = [2, 32], strides = [1, 1]} : vector<2x64xf32> to vector<2x32xf32>
      %57 = vector.extract_strided_slice %46 {offsets = [0, 64], sizes = [2, 32], strides = [1, 1]} : vector<2x96xf32> to vector<2x32xf32>
      %58 = vector.extract_strided_slice %22 {offsets = [0, 64], sizes = [2, 32], strides = [1, 1]} : vector<2x96xf32> to vector<2x32xf32>
      %59 = vector.broadcast %7 : vector<1x32xf32> to vector<2x32xf32>
      %60 = arith.addf %58, %59 : vector<2x32xf32>
      %61 = arith.mulf %55, %60 : vector<2x32xf32>
      %62 = arith.addf %57, %61 : vector<2x32xf32>
      %63 = math.tanh %62 : vector<2x32xf32>
      %64 = arith.subf %arg13, %63 : vector<2x32xf32>
      %65 = arith.mulf %56, %64 : vector<2x32xf32>
      %66 = arith.addf %63, %65 : vector<2x32xf32>
      %cst_28 = arith.constant dense<0.000000e+00> : vector<2x96xf32>
      %67 = tpu.matmul %43, %4, %cst_28 {dimension_numbers = #tpu.dot_dimension_numbers<[1], [0], [0], [1], [0, 0, 1, 1], [], []>} : vector<2x32xf32>, vector<32x96xf32>, vector<2x96xf32> -> vector<2x96xf32>
      %cst_29 = arith.constant dense<0.000000e+00> : vector<2x96xf32>
      %68 = tpu.matmul %66, %5, %cst_29 {dimension_numbers = #tpu.dot_dimension_numbers<[1], [0], [0], [1], [0, 0, 1, 1], [], []>} : vector<2x32xf32>, vector<32x96xf32>, vector<2x96xf32> -> vector<2x96xf32>
      %69 = vector.extract_strided_slice %20 {offsets = [2, 0], sizes = [2, 96], strides = [1, 1]} : vector<8x96xf32> to vector<2x96xf32>
      %70 = vector.extract_strided_slice %69 {offsets = [0, 0], sizes = [2, 64], strides = [1, 1]} : vector<2x96xf32> to vector<2x64xf32>
      %71 = vector.extract_strided_slice %67 {offsets = [0, 0], sizes = [2, 64], strides = [1, 1]} : vector<2x96xf32> to vector<2x64xf32>
      %72 = arith.addf %70, %71 : vector<2x64xf32>
      %73 = arith.negf %72 : vector<2x64xf32>
      %74 = math.exp %73 : vector<2x64xf32>
      %cst_30 = arith.constant 1.000000e+00 : f32
      %75 = vector.broadcast %cst_30 : f32 to vector<2x64xf32>
      %76 = arith.addf %75, %74 : vector<2x64xf32>
      %77 = arith.divf %75, %76 : vector<2x64xf32>
      %78 = vector.extract_strided_slice %77 {offsets = [0, 0], sizes = [2, 32], strides = [1, 1]} : vector<2x64xf32> to vector<2x32xf32>
      %79 = vector.extract_strided_slice %77 {offsets = [0, 32], sizes = [2, 32], strides = [1, 1]} : vector<2x64xf32> to vector<2x32xf32>
      %80 = vector.extract_strided_slice %69 {offsets = [0, 64], sizes = [2, 32], strides = [1, 1]} : vector<2x96xf32> to vector<2x32xf32>
      %81 = vector.extract_strided_slice %67 {offsets = [0, 64], sizes = [2, 32], strides = [1, 1]} : vector<2x96xf32> to vector<2x32xf32>
      %82 = vector.broadcast %6 : vector<1x32xf32> to vector<2x32xf32>
      %83 = arith.addf %81, %82 : vector<2x32xf32>
      %84 = arith.mulf %78, %83 : vector<2x32xf32>
      %85 = arith.addf %80, %84 : vector<2x32xf32>
      %86 = math.tanh %85 : vector<2x32xf32>
      %87 = arith.subf %43, %86 : vector<2x32xf32>
      %88 = arith.mulf %79, %87 : vector<2x32xf32>
      %89 = arith.addf %86, %88 : vector<2x32xf32>
      %cst_31 = arith.constant dense<0.000000e+00> : vector<2x96xf32>
      %90 = tpu.matmul %89, %1, %cst_31 {dimension_numbers = #tpu.dot_dimension_numbers<[1], [0], [0], [1], [0, 0, 1, 1], [], []>} : vector<2x32xf32>, vector<32x96xf32>, vector<2x96xf32> -> vector<2x96xf32>
      %91 = vector.broadcast %3 : vector<1x96xf32> to vector<2x96xf32>
      %92 = arith.addf %90, %91 : vector<2x96xf32>
      %93 = vector.extract_strided_slice %92 {offsets = [0, 0], sizes = [2, 64], strides = [1, 1]} : vector<2x96xf32> to vector<2x64xf32>
      %94 = vector.extract_strided_slice %68 {offsets = [0, 0], sizes = [2, 64], strides = [1, 1]} : vector<2x96xf32> to vector<2x64xf32>
      %95 = arith.addf %93, %94 : vector<2x64xf32>
      %96 = arith.negf %95 : vector<2x64xf32>
      %97 = math.exp %96 : vector<2x64xf32>
      %cst_32 = arith.constant 1.000000e+00 : f32
      %98 = vector.broadcast %cst_32 : f32 to vector<2x64xf32>
      %99 = arith.addf %98, %97 : vector<2x64xf32>
      %100 = arith.divf %98, %99 : vector<2x64xf32>
      %101 = vector.extract_strided_slice %100 {offsets = [0, 0], sizes = [2, 32], strides = [1, 1]} : vector<2x64xf32> to vector<2x32xf32>
      %102 = vector.extract_strided_slice %100 {offsets = [0, 32], sizes = [2, 32], strides = [1, 1]} : vector<2x64xf32> to vector<2x32xf32>
      %103 = vector.extract_strided_slice %92 {offsets = [0, 64], sizes = [2, 32], strides = [1, 1]} : vector<2x96xf32> to vector<2x32xf32>
      %104 = vector.extract_strided_slice %68 {offsets = [0, 64], sizes = [2, 32], strides = [1, 1]} : vector<2x96xf32> to vector<2x32xf32>
      %105 = vector.broadcast %7 : vector<1x32xf32> to vector<2x32xf32>
      %106 = arith.addf %104, %105 : vector<2x32xf32>
      %107 = arith.mulf %101, %106 : vector<2x32xf32>
      %108 = arith.addf %103, %107 : vector<2x32xf32>
      %109 = math.tanh %108 : vector<2x32xf32>
      %110 = arith.subf %66, %109 : vector<2x32xf32>
      %111 = arith.mulf %102, %110 : vector<2x32xf32>
      %112 = arith.addf %109, %111 : vector<2x32xf32>
      %cst_33 = arith.constant dense<0.000000e+00> : vector<2x96xf32>
      %113 = tpu.matmul %89, %4, %cst_33 {dimension_numbers = #tpu.dot_dimension_numbers<[1], [0], [0], [1], [0, 0, 1, 1], [], []>} : vector<2x32xf32>, vector<32x96xf32>, vector<2x96xf32> -> vector<2x96xf32>
      %cst_34 = arith.constant dense<0.000000e+00> : vector<2x96xf32>
      %114 = tpu.matmul %112, %5, %cst_34 {dimension_numbers = #tpu.dot_dimension_numbers<[1], [0], [0], [1], [0, 0, 1, 1], [], []>} : vector<2x32xf32>, vector<32x96xf32>, vector<2x96xf32> -> vector<2x96xf32>
      %115 = vector.extract_strided_slice %20 {offsets = [4, 0], sizes = [2, 96], strides = [1, 1]} : vector<8x96xf32> to vector<2x96xf32>
      %116 = vector.extract_strided_slice %115 {offsets = [0, 0], sizes = [2, 64], strides = [1, 1]} : vector<2x96xf32> to vector<2x64xf32>
      %117 = vector.extract_strided_slice %113 {offsets = [0, 0], sizes = [2, 64], strides = [1, 1]} : vector<2x96xf32> to vector<2x64xf32>
      %118 = arith.addf %116, %117 : vector<2x64xf32>
      %119 = arith.negf %118 : vector<2x64xf32>
      %120 = math.exp %119 : vector<2x64xf32>
      %cst_35 = arith.constant 1.000000e+00 : f32
      %121 = vector.broadcast %cst_35 : f32 to vector<2x64xf32>
      %122 = arith.addf %121, %120 : vector<2x64xf32>
      %123 = arith.divf %121, %122 : vector<2x64xf32>
      %124 = vector.extract_strided_slice %123 {offsets = [0, 0], sizes = [2, 32], strides = [1, 1]} : vector<2x64xf32> to vector<2x32xf32>
      %125 = vector.extract_strided_slice %123 {offsets = [0, 32], sizes = [2, 32], strides = [1, 1]} : vector<2x64xf32> to vector<2x32xf32>
      %126 = vector.extract_strided_slice %115 {offsets = [0, 64], sizes = [2, 32], strides = [1, 1]} : vector<2x96xf32> to vector<2x32xf32>
      %127 = vector.extract_strided_slice %113 {offsets = [0, 64], sizes = [2, 32], strides = [1, 1]} : vector<2x96xf32> to vector<2x32xf32>
      %128 = vector.broadcast %6 : vector<1x32xf32> to vector<2x32xf32>
      %129 = arith.addf %127, %128 : vector<2x32xf32>
      %130 = arith.mulf %124, %129 : vector<2x32xf32>
      %131 = arith.addf %126, %130 : vector<2x32xf32>
      %132 = math.tanh %131 : vector<2x32xf32>
      %133 = arith.subf %89, %132 : vector<2x32xf32>
      %134 = arith.mulf %125, %133 : vector<2x32xf32>
      %135 = arith.addf %132, %134 : vector<2x32xf32>
      %cst_36 = arith.constant dense<0.000000e+00> : vector<2x96xf32>
      %136 = tpu.matmul %135, %1, %cst_36 {dimension_numbers = #tpu.dot_dimension_numbers<[1], [0], [0], [1], [0, 0, 1, 1], [], []>} : vector<2x32xf32>, vector<32x96xf32>, vector<2x96xf32> -> vector<2x96xf32>
      %137 = vector.broadcast %3 : vector<1x96xf32> to vector<2x96xf32>
      %138 = arith.addf %136, %137 : vector<2x96xf32>
      %139 = vector.extract_strided_slice %138 {offsets = [0, 0], sizes = [2, 64], strides = [1, 1]} : vector<2x96xf32> to vector<2x64xf32>
      %140 = vector.extract_strided_slice %114 {offsets = [0, 0], sizes = [2, 64], strides = [1, 1]} : vector<2x96xf32> to vector<2x64xf32>
      %141 = arith.addf %139, %140 : vector<2x64xf32>
      %142 = arith.negf %141 : vector<2x64xf32>
      %143 = math.exp %142 : vector<2x64xf32>
      %cst_37 = arith.constant 1.000000e+00 : f32
      %144 = vector.broadcast %cst_37 : f32 to vector<2x64xf32>
      %145 = arith.addf %144, %143 : vector<2x64xf32>
      %146 = arith.divf %144, %145 : vector<2x64xf32>
      %147 = vector.extract_strided_slice %146 {offsets = [0, 0], sizes = [2, 32], strides = [1, 1]} : vector<2x64xf32> to vector<2x32xf32>
      %148 = vector.extract_strided_slice %146 {offsets = [0, 32], sizes = [2, 32], strides = [1, 1]} : vector<2x64xf32> to vector<2x32xf32>
      %149 = vector.extract_strided_slice %138 {offsets = [0, 64], sizes = [2, 32], strides = [1, 1]} : vector<2x96xf32> to vector<2x32xf32>
      %150 = vector.extract_strided_slice %114 {offsets = [0, 64], sizes = [2, 32], strides = [1, 1]} : vector<2x96xf32> to vector<2x32xf32>
      %151 = vector.broadcast %7 : vector<1x32xf32> to vector<2x32xf32>
      %152 = arith.addf %150, %151 : vector<2x32xf32>
      %153 = arith.mulf %147, %152 : vector<2x32xf32>
      %154 = arith.addf %149, %153 : vector<2x32xf32>
      %155 = math.tanh %154 : vector<2x32xf32>
      %156 = arith.subf %112, %155 : vector<2x32xf32>
      %157 = arith.mulf %148, %156 : vector<2x32xf32>
      %158 = arith.addf %155, %157 : vector<2x32xf32>
      %cst_38 = arith.constant dense<0.000000e+00> : vector<2x96xf32>
      %159 = tpu.matmul %135, %4, %cst_38 {dimension_numbers = #tpu.dot_dimension_numbers<[1], [0], [0], [1], [0, 0, 1, 1], [], []>} : vector<2x32xf32>, vector<32x96xf32>, vector<2x96xf32> -> vector<2x96xf32>
      %cst_39 = arith.constant dense<0.000000e+00> : vector<2x96xf32>
      %160 = tpu.matmul %158, %5, %cst_39 {dimension_numbers = #tpu.dot_dimension_numbers<[1], [0], [0], [1], [0, 0, 1, 1], [], []>} : vector<2x32xf32>, vector<32x96xf32>, vector<2x96xf32> -> vector<2x96xf32>
      %161 = vector.extract_strided_slice %20 {offsets = [6, 0], sizes = [2, 96], strides = [1, 1]} : vector<8x96xf32> to vector<2x96xf32>
      %162 = vector.extract_strided_slice %161 {offsets = [0, 0], sizes = [2, 64], strides = [1, 1]} : vector<2x96xf32> to vector<2x64xf32>
      %163 = vector.extract_strided_slice %159 {offsets = [0, 0], sizes = [2, 64], strides = [1, 1]} : vector<2x96xf32> to vector<2x64xf32>
      %164 = arith.addf %162, %163 : vector<2x64xf32>
      %165 = arith.negf %164 : vector<2x64xf32>
      %166 = math.exp %165 : vector<2x64xf32>
      %cst_40 = arith.constant 1.000000e+00 : f32
      %167 = vector.broadcast %cst_40 : f32 to vector<2x64xf32>
      %168 = arith.addf %167, %166 : vector<2x64xf32>
      %169 = arith.divf %167, %168 : vector<2x64xf32>
      %170 = vector.extract_strided_slice %169 {offsets = [0, 0], sizes = [2, 32], strides = [1, 1]} : vector<2x64xf32> to vector<2x32xf32>
      %171 = vector.extract_strided_slice %169 {offsets = [0, 32], sizes = [2, 32], strides = [1, 1]} : vector<2x64xf32> to vector<2x32xf32>
      %172 = vector.extract_strided_slice %161 {offsets = [0, 64], sizes = [2, 32], strides = [1, 1]} : vector<2x96xf32> to vector<2x32xf32>
      %173 = vector.extract_strided_slice %159 {offsets = [0, 64], sizes = [2, 32], strides = [1, 1]} : vector<2x96xf32> to vector<2x32xf32>
      %174 = vector.broadcast %6 : vector<1x32xf32> to vector<2x32xf32>
      %175 = arith.addf %173, %174 : vector<2x32xf32>
      %176 = arith.mulf %170, %175 : vector<2x32xf32>
      %177 = arith.addf %172, %176 : vector<2x32xf32>
      %178 = math.tanh %177 : vector<2x32xf32>
      %179 = arith.subf %135, %178 : vector<2x32xf32>
      %180 = arith.mulf %171, %179 : vector<2x32xf32>
      %181 = arith.addf %178, %180 : vector<2x32xf32>
      %cst_41 = arith.constant dense<0.000000e+00> : vector<2x96xf32>
      %182 = tpu.matmul %181, %1, %cst_41 {dimension_numbers = #tpu.dot_dimension_numbers<[1], [0], [0], [1], [0, 0, 1, 1], [], []>} : vector<2x32xf32>, vector<32x96xf32>, vector<2x96xf32> -> vector<2x96xf32>
      %183 = vector.broadcast %3 : vector<1x96xf32> to vector<2x96xf32>
      %184 = arith.addf %182, %183 : vector<2x96xf32>
      %185 = vector.extract_strided_slice %184 {offsets = [0, 0], sizes = [2, 64], strides = [1, 1]} : vector<2x96xf32> to vector<2x64xf32>
      %186 = vector.extract_strided_slice %160 {offsets = [0, 0], sizes = [2, 64], strides = [1, 1]} : vector<2x96xf32> to vector<2x64xf32>
      %187 = arith.addf %185, %186 : vector<2x64xf32>
      %188 = arith.negf %187 : vector<2x64xf32>
      %189 = math.exp %188 : vector<2x64xf32>
      %cst_42 = arith.constant 1.000000e+00 : f32
      %190 = vector.broadcast %cst_42 : f32 to vector<2x64xf32>
      %191 = arith.addf %190, %189 : vector<2x64xf32>
      %192 = arith.divf %190, %191 : vector<2x64xf32>
      %193 = vector.extract_strided_slice %192 {offsets = [0, 0], sizes = [2, 32], strides = [1, 1]} : vector<2x64xf32> to vector<2x32xf32>
      %194 = vector.extract_strided_slice %192 {offsets = [0, 32], sizes = [2, 32], strides = [1, 1]} : vector<2x64xf32> to vector<2x32xf32>
      %195 = vector.extract_strided_slice %184 {offsets = [0, 64], sizes = [2, 32], strides = [1, 1]} : vector<2x96xf32> to vector<2x32xf32>
      %196 = vector.extract_strided_slice %160 {offsets = [0, 64], sizes = [2, 32], strides = [1, 1]} : vector<2x96xf32> to vector<2x32xf32>
      %197 = vector.broadcast %7 : vector<1x32xf32> to vector<2x32xf32>
      %198 = arith.addf %196, %197 : vector<2x32xf32>
      %199 = arith.mulf %193, %198 : vector<2x32xf32>
      %200 = arith.addf %195, %199 : vector<2x32xf32>
      %201 = math.tanh %200 : vector<2x32xf32>
      %202 = arith.subf %158, %201 : vector<2x32xf32>
      %203 = arith.mulf %194, %202 : vector<2x32xf32>
      %204 = arith.addf %201, %203 : vector<2x32xf32>
      %205 = tpu.concatenate %66, %112, %158, %204 in 0 : vector<2x32xf32>, vector<2x32xf32>, vector<2x32xf32>, vector<2x32xf32> -> vector<8x32xf32>
      %206 = arith.index_cast %18 : i32 to index
      %c0_43 = arith.constant 0 : index
      %207 = vector.load %arg9[%206, %c0_43] : memref<400x32xf32, #tpu.memory_space<vmem>>, vector<8x32xf32>
      tpu.vector_store %arg9[%206, %c0_43], %205 {strides = array<i32>} : memref<400x32xf32, #tpu.memory_space<vmem>>, vector<8x32xf32>,
      scf.yield %181, %204 : vector<2x32xf32>, vector<2x32xf32>
    }
    %c50_i32_21 = arith.constant 50 : i32
    return
  }
}

module attributes {stable_mosaic.version = 11 : i64} {
  func.func @_fc_head_kernel(%arg0: i32, %arg1: memref<200x32xf32, #tpu.memory_space<vmem>>, %arg2: memref<200x8xf32, #tpu.memory_space<vmem>>, %arg3: memref<32x200xf32, #tpu.memory_space<vmem>>, %arg4: memref<1x200xf32, #tpu.memory_space<vmem>>, %arg5: memref<200x200xf32, #tpu.memory_space<vmem>>, %arg6: memref<1x200xf32, #tpu.memory_space<vmem>>, %arg7: memref<200x200xf32, #tpu.memory_space<vmem>>, %arg8: memref<1x200xf32, #tpu.memory_space<vmem>>, %arg9: memref<200x200xf32, #tpu.memory_space<vmem>>, %arg10: memref<1x200xf32, #tpu.memory_space<vmem>>, %arg11: memref<200x16xf32, #tpu.memory_space<vmem>>, %arg12: memref<1x16xf32, #tpu.memory_space<vmem>>, %arg13: memref<200x16xf32, #tpu.memory_space<vmem>>) attributes {dimension_semantics = [#tpu.dimension_semantics<parallel>], iteration_bounds = array<i64: 2>, scalar_prefetch = 0 : i64, scratch_operands = 0 : i64, tpu.core_type = #tpu.core_type<tc>, window_params = [{transform_indices = @transform_0, window_bounds = array<i64: 200, 32>}, {transform_indices = @transform_1, window_bounds = array<i64: 200, 8>}, {pipeline_mode = #tpu.pipeline_mode<synchronous>, transform_indices = @transform_2, window_bounds = array<i64: 32, 200>}, {pipeline_mode = #tpu.pipeline_mode<synchronous>, transform_indices = @transform_3, window_bounds = array<i64: 1, 200>}, {pipeline_mode = #tpu.pipeline_mode<synchronous>, transform_indices = @transform_4, window_bounds = array<i64: 200, 200>}, {pipeline_mode = #tpu.pipeline_mode<synchronous>, transform_indices = @transform_5, window_bounds = array<i64: 1, 200>}, {pipeline_mode = #tpu.pipeline_mode<synchronous>, transform_indices = @transform_6, window_bounds = array<i64: 200, 200>}, {pipeline_mode = #tpu.pipeline_mode<synchronous>, transform_indices = @transform_7, window_bounds = array<i64: 1, 200>}, {pipeline_mode = #tpu.pipeline_mode<synchronous>, transform_indices = @transform_8, window_bounds = array<i64: 200, 200>}, {pipeline_mode = #tpu.pipeline_mode<synchronous>, transform_indices = @transform_9, window_bounds = array<i64: 1, 200>}, {pipeline_mode = #tpu.pipeline_mode<synchronous>, transform_indices = @transform_10, window_bounds = array<i64: 200, 16>}, {pipeline_mode = #tpu.pipeline_mode<synchronous>, transform_indices = @transform_11, window_bounds = array<i64: 1, 16>}, {transform_indices = @transform_12, window_bounds = array<i64: 200, 16>}]} {
    %c0 = arith.constant 0 : index
    %c0_0 = arith.constant 0 : index
    %0 = vector.load %arg1[%c0, %c0_0] : memref<200x32xf32, #tpu.memory_space<vmem>>, vector<200x32xf32>
    %c0_1 = arith.constant 0 : index
    %c0_2 = arith.constant 0 : index
    %1 = vector.load %arg3[%c0_1, %c0_2] : memref<32x200xf32, #tpu.memory_space<vmem>>, vector<32x200xf32>
    %cst = arith.constant dense<0.000000e+00> : vector<200x200xf32>
    %2 = tpu.matmul %0, %1, %cst {dimension_numbers = #tpu.dot_dimension_numbers<[1], [0], [0], [1], [0, 0, 1, 1], [], []>} : vector<200x32xf32>, vector<32x200xf32>, vector<200x200xf32> -> vector<200x200xf32>
    %c0_3 = arith.constant 0 : index
    %c0_4 = arith.constant 0 : index
    %3 = vector.load %arg4[%c0_3, %c0_4] : memref<1x200xf32, #tpu.memory_space<vmem>>, vector<1x200xf32>
    %4 = vector.broadcast %3 : vector<1x200xf32> to vector<200x200xf32>
    %5 = arith.addf %2, %4 : vector<200x200xf32>
    %c0_5 = arith.constant 0 : index
    %c0_6 = arith.constant 0 : index
    %6 = vector.load %arg2[%c0_5, %c0_6] : memref<200x8xf32, #tpu.memory_space<vmem>>, vector<200x1xf32>
    %c0_7 = arith.constant 0 : index
    %c1 = arith.constant 1 : index
    %7 = vector.load %arg2[%c0_7, %c1] : memref<200x8xf32, #tpu.memory_space<vmem>>, vector<200x1xf32>
    %8 = vector.broadcast %6 : vector<200x1xf32> to vector<200x200xf32>
    %9 = arith.mulf %5, %8 : vector<200x200xf32>
    %10 = vector.broadcast %7 : vector<200x1xf32> to vector<200x200xf32>
    %11 = arith.addf %9, %10 : vector<200x200xf32>
    %cst_8 = arith.constant 0.000000e+00 : f32
    %12 = vector.broadcast %cst_8 : f32 to vector<200x200xf32>
    %13 = arith.maximumf %11, %12 : vector<200x200xf32>
    %c0_9 = arith.constant 0 : index
    %c0_10 = arith.constant 0 : index
    %14 = vector.load %arg5[%c0_9, %c0_10] : memref<200x200xf32, #tpu.memory_space<vmem>>, vector<200x200xf32>
    %cst_11 = arith.constant dense<0.000000e+00> : vector<200x200xf32>
    %15 = tpu.matmul %13, %14, %cst_11 {dimension_numbers = #tpu.dot_dimension_numbers<[1], [0], [0], [1], [0, 0, 1, 1], [], []>} : vector<200x200xf32>, vector<200x200xf32>, vector<200x200xf32> -> vector<200x200xf32>
    %c0_12 = arith.constant 0 : index
    %c0_13 = arith.constant 0 : index
    %16 = vector.load %arg6[%c0_12, %c0_13] : memref<1x200xf32, #tpu.memory_space<vmem>>, vector<1x200xf32>
    %17 = vector.broadcast %16 : vector<1x200xf32> to vector<200x200xf32>
    %18 = arith.addf %15, %17 : vector<200x200xf32>
    %c0_14 = arith.constant 0 : index
    %c2 = arith.constant 2 : index
    %19 = vector.load %arg2[%c0_14, %c2] : memref<200x8xf32, #tpu.memory_space<vmem>>, vector<200x1xf32>
    %c0_15 = arith.constant 0 : index
    %c3 = arith.constant 3 : index
    %20 = vector.load %arg2[%c0_15, %c3] : memref<200x8xf32, #tpu.memory_space<vmem>>, vector<200x1xf32>
    %21 = vector.broadcast %19 : vector<200x1xf32> to vector<200x200xf32>
    %22 = arith.mulf %18, %21 : vector<200x200xf32>
    %23 = vector.broadcast %20 : vector<200x1xf32> to vector<200x200xf32>
    %24 = arith.addf %22, %23 : vector<200x200xf32>
    %cst_16 = arith.constant 0.000000e+00 : f32
    %25 = vector.broadcast %cst_16 : f32 to vector<200x200xf32>
    %26 = arith.maximumf %24, %25 : vector<200x200xf32>
    %c0_17 = arith.constant 0 : index
    %c0_18 = arith.constant 0 : index
    %27 = vector.load %arg7[%c0_17, %c0_18] : memref<200x200xf32, #tpu.memory_space<vmem>>, vector<200x200xf32>
    %cst_19 = arith.constant dense<0.000000e+00> : vector<200x200xf32>
    %28 = tpu.matmul %26, %27, %cst_19 {dimension_numbers = #tpu.dot_dimension_numbers<[1], [0], [0], [1], [0, 0, 1, 1], [], []>} : vector<200x200xf32>, vector<200x200xf32>, vector<200x200xf32> -> vector<200x200xf32>
    %c0_20 = arith.constant 0 : index
    %c0_21 = arith.constant 0 : index
    %29 = vector.load %arg8[%c0_20, %c0_21] : memref<1x200xf32, #tpu.memory_space<vmem>>, vector<1x200xf32>
    %30 = vector.broadcast %29 : vector<1x200xf32> to vector<200x200xf32>
    %31 = arith.addf %28, %30 : vector<200x200xf32>
    %c0_22 = arith.constant 0 : index
    %c4 = arith.constant 4 : index
    %32 = vector.load %arg2[%c0_22, %c4] : memref<200x8xf32, #tpu.memory_space<vmem>>, vector<200x1xf32>
    %c0_23 = arith.constant 0 : index
    %c5 = arith.constant 5 : index
    %33 = vector.load %arg2[%c0_23, %c5] : memref<200x8xf32, #tpu.memory_space<vmem>>, vector<200x1xf32>
    %34 = vector.broadcast %32 : vector<200x1xf32> to vector<200x200xf32>
    %35 = arith.mulf %31, %34 : vector<200x200xf32>
    %36 = vector.broadcast %33 : vector<200x1xf32> to vector<200x200xf32>
    %37 = arith.addf %35, %36 : vector<200x200xf32>
    %cst_24 = arith.constant 0.000000e+00 : f32
    %38 = vector.broadcast %cst_24 : f32 to vector<200x200xf32>
    %39 = arith.maximumf %37, %38 : vector<200x200xf32>
    %c0_25 = arith.constant 0 : index
    %c0_26 = arith.constant 0 : index
    %40 = vector.load %arg9[%c0_25, %c0_26] : memref<200x200xf32, #tpu.memory_space<vmem>>, vector<200x200xf32>
    %cst_27 = arith.constant dense<0.000000e+00> : vector<200x200xf32>
    %41 = tpu.matmul %39, %40, %cst_27 {dimension_numbers = #tpu.dot_dimension_numbers<[1], [0], [0], [1], [0, 0, 1, 1], [], []>} : vector<200x200xf32>, vector<200x200xf32>, vector<200x200xf32> -> vector<200x200xf32>
    %c0_28 = arith.constant 0 : index
    %c0_29 = arith.constant 0 : index
    %42 = vector.load %arg10[%c0_28, %c0_29] : memref<1x200xf32, #tpu.memory_space<vmem>>, vector<1x200xf32>
    %43 = vector.broadcast %42 : vector<1x200xf32> to vector<200x200xf32>
    %44 = arith.addf %41, %43 : vector<200x200xf32>
    %c0_30 = arith.constant 0 : index
    %c6 = arith.constant 6 : index
    %45 = vector.load %arg2[%c0_30, %c6] : memref<200x8xf32, #tpu.memory_space<vmem>>, vector<200x1xf32>
    %c0_31 = arith.constant 0 : index
    %c7 = arith.constant 7 : index
    %46 = vector.load %arg2[%c0_31, %c7] : memref<200x8xf32, #tpu.memory_space<vmem>>, vector<200x1xf32>
    %47 = vector.broadcast %45 : vector<200x1xf32> to vector<200x200xf32>
    %48 = arith.mulf %44, %47 : vector<200x200xf32>
    %49 = vector.broadcast %46 : vector<200x1xf32> to vector<200x200xf32>
    %50 = arith.addf %48, %49 : vector<200x200xf32>
    %cst_32 = arith.constant 0.000000e+00 : f32
    %51 = vector.broadcast %cst_32 : f32 to vector<200x200xf32>
    %52 = arith.maximumf %50, %51 : vector<200x200xf32>
    %c0_33 = arith.constant 0 : index
    %c0_34 = arith.constant 0 : index
    %53 = vector.load %arg11[%c0_33, %c0_34] : memref<200x16xf32, #tpu.memory_space<vmem>>, vector<200x16xf32>
    %cst_35 = arith.constant dense<0.000000e+00> : vector<200x16xf32>
    %54 = tpu.matmul %52, %53, %cst_35 {dimension_numbers = #tpu.dot_dimension_numbers<[1], [0], [0], [1], [0, 0, 1, 1], [], []>} : vector<200x200xf32>, vector<200x16xf32>, vector<200x16xf32> -> vector<200x16xf32>
    %c0_36 = arith.constant 0 : index
    %c0_37 = arith.constant 0 : index
    %55 = vector.load %arg12[%c0_36, %c0_37] : memref<1x16xf32, #tpu.memory_space<vmem>>, vector<1x16xf32>
    %56 = vector.broadcast %55 : vector<1x16xf32> to vector<200x16xf32>
    %57 = arith.addf %54, %56 : vector<200x16xf32>
    %c0_38 = arith.constant 0 : index
    %c0_39 = arith.constant 0 : index
    %58 = vector.load %arg13[%c0_38, %c0_39] : memref<200x16xf32, #tpu.memory_space<vmem>>, vector<200x16xf32>
    tpu.vector_store %arg13[%c0_38, %c0_39], %57 {strides = array<i32>} : memref<200x16xf32, #tpu.memory_space<vmem>>, vector<200x16xf32>,
    return
  }
  func.func @transform_0(%arg0: i32) -> (i32, i32) {
    %c0_i32 = arith.constant 0 : i32
    %c0_i32_0 = arith.constant 0 : i32
    return %arg0, %c0_i32 : i32, i32
  }
  func.func @transform_1(%arg0: i32) -> (i32, i32) {
    %c0_i32 = arith.constant 0 : i32
    %c0_i32_0 = arith.constant 0 : i32
    return %arg0, %c0_i32 : i32, i32
  }
  func.func @transform_2(%arg0: i32) -> (i32, i32) {
    %c0_i32 = arith.constant 0 : i32
    %c0_i32_0 = arith.constant 0 : i32
    %c0_i32_1 = arith.constant 0 : i32
    return %c0_i32, %c0_i32_0 : i32, i32
  }
  func.func @transform_3(%arg0: i32) -> (i32, i32) {
    %c0_i32 = arith.constant 0 : i32
    %c0_i32_0 = arith.constant 0 : i32
    %c0_i32_1 = arith.constant 0 : i32
    return %c0_i32, %c0_i32_0 : i32, i32
  }
  func.func @transform_4(%arg0: i32) -> (i32, i32) {
    %c0_i32 = arith.constant 0 : i32
    %c0_i32_0 = arith.constant 0 : i32
    %c0_i32_1 = arith.constant 0 : i32
    return %c0_i32, %c0_i32_0 : i32, i32
  }
  func.func @transform_5(%arg0: i32) -> (i32, i32) {
    %c0_i32 = arith.constant 0 : i32
    %c0_i32_0 = arith.constant 0 : i32
    %c0_i32_1 = arith.constant 0 : i32
    return %c0_i32, %c0_i32_0 : i32, i32
  }
  func.func @transform_6(%arg0: i32) -> (i32, i32) {
    %c0_i32 = arith.constant 0 : i32
    %c0_i32_0 = arith.constant 0 : i32
    %c0_i32_1 = arith.constant 0 : i32
    return %c0_i32, %c0_i32_0 : i32, i32
  }
  func.func @transform_7(%arg0: i32) -> (i32, i32) {
    %c0_i32 = arith.constant 0 : i32
    %c0_i32_0 = arith.constant 0 : i32
    %c0_i32_1 = arith.constant 0 : i32
    return %c0_i32, %c0_i32_0 : i32, i32
  }
  func.func @transform_8(%arg0: i32) -> (i32, i32) {
    %c0_i32 = arith.constant 0 : i32
    %c0_i32_0 = arith.constant 0 : i32
    %c0_i32_1 = arith.constant 0 : i32
    return %c0_i32, %c0_i32_0 : i32, i32
  }
  func.func @transform_9(%arg0: i32) -> (i32, i32) {
    %c0_i32 = arith.constant 0 : i32
    %c0_i32_0 = arith.constant 0 : i32
    %c0_i32_1 = arith.constant 0 : i32
    return %c0_i32, %c0_i32_0 : i32, i32
  }
  func.func @transform_10(%arg0: i32) -> (i32, i32) {
    %c0_i32 = arith.constant 0 : i32
    %c0_i32_0 = arith.constant 0 : i32
    %c0_i32_1 = arith.constant 0 : i32
    return %c0_i32, %c0_i32_0 : i32, i32
  }
  func.func @transform_11(%arg0: i32) -> (i32, i32) {
    %c0_i32 = arith.constant 0 : i32
    %c0_i32_0 = arith.constant 0 : i32
    %c0_i32_1 = arith.constant 0 : i32
    return %c0_i32, %c0_i32_0 : i32, i32
  }
  func.func @transform_12(%arg0: i32) -> (i32, i32) {
    %c0_i32 = arith.constant 0 : i32
    %c0_i32_0 = arith.constant 0 : i32
    return %arg0, %c0_i32 : i32, i32
  }
}

</mosaic_0001>

<llo_original>
// kernel: network_forward.2
$region0: #{network_forward.2}
  #allocation0 [shape = 'u32[]', space=smem, size = 0x4, offset = 0x4, fixed_abs, tag = 'smem constant byte address 0x4 - core index']
  #allocation1 [shape = 'u32[144,128]{1,0:T(1,128)}', space=vmem, size = 0x12000, scoped, tag = 'internal scratch']
  #allocation2 [shape = 'f32[400,96]{1,0:T(8,128)}', space=vmem, size = 0x32000, scoped, tag = 'scratch operand']
  %s0 = inlined_call_operand.vmem [shape: f32[400,100], index: 0, kind: input, shape index: {}]
  %s1 = inlined_call_operand.vmem [shape: f32[100,96], index: 1, kind: input, shape index: {}]
  %s2 = inlined_call_operand.vmem [shape: f32[1,96], index: 2, kind: input, shape index: {}]
  %s3 = inlined_call_operand.vmem [shape: f32[32,96], index: 3, kind: input, shape index: {}]
  %s4 = inlined_call_operand.vmem [shape: f32[1,32], index: 4, kind: input, shape index: {}]
  %s5 = inlined_call_operand.vmem [shape: f32[32,96], index: 5, kind: input, shape index: {}]
  %s6 = inlined_call_operand.vmem [shape: f32[1,96], index: 6, kind: input, shape index: {}]
  %s7 = inlined_call_operand.vmem [shape: f32[32,96], index: 7, kind: input, shape index: {}]
  %s8 = inlined_call_operand.vmem [shape: f32[1,32], index: 8, kind: input, shape index: {}]
  %s9 = inlined_call_operand.vmem [shape: f32[400,32], index: 9, kind: output, shape index: {}]
  %s10 = sld [smem:[#allocation0]]
  $region53: #{network_forward.2} parent=0
    _
  %s12 = ssub.s32 1, %s10
  %s13 = scalar_select 0, %s12, %s10
  // Predicated region
  $region2: #{network_forward.2} parent=0 // pred_check
    _
  $region3: #{network_forward.2} parent=0 // pred_check_branch
    %15 = sbr.rel (0) target = $region5
  $region4: #{network_forward.2} parent=0 // pred_region
    _
  $region5: #{network_forward.2} parent=0 // pred_fallthru
    _
  // Predicated region
  $region6: #{network_forward.2} parent=0 // pred_check
    _
  $region7: #{network_forward.2} parent=0 // pred_check_branch
    %17 = sbr.rel (0) target = $region9
  $region8: #{network_forward.2} parent=0 // pred_region
    _
  $region9: #{network_forward.2} parent=0 // pred_fallthru
    _
  // Predicated region
  $region10: #{network_forward.2} parent=0 // pred_check
    _
  $region11: #{network_forward.2} parent=0 // pred_check_branch
    %19 = sbr.rel (0) target = $region13
  $region12: #{network_forward.2} parent=0 // pred_region
    _
  $region13: #{network_forward.2} parent=0 // pred_fallthru
    _
  // Predicated region
  $region14: #{network_forward.2} parent=0 // pred_check
    _
  $region15: #{network_forward.2} parent=0 // pred_check_branch
    %21 = sbr.rel (0) target = $region17
  $region16: #{network_forward.2} parent=0 // pred_region
    _
  $region17: #{network_forward.2} parent=0 // pred_fallthru
    _
  // Predicated region
  $region18: #{network_forward.2} parent=0 // pred_check
    _
  $region19: #{network_forward.2} parent=0 // pred_check_branch
    %23 = sbr.rel (0) target = $region21
  $region20: #{network_forward.2} parent=0 // pred_region
    _
  $region21: #{network_forward.2} parent=0 // pred_fallthru
    _
  // Predicated region
  $region22: #{network_forward.2} parent=0 // pred_check
    _
  $region23: #{network_forward.2} parent=0 // pred_check_branch
    %25 = sbr.rel (0) target = $region25
  $region24: #{network_forward.2} parent=0 // pred_region
    _
  $region25: #{network_forward.2} parent=0 // pred_fallthru
    _
  // Predicated region
  $region26: #{network_forward.2} parent=0 // pred_check
    _
  $region27: #{network_forward.2} parent=0 // pred_check_branch
    %27 = sbr.rel (0) target = $region29
  $region28: #{network_forward.2} parent=0 // pred_region
    _
  $region29: #{network_forward.2} parent=0 // pred_fallthru
    _
  // Predicated region
  $region30: #{network_forward.2} parent=0 // pred_check
    _
  $region31: #{network_forward.2} parent=0 // pred_check_branch
    %29 = sbr.rel (0) target = $region33
  $region32: #{network_forward.2} parent=0 // pred_region
    _
  $region33: #{network_forward.2} parent=0 // pred_fallthru
    _
  // Predicated region
  $region34: #{network_forward.2} parent=0 // pred_check
    _
  $region35: #{network_forward.2} parent=0 // pred_check_branch
    %31 = sbr.rel (0) target = $region37
  $region36: #{network_forward.2} parent=0 // pred_region
    _
  $region37: #{network_forward.2} parent=0 // pred_fallthru
    _
  %v32 = vld [vmem:[%s1] sm:$0xff]
  %v33 = vld [vmem:[%s1 + $0x8] sm:$0xff]
  %v34 = vld [vmem:[%s1 + $0x10] sm:$0xff]
  %v35 = vld [vmem:[%s1 + $0x18] sm:$0xff]
  %v36 = vld [vmem:[%s1 + $0x20] sm:$0xff]
  %v37 = vld [vmem:[%s1 + $0x28] sm:$0xff]
  %v38 = vld [vmem:[%s1 + $0x30] sm:$0xff]
  %v39 = vld [vmem:[%s1 + $0x38] sm:$0xff]
  %v40 = vld [vmem:[%s1 + $0x40] sm:$0xff]
  %v41 = vld [vmem:[%s1 + $0x48] sm:$0xff]
  %v42 = vld [vmem:[%s1 + $0x50] sm:$0xff]
  %v43 = vld [vmem:[%s1 + $0x58] sm:$0xff]
  %v44 = vld [vmem:[%s1 + $0x60] sm:$0xf]
  %v45 = vld [vmem:[%s5] sm:$0xff]
  %v46 = vld [vmem:[%s5 + $0x8] sm:$0xff]
  %v47 = vld [vmem:[%s5 + $0x10] sm:$0xff]
  %v48 = vld [vmem:[%s5 + $0x18] sm:$0xff]
  %v49 = vld [vmem:[%s2] sm:$0x1]
  %v50 = vld [vmem:[%s6] sm:$0x1]
  %v51 = vld [vmem:[%s3] sm:$0xff]
  %v52 = vld [vmem:[%s3 + $0x8] sm:$0xff]
  %v53 = vld [vmem:[%s3 + $0x10] sm:$0xff]
  %v54 = vld [vmem:[%s3 + $0x18] sm:$0xff]
  %v55 = vld [vmem:[%s7] sm:$0xff]
  %v56 = vld [vmem:[%s7 + $0x8] sm:$0xff]
  %v57 = vld [vmem:[%s7 + $0x10] sm:$0xff]
  %v58 = vld [vmem:[%s7 + $0x18] sm:$0xff]
  %v59 = vld [vmem:[%s4] sm:$0x1]
  %v60 = vld [vmem:[%s8] sm:$0x1]
  %v61 = vld [vmem:[%s0] sm:$0xff]
  %v62 = vld [vmem:[%s0 + $0x8] sm:$0xff]
  %v63 = vld [vmem:[%s0 + $0x10] sm:$0xff]
  %v64 = vld [vmem:[%s0 + $0x18] sm:$0xff]
  %v65 = vld [vmem:[%s0 + $0x20] sm:$0xff]
  %v66 = vld [vmem:[%s0 + $0x28] sm:$0xff]
  %v67 = vld [vmem:[%s0 + $0x30] sm:$0xff]
  %v68 = vld [vmem:[%s0 + $0x38] sm:$0xff]
  %v69 = vld [vmem:[%s0 + $0x40] sm:$0xff]
  %v70 = vld [vmem:[%s0 + $0x48] sm:$0xff]
  %v71 = vld [vmem:[%s0 + $0x50] sm:$0xff]
  %v72 = vld [vmem:[%s0 + $0x58] sm:$0xff]
  %v73 = vld [vmem:[%s0 + $0x60] sm:$0xff]
  %v74 = vld [vmem:[%s0 + $0x68] sm:$0xff]
  %v75 = vld [vmem:[%s0 + $0x70] sm:$0xff]
  %v76 = vld [vmem:[%s0 + $0x78] sm:$0xff]
  %v77 = vld [vmem:[%s0 + $0x80] sm:$0xff]
  %v78 = vld [vmem:[%s0 + $0x88] sm:$0xff]
  %v79 = vld [vmem:[%s0 + $0x90] sm:$0xff]
  %v80 = vld [vmem:[%s0 + $0x98] sm:$0xff]
  %v81 = vld [vmem:[%s0 + $0xa0] sm:$0xff]
  %v82 = vld [vmem:[%s0 + $0xa8] sm:$0xff]
  %v83 = vld [vmem:[%s0 + $0xb0] sm:$0xff]
  %v84 = vld [vmem:[%s0 + $0xb8] sm:$0xff]
  %v85 = vld [vmem:[%s0 + $0xc0] sm:$0xff]
  %v86 = vld [vmem:[%s0 + $0xc8] sm:$0xff]
  %v87 = vld [vmem:[%s0 + $0xd0] sm:$0xff]
  %v88 = vld [vmem:[%s0 + $0xd8] sm:$0xff]
  %v89 = vld [vmem:[%s0 + $0xe0] sm:$0xff]
  %v90 = vld [vmem:[%s0 + $0xe8] sm:$0xff]
  %v91 = vld [vmem:[%s0 + $0xf0] sm:$0xff]
  %v92 = vld [vmem:[%s0 + $0xf8] sm:$0xff]
  %v93 = vld [vmem:[%s0 + $0x100] sm:$0xff]
  %v94 = vld [vmem:[%s0 + $0x108] sm:$0xff]
  %v95 = vld [vmem:[%s0 + $0x110] sm:$0xff]
  %v96 = vld [vmem:[%s0 + $0x118] sm:$0xff]
  %v97 = vld [vmem:[%s0 + $0x120] sm:$0xff]
  %v98 = vld [vmem:[%s0 + $0x128] sm:$0xff]
  %v99 = vld [vmem:[%s0 + $0x130] sm:$0xff]
  %v100 = vld [vmem:[%s0 + $0x138] sm:$0xff]
  %v101 = vld [vmem:[%s0 + $0x140] sm:$0xff]
  %v102 = vld [vmem:[%s0 + $0x148] sm:$0xff]
  %v103 = vld [vmem:[%s0 + $0x150] sm:$0xff]
  %v104 = vld [vmem:[%s0 + $0x158] sm:$0xff]
  %v105 = vld [vmem:[%s0 + $0x160] sm:$0xff]
  %v106 = vld [vmem:[%s0 + $0x168] sm:$0xff]
  %v107 = vld [vmem:[%s0 + $0x170] sm:$0xff]
  %v108 = vld [vmem:[%s0 + $0x178] sm:$0xff]
  %v109 = vld [vmem:[%s0 + $0x180] sm:$0xff]
  %v110 = vld [vmem:[%s0 + $0x188] sm:$0xff]
  %v112 = vlaneseq
  %v113 = vshrl.u32 %v112, 7
  %v114 = vsub.s32 0, %v113
  %v115 = vrot.slane %v49, %v114
  %vm117 = vcmask 818176
  %v119 = vsel %vm117, %v61, 0
  %v122 = vsel %vm117, %v62, 0
  %v125 = vsel %vm117, %v63, 0
  %v128 = vsel %vm117, %v64, 0
  %v131 = vsel %vm117, %v65, 0
  %v134 = vsel %vm117, %v66, 0
  %v137 = vsel %vm117, %v67, 0
  %v140 = vsel %vm117, %v68, 0
  %v143 = vsel %vm117, %v69, 0
  %v146 = vsel %vm117, %v70, 0
  %v149 = vsel %vm117, %v71, 0
  %v152 = vsel %vm117, %v72, 0
  %v155 = vsel %vm117, %v73, 0
  %v158 = vsel %vm117, %v74, 0
  %v161 = vsel %vm117, %v75, 0
  %v164 = vsel %vm117, %v76, 0
  %v167 = vsel %vm117, %v77, 0
  %v170 = vsel %vm117, %v78, 0
  %v173 = vsel %vm117, %v79, 0
  %v176 = vsel %vm117, %v80, 0
  %v179 = vsel %vm117, %v81, 0
  %v182 = vsel %vm117, %v82, 0
  %v185 = vsel %vm117, %v83, 0
  %v188 = vsel %vm117, %v84, 0
  %v191 = vsel %vm117, %v85, 0
  %v194 = vsel %vm117, %v86, 0
  %v197 = vsel %vm117, %v87, 0
  %v200 = vsel %vm117, %v88, 0
  %v203 = vsel %vm117, %v89, 0
  %v206 = vsel %vm117, %v90, 0
  %v209 = vsel %vm117, %v91, 0
  %v212 = vsel %vm117, %v92, 0
  %v215 = vsel %vm117, %v93, 0
  %v218 = vsel %vm117, %v94, 0
  %v221 = vsel %vm117, %v95, 0
  %v224 = vsel %vm117, %v96, 0
  %v227 = vsel %vm117, %v97, 0
  %v230 = vsel %vm117, %v98, 0
  %v233 = vsel %vm117, %v99, 0
  %v236 = vsel %vm117, %v100, 0
  %v239 = vsel %vm117, %v101, 0
  %v242 = vsel %vm117, %v102, 0
  %v245 = vsel %vm117, %v103, 0
  %v248 = vsel %vm117, %v104, 0
  %v251 = vsel %vm117, %v105, 0
  %v254 = vsel %vm117, %v106, 0
  %v257 = vsel %vm117, %v107, 0
  %v260 = vsel %vm117, %v108, 0
  %v263 = vsel %vm117, %v109, 0
  %v266 = vsel %vm117, %v110, 0
  %vm268 = vcmask 1043456
  %v270 = vsel %vm268, %v44, 0
  %272 = vmatprep.subr.mxu0 0.0
  %273 = vmatpush1.msra.mxu0 %v32
  %274 = vmatprep.subr.mxu0 0.0
  %275 = vmatpush1.msra.mxu0 %v33
  %276 = vmatprep.subr.mxu0 0.0
  %277 = vmatpush1.msra.mxu0 %v34
  %278 = vmatprep.subr.mxu0 0.0
  %279 = vmatpush1.msra.mxu0 %v35
  %280 = vmatprep.subr.mxu0 0.0
  %281 = vmatpush1.msra.mxu0 %v36
  %282 = vmatprep.subr.mxu0 0.0
  %283 = vmatpush1.msra.mxu0 %v37
  %284 = vmatprep.subr.mxu0 0.0
  %285 = vmatpush1.msra.mxu0 %v38
  %286 = vmatprep.subr.mxu0 0.0
  %287 = vmatpush1.msra.mxu0 %v39
  %288 = vmatprep.subr.mxu0 0.0
  %289 = vmatpush1.msra.mxu0 %v40
  %290 = vmatprep.subr.mxu0 0.0
  %291 = vmatpush1.msra.mxu0 %v41
  %292 = vmatprep.subr.mxu0 0.0
  %293 = vmatpush1.msra.mxu0 %v42
  %294 = vmatprep.subr.mxu0 0.0
  %295 = vmatpush1.msra.mxu0 %v43
  %296 = vmatprep.subr.mxu0 0.0
  %297 = vmatpush1.msra.mxu0 %v270
  %298 = vmatprep.subr.mxu0 0.0
  %299 = vmatpush1.msra.mxu0 0.0
  %300 = vmatprep.subr.mxu0 0.0
  %301 = vmatpush1.msra.mxu0 0.0
  %302 = vmatprep.subr.mxu0 0.0
  %303 = vmatpush1.msra.mxu0 0.0
  %304 = vmatprep.subr.mxu0 0.0
  %305 = vmatpush1.msra.mxu0 0.0
  %306 = vmatprep.subr.mxu0 0.0
  %307 = vmatpush1.msra.mxu0 0.0
  %308 = vmatprep.subr.mxu0 0.0
  %309 = vmatpush1.msra.mxu0 0.0
  %310 = vmatprep.subr.mxu0 0.0
  %311 = vmatpush1.msra.mxu0 0.0
  %312 = vmatprep.subr.mxu0 0.0
  %313 = vmatpush1.msra.mxu0 0.0
  %314 = vmatprep.subr.mxu0 0.0
  %315 = vmatpush1.msra.mxu0 0.0
  %316 = vmatprep.subr.mxu0 0.0
  %317 = vmatpush1.msra.mxu0 0.0
  %318 = vmatprep.subr.mxu0 0.0
  %319 = vmatpush1.msra.mxu0 0.0
  %320 = vmatprep.subr.mxu0 0.0
  %321 = vmatpush1.msra.mxu0 0.0
  %322 = vmatprep.subr.mxu0 0.0
  %323 = vmatpush1.msra.mxu0 0.0
  %324 = vmatprep.subr.mxu0 0.0
  %325 = vmatpush1.msra.mxu0 0.0
  %326 = vmatprep.subr.mxu0 0.0
  %327 = vmatpush1.msra.mxu0 0.0
  %328 = vmatprep.subr.mxu0 0.0
  %329 = vmatpush1.msra.mxu0 0.0
  %330 = vmatprep.subr.mxu0 0.0
  %331 = vmatpush1.msra.mxu0 0.0
  %332 = vmatprep.subr.mxu0 0.0
  %333 = vmatpush1.msra.mxu0 0.0
  %334 = vmatprep.subr.mxu0 0.0
  %335 = vmatpush1.msra.mxu0 0.0
  %336 = vmatprep.mubr.f32.mxu0 0.0
  %337 = vmatmul.mubr.f32.gmra.mrb[0].mxu0 %v119
  %v338 = vpop.f32.mrb[0].mxu0
  %v339 = vadd.f32 %v115, %v338
  %v340 = vpop.f32.mrb[0].mxu0
  %341 = vmatprep.mubr.f32.mxu0 0.0
  %342 = vmatmul.mubr.f32.gmra.mrb[0].mxu0 %v122
  %v343 = vpop.f32.mrb[0].mxu0
  %v344 = vadd.f32 %v115, %v343
  %v345 = vpop.f32.mrb[0].mxu0
  %346 = vmatprep.mubr.f32.mxu0 0.0
  %347 = vmatmul.mubr.f32.gmra.mrb[0].mxu0 %v125
  %v348 = vpop.f32.mrb[0].mxu0
  %v349 = vadd.f32 %v115, %v348
  %v350 = vpop.f32.mrb[0].mxu0
  %351 = vmatprep.mubr.f32.mxu0 0.0
  %352 = vmatmul.mubr.f32.gmra.mrb[0].mxu0 %v128
  %v353 = vpop.f32.mrb[0].mxu0
  %v354 = vadd.f32 %v115, %v353
  %v355 = vpop.f32.mrb[0].mxu0
  %356 = vmatprep.mubr.f32.mxu0 0.0
  %357 = vmatmul.mubr.f32.gmra.mrb[0].mxu0 %v131
  %v358 = vpop.f32.mrb[0].mxu0
  %v359 = vadd.f32 %v115, %v358
  %v360 = vpop.f32.mrb[0].mxu0
  %361 = vmatprep.mubr.f32.mxu0 0.0
  %362 = vmatmul.mubr.f32.gmra.mrb[0].mxu0 %v134
  %v363 = vpop.f32.mrb[0].mxu0
  %v364 = vadd.f32 %v115, %v363
  %v365 = vpop.f32.mrb[0].mxu0
  %366 = vmatprep.mubr.f32.mxu0 0.0
  %367 = vmatmul.mubr.f32.gmra.mrb[0].mxu0 %v137
  %v368 = vpop.f32.mrb[0].mxu0
  %v369 = vadd.f32 %v115, %v368
  %v370 = vpop.f32.mrb[0].mxu0
  %371 = vmatprep.mubr.f32.mxu0 0.0
  %372 = vmatmul.mubr.f32.gmra.mrb[0].mxu0 %v140
  %v373 = vpop.f32.mrb[0].mxu0
  %v374 = vadd.f32 %v115, %v373
  %v375 = vpop.f32.mrb[0].mxu0
  %376 = vmatprep.mubr.f32.mxu0 0.0
  %377 = vmatmul.mubr.f32.gmra.mrb[0].mxu0 %v143
  %v378 = vpop.f32.mrb[0].mxu0
  %v379 = vadd.f32 %v115, %v378
  %v380 = vpop.f32.mrb[0].mxu0
  %381 = vmatprep.mubr.f32.mxu0 0.0
  %382 = vmatmul.mubr.f32.gmra.mrb[0].mxu0 %v146
  %v383 = vpop.f32.mrb[0].mxu0
  %v384 = vadd.f32 %v115, %v383
  %v385 = vpop.f32.mrb[0].mxu0
  %386 = vmatprep.mubr.f32.mxu0 0.0
  %387 = vmatmul.mubr.f32.gmra.mrb[0].mxu0 %v149
  %v388 = vpop.f32.mrb[0].mxu0
  %v389 = vadd.f32 %v115, %v388
  %v390 = vpop.f32.mrb[0].mxu0
  %391 = vmatprep.mubr.f32.mxu0 0.0
  %392 = vmatmul.mubr.f32.gmra.mrb[0].mxu0 %v152
  %v393 = vpop.f32.mrb[0].mxu0
  %v394 = vadd.f32 %v115, %v393
  %v395 = vpop.f32.mrb[0].mxu0
  %396 = vmatprep.mubr.f32.mxu0 0.0
  %397 = vmatmul.mubr.f32.gmra.mrb[0].mxu0 %v155
  %v398 = vpop.f32.mrb[0].mxu0
  %v399 = vadd.f32 %v115, %v398
  %v400 = vpop.f32.mrb[0].mxu0
  %401 = vmatprep.mubr.f32.mxu0 0.0
  %402 = vmatmul.mubr.f32.gmra.mrb[0].mxu0 %v158
  %v403 = vpop.f32.mrb[0].mxu0
  %v404 = vadd.f32 %v115, %v403
  %v405 = vpop.f32.mrb[0].mxu0
  %406 = vmatprep.mubr.f32.mxu0 0.0
  %407 = vmatmul.mubr.f32.gmra.mrb[0].mxu0 %v161
  %v408 = vpop.f32.mrb[0].mxu0
  %v409 = vadd.f32 %v115, %v408
  %v410 = vpop.f32.mrb[0].mxu0
  %411 = vmatprep.mubr.f32.mxu0 0.0
  %412 = vmatmul.mubr.f32.gmra.mrb[0].mxu0 %v164
  %v413 = vpop.f32.mrb[0].mxu0
  %v414 = vadd.f32 %v115, %v413
  %v415 = vpop.f32.mrb[0].mxu0
  %416 = vmatprep.mubr.f32.mxu0 0.0
  %417 = vmatmul.mubr.f32.gmra.mrb[0].mxu0 %v167
  %v418 = vpop.f32.mrb[0].mxu0
  %v419 = vadd.f32 %v115, %v418
  %v420 = vpop.f32.mrb[0].mxu0
  %421 = vmatprep.mubr.f32.mxu0 0.0
  %422 = vmatmul.mubr.f32.gmra.mrb[0].mxu0 %v170
  %v423 = vpop.f32.mrb[0].mxu0
  %v424 = vadd.f32 %v115, %v423
  %v425 = vpop.f32.mrb[0].mxu0
  %426 = vmatprep.mubr.f32.mxu0 0.0
  %427 = vmatmul.mubr.f32.gmra.mrb[0].mxu0 %v173
  %v428 = vpop.f32.mrb[0].mxu0
  %v429 = vadd.f32 %v115, %v428
  %v430 = vpop.f32.mrb[0].mxu0
  %431 = vmatprep.mubr.f32.mxu0 0.0
  %432 = vmatmul.mubr.f32.gmra.mrb[0].mxu0 %v176
  %v433 = vpop.f32.mrb[0].mxu0
  %v434 = vadd.f32 %v115, %v433
  %v435 = vpop.f32.mrb[0].mxu0
  %436 = vmatprep.mubr.f32.mxu0 0.0
  %437 = vmatmul.mubr.f32.gmra.mrb[0].mxu0 %v179
  %v438 = vpop.f32.mrb[0].mxu0
  %v439 = vadd.f32 %v115, %v438
  %v440 = vpop.f32.mrb[0].mxu0
  %441 = vmatprep.mubr.f32.mxu0 0.0
  %442 = vmatmul.mubr.f32.gmra.mrb[0].mxu0 %v182
  %v443 = vpop.f32.mrb[0].mxu0
  %v444 = vadd.f32 %v115, %v443
  %v445 = vpop.f32.mrb[0].mxu0
  %446 = vmatprep.mubr.f32.mxu0 0.0
  %447 = vmatmul.mubr.f32.gmra.mrb[0].mxu0 %v185
  %v448 = vpop.f32.mrb[0].mxu0
  %v449 = vadd.f32 %v115, %v448
  %v450 = vpop.f32.mrb[0].mxu0
  %451 = vmatprep.mubr.f32.mxu0 0.0
  %452 = vmatmul.mubr.f32.gmra.mrb[0].mxu0 %v188
  %v453 = vpop.f32.mrb[0].mxu0
  %v454 = vadd.f32 %v115, %v453
  %v455 = vpop.f32.mrb[0].mxu0
  %456 = vmatprep.mubr.f32.mxu0 0.0
  %457 = vmatmul.mubr.f32.gmra.mrb[0].mxu0 %v191
  %v458 = vpop.f32.mrb[0].mxu0
  %v459 = vadd.f32 %v115, %v458
  %v460 = vpop.f32.mrb[0].mxu0
  %461 = vmatprep.mubr.f32.mxu0 0.0
  %462 = vmatmul.mubr.f32.gmra.mrb[0].mxu0 %v194
  %v463 = vpop.f32.mrb[0].mxu0
  %v464 = vadd.f32 %v115, %v463
  %v465 = vpop.f32.mrb[0].mxu0
  %466 = vmatprep.mubr.f32.mxu0 0.0
  %467 = vmatmul.mubr.f32.gmra.mrb[0].mxu0 %v197
  %v468 = vpop.f32.mrb[0].mxu0
  %v469 = vadd.f32 %v115, %v468
  %v470 = vpop.f32.mrb[0].mxu0
  %471 = vmatprep.mubr.f32.mxu0 0.0
  %472 = vmatmul.mubr.f32.gmra.mrb[0].mxu0 %v200
  %v473 = vpop.f32.mrb[0].mxu0
  %v474 = vadd.f32 %v115, %v473
  %v475 = vpop.f32.mrb[0].mxu0
  %476 = vmatprep.mubr.f32.mxu0 0.0
  %477 = vmatmul.mubr.f32.gmra.mrb[0].mxu0 %v203
  %v478 = vpop.f32.mrb[0].mxu0
  %v479 = vadd.f32 %v115, %v478
  %v480 = vpop.f32.mrb[0].mxu0
  %481 = vmatprep.mubr.f32.mxu0 0.0
  %482 = vmatmul.mubr.f32.gmra.mrb[0].mxu0 %v206
  %v483 = vpop.f32.mrb[0].mxu0
  %v484 = vadd.f32 %v115, %v483
  %v485 = vpop.f32.mrb[0].mxu0
  %486 = vmatprep.mubr.f32.mxu0 0.0
  %487 = vmatmul.mubr.f32.gmra.mrb[0].mxu0 %v209
  %v488 = vpop.f32.mrb[0].mxu0
  %v489 = vadd.f32 %v115, %v488
  %v490 = vpop.f32.mrb[0].mxu0
  %491 = vmatprep.mubr.f32.mxu0 0.0
  %492 = vmatmul.mubr.f32.gmra.mrb[0].mxu0 %v212
  %v493 = vpop.f32.mrb[0].mxu0
  %v494 = vadd.f32 %v115, %v493
  %v495 = vpop.f32.mrb[0].mxu0
  %496 = vmatprep.mubr.f32.mxu0 0.0
  %497 = vmatmul.mubr.f32.gmra.mrb[0].mxu0 %v215
  %v498 = vpop.f32.mrb[0].mxu0
  %v499 = vadd.f32 %v115, %v498
  %v500 = vpop.f32.mrb[0].mxu0
  %501 = vmatprep.mubr.f32.mxu0 0.0
  %502 = vmatmul.mubr.f32.gmra.mrb[0].mxu0 %v218
  %v503 = vpop.f32.mrb[0].mxu0
  %v504 = vadd.f32 %v115, %v503
  %v505 = vpop.f32.mrb[0].mxu0
  %506 = vmatprep.mubr.f32.mxu0 0.0
  %507 = vmatmul.mubr.f32.gmra.mrb[0].mxu0 %v221
  %v508 = vpop.f32.mrb[0].mxu0
  %v509 = vadd.f32 %v115, %v508
  %v510 = vpop.f32.mrb[0].mxu0
  %511 = vmatprep.mubr.f32.mxu0 0.0
  %512 = vmatmul.mubr.f32.gmra.mrb[0].mxu0 %v224
  %v513 = vpop.f32.mrb[0].mxu0
  %v514 = vadd.f32 %v115, %v513
  %v515 = vpop.f32.mrb[0].mxu0
  %516 = vmatprep.mubr.f32.mxu0 0.0
  %517 = vmatmul.mubr.f32.gmra.mrb[0].mxu0 %v227
  %v518 = vpop.f32.mrb[0].mxu0
  %v519 = vadd.f32 %v115, %v518
  %v520 = vpop.f32.mrb[0].mxu0
  %521 = vmatprep.mubr.f32.mxu0 0.0
  %522 = vmatmul.mubr.f32.gmra.mrb[0].mxu0 %v230
  %v523 = vpop.f32.mrb[0].mxu0
  %v524 = vadd.f32 %v115, %v523
  %v525 = vpop.f32.mrb[0].mxu0
  %526 = vmatprep.mubr.f32.mxu0 0.0
  %527 = vmatmul.mubr.f32.gmra.mrb[0].mxu0 %v233
  %v528 = vpop.f32.mrb[0].mxu0
  %v529 = vadd.f32 %v115, %v528
  %v530 = vpop.f32.mrb[0].mxu0
  %531 = vmatprep.mubr.f32.mxu0 0.0
  %532 = vmatmul.mubr.f32.gmra.mrb[0].mxu0 %v236
  %v533 = vpop.f32.mrb[0].mxu0
  %v534 = vadd.f32 %v115, %v533
  %v535 = vpop.f32.mrb[0].mxu0
  %536 = vmatprep.mubr.f32.mxu0 0.0
  %537 = vmatmul.mubr.f32.gmra.mrb[0].mxu0 %v239
  %v538 = vpop.f32.mrb[0].mxu0
  %v539 = vadd.f32 %v115, %v538
  %v540 = vpop.f32.mrb[0].mxu0
  %541 = vmatprep.mubr.f32.mxu0 0.0
  %542 = vmatmul.mubr.f32.gmra.mrb[0].mxu0 %v242
  %v543 = vpop.f32.mrb[0].mxu0
  %v544 = vadd.f32 %v115, %v543
  %v545 = vpop.f32.mrb[0].mxu0
  %546 = vmatprep.mubr.f32.mxu0 0.0
  %547 = vmatmul.mubr.f32.gmra.mrb[0].mxu0 %v245
  %v548 = vpop.f32.mrb[0].mxu0
  %v549 = vadd.f32 %v115, %v548
  %v550 = vpop.f32.mrb[0].mxu0
  %551 = vmatprep.mubr.f32.mxu0 0.0
  %552 = vmatmul.mubr.f32.gmra.mrb[0].mxu0 %v248
  %v553 = vpop.f32.mrb[0].mxu0
  %v554 = vadd.f32 %v115, %v553
  %v555 = vpop.f32.mrb[0].mxu0
  %556 = vmatprep.mubr.f32.mxu0 0.0
  %557 = vmatmul.mubr.f32.gmra.mrb[0].mxu0 %v251
  %v558 = vpop.f32.mrb[0].mxu0
  %v559 = vadd.f32 %v115, %v558
  %v560 = vpop.f32.mrb[0].mxu0
  %561 = vmatprep.mubr.f32.mxu0 0.0
  %562 = vmatmul.mubr.f32.gmra.mrb[0].mxu0 %v254
  %v563 = vpop.f32.mrb[0].mxu0
  %v564 = vadd.f32 %v115, %v563
  %v565 = vpop.f32.mrb[0].mxu0
  %566 = vmatprep.mubr.f32.mxu0 0.0
  %567 = vmatmul.mubr.f32.gmra.mrb[0].mxu0 %v257
  %v568 = vpop.f32.mrb[0].mxu0
  %v569 = vadd.f32 %v115, %v568
  %v570 = vpop.f32.mrb[0].mxu0
  %571 = vmatprep.mubr.f32.mxu0 0.0
  %572 = vmatmul.mubr.f32.gmra.mrb[0].mxu0 %v260
  %v573 = vpop.f32.mrb[0].mxu0
  %v574 = vadd.f32 %v115, %v573
  %v575 = vpop.f32.mrb[0].mxu0
  %576 = vmatprep.mubr.f32.mxu0 0.0
  %577 = vmatmul.mubr.f32.gmra.mrb[0].mxu0 %v263
  %v578 = vpop.f32.mrb[0].mxu0
  %v579 = vadd.f32 %v115, %v578
  %v580 = vpop.f32.mrb[0].mxu0
  %581 = vmatprep.mubr.f32.mxu0 0.0
  %582 = vmatmul.mubr.f32.gmra.mrb[0].mxu0 %v266
  %v583 = vpop.f32.mrb[0].mxu0
  %v584 = vadd.f32 %v115, %v583
  %v585 = vpop.f32.mrb[0].mxu0
  %586 = vdwg.mxu0
  %vm587 = vcmask 785408
  %588 = vst.msk [vmem:[#allocation2] sm:$0xff] %vm587, %v339
  %589 = vst.msk [vmem:[#allocation2 + $0x8] sm:$0xff] %vm587, %v344
  %590 = vst.msk [vmem:[#allocation2 + $0x10] sm:$0xff] %vm587, %v349
  %591 = vst.msk [vmem:[#allocation2 + $0x18] sm:$0xff] %vm587, %v354
  %592 = vst.msk [vmem:[#allocation2 + $0x20] sm:$0xff] %vm587, %v359
  %593 = vst.msk [vmem:[#allocation2 + $0x28] sm:$0xff] %vm587, %v364
  %594 = vst.msk [vmem:[#allocation2 + $0x30] sm:$0xff] %vm587, %v369
  %595 = vst.msk [vmem:[#allocation2 + $0x38] sm:$0xff] %vm587, %v374
  %596 = vst.msk [vmem:[#allocation2 + $0x40] sm:$0xff] %vm587, %v379
  %597 = vst.msk [vmem:[#allocation2 + $0x48] sm:$0xff] %vm587, %v384
  %598 = vst.msk [vmem:[#allocation2 + $0x50] sm:$0xff] %vm587, %v389
  %599 = vst.msk [vmem:[#allocation2 + $0x58] sm:$0xff] %vm587, %v394
  %600 = vst.msk [vmem:[#allocation2 + $0x60] sm:$0xff] %vm587, %v399
  %601 = vst.msk [vmem:[#allocation2 + $0x68] sm:$0xff] %vm587, %v404
  %602 = vst.msk [vmem:[#allocation2 + $0x70] sm:$0xff] %vm587, %v409
  %603 = vst.msk [vmem:[#allocation2 + $0x78] sm:$0xff] %vm587, %v414
  %604 = vst.msk [vmem:[#allocation2 + $0x80] sm:$0xff] %vm587, %v419
  %605 = vst.msk [vmem:[#allocation2 + $0x88] sm:$0xff] %vm587, %v424
  %606 = vst.msk [vmem:[#allocation2 + $0x90] sm:$0xff] %vm587, %v429
  %607 = vst.msk [vmem:[#allocation2 + $0x98] sm:$0xff] %vm587, %v434
  %608 = vst.msk [vmem:[#allocation2 + $0xa0] sm:$0xff] %vm587, %v439
  %609 = vst.msk [vmem:[#allocation2 + $0xa8] sm:$0xff] %vm587, %v444
  %610 = vst.msk [vmem:[#allocation2 + $0xb0] sm:$0xff] %vm587, %v449
  %611 = vst.msk [vmem:[#allocation2 + $0xb8] sm:$0xff] %vm587, %v454
  %612 = vst.msk [vmem:[#allocation2 + $0xc0] sm:$0xff] %vm587, %v459
  %613 = vst.msk [vmem:[#allocation2 + $0xc8] sm:$0xff] %vm587, %v464
  %614 = vst.msk [vmem:[#allocation2 + $0xd0] sm:$0xff] %vm587, %v469
  %615 = vst.msk [vmem:[#allocation2 + $0xd8] sm:$0xff] %vm587, %v474
  %616 = vst.msk [vmem:[#allocation2 + $0xe0] sm:$0xff] %vm587, %v479
  %617 = vst.msk [vmem:[#allocation2 + $0xe8] sm:$0xff] %vm587, %v484
  %618 = vst.msk [vmem:[#allocation2 + $0xf0] sm:$0xff] %vm587, %v489
  %619 = vst.msk [vmem:[#allocation2 + $0xf8] sm:$0xff] %vm587, %v494
  %620 = vst.msk [vmem:[#allocation2 + $0x100] sm:$0xff] %vm587, %v499
  %621 = vst.msk [vmem:[#allocation2 + $0x108] sm:$0xff] %vm587, %v504
  %622 = vst.msk [vmem:[#allocation2 + $0x110] sm:$0xff] %vm587, %v509
  %623 = vst.msk [vmem:[#allocation2 + $0x118] sm:$0xff] %vm587, %v514
  %624 = vst.msk [vmem:[#allocation2 + $0x120] sm:$0xff] %vm587, %v519
  %625 = vst.msk [vmem:[#allocation2 + $0x128] sm:$0xff] %vm587, %v524
  %626 = vst.msk [vmem:[#allocation2 + $0x130] sm:$0xff] %vm587, %v529
  %627 = vst.msk [vmem:[#allocation2 + $0x138] sm:$0xff] %vm587, %v534
  %628 = vst.msk [vmem:[#allocation2 + $0x140] sm:$0xff] %vm587, %v539
  %629 = vst.msk [vmem:[#allocation2 + $0x148] sm:$0xff] %vm587, %v544
  %630 = vst.msk [vmem:[#allocation2 + $0x150] sm:$0xff] %vm587, %v549
  %631 = vst.msk [vmem:[#allocation2 + $0x158] sm:$0xff] %vm587, %v554
  %632 = vst.msk [vmem:[#allocation2 + $0x160] sm:$0xff] %vm587, %v559
  %633 = vst.msk [vmem:[#allocation2 + $0x168] sm:$0xff] %vm587, %v564
  %634 = vst.msk [vmem:[#allocation2 + $0x170] sm:$0xff] %vm587, %v569
  %635 = vst.msk [vmem:[#allocation2 + $0x178] sm:$0xff] %vm587, %v574
  %636 = vst.msk [vmem:[#allocation2 + $0x180] sm:$0xff] %vm587, %v579
  %637 = vst.msk [vmem:[#allocation2 + $0x188] sm:$0xff] %vm587, %v584
  loop: start=0, step=1, limit=50
  $region38: #{network_forward.2} parent=0 // loop_pre_header
    _
  $region39: #{network_forward.2} parent=0 // loop_header
    %s639 = sphi 0, %s643
    %p640 = scmp.ge.s32.totalorder %s639, 50
    %v644 = vphi 0.0, %v1722
    %v645 = vphi 0.0, %v1828
  $region40: #{network_forward.2} parent=0 // loop_header_branch
    %642 = sbr.rel (%p640) target = $region44
  $region41: #{network_forward.2} parent=0 // loop_body
    %s646 = smul.u32 %s639, 8
    %s647 = scalar_lea.vmem [#allocation2], %s646
    %v648 = vld [vmem:[%s647] sm:$0xff]
    %v650 = vrot.slane %v644, 6
    %651 = vrot.lane.b32.xlu0 %v650, 64
    %v652 = vpop.permute.xlu0 %651
    %vm653 = vcmask 261120
    %v654 = vsel %vm653, %v652, 0
    %656 = vmatprep.subr.mxu0 0.0
    %657 = vmatpush1.msra.mxu0 %v51
    %658 = vmatprep.subr.mxu0 0.0
    %659 = vmatpush1.msra.mxu0 %v52
    %660 = vmatprep.subr.mxu0 0.0
    %661 = vmatpush1.msra.mxu0 %v53
    %662 = vmatprep.subr.mxu0 0.0
    %663 = vmatpush1.msra.mxu0 %v54
    %664 = vmatprep.subr.mxu0 0.0
    %665 = vmatpush1.msra.mxu0 0.0
    %666 = vmatprep.subr.mxu0 0.0
    %667 = vmatpush1.msra.mxu0 0.0
    %668 = vmatprep.subr.mxu0 0.0
    %669 = vmatpush1.msra.mxu0 0.0
    %670 = vmatprep.subr.mxu0 0.0
    %671 = vmatpush1.msra.mxu0 0.0
    %672 = vmatprep.subr.mxu0 0.0
    %673 = vmatpush1.msra.mxu0 0.0
    %674 = vmatprep.subr.mxu0 0.0
    %675 = vmatpush1.msra.mxu0 0.0
    %676 = vmatprep.subr.mxu0 0.0
    %677 = vmatpush1.msra.mxu0 0.0
    %678 = vmatprep.subr.mxu0 0.0
    %679 = vmatpush1.msra.mxu0 0.0
    %680 = vmatprep.subr.mxu0 0.0
    %681 = vmatpush1.msra.mxu0 0.0
    %682 = vmatprep.subr.mxu0 0.0
    %683 = vmatpush1.msra.mxu0 0.0
    %684 = vmatprep.subr.mxu0 0.0
    %685 = vmatpush1.msra.mxu0 0.0
    %686 = vmatprep.subr.mxu0 0.0
    %687 = vmatpush1.msra.mxu0 0.0
    %688 = vmatprep.subr.mxu0 0.0
    %689 = vmatpush1.msra.mxu0 0.0
    %690 = vmatprep.subr.mxu0 0.0
    %691 = vmatpush1.msra.mxu0 0.0
    %692 = vmatprep.subr.mxu0 0.0
    %693 = vmatpush1.msra.mxu0 0.0
    %694 = vmatprep.subr.mxu0 0.0
    %695 = vmatpush1.msra.mxu0 0.0
    %696 = vmatprep.subr.mxu0 0.0
    %697 = vmatpush1.msra.mxu0 0.0
    %698 = vmatprep.subr.mxu0 0.0
    %699 = vmatpush1.msra.mxu0 0.0
    %700 = vmatprep.subr.mxu0 0.0
    %701 = vmatpush1.msra.mxu0 0.0
    %702 = vmatprep.subr.mxu0 0.0
    %703 = vmatpush1.msra.mxu0 0.0
    %704 = vmatprep.subr.mxu0 0.0
    %705 = vmatpush1.msra.mxu0 0.0
    %706 = vmatprep.subr.mxu0 0.0
    %707 = vmatpush1.msra.mxu0 0.0
    %708 = vmatprep.subr.mxu0 0.0
    %709 = vmatpush1.msra.mxu0 0.0
    %710 = vmatprep.subr.mxu0 0.0
    %711 = vmatpush1.msra.mxu0 0.0
    %712 = vmatprep.subr.mxu0 0.0
    %713 = vmatpush1.msra.mxu0 0.0
    %714 = vmatprep.subr.mxu0 0.0
    %715 = vmatpush1.msra.mxu0 0.0
    %716 = vmatprep.subr.mxu0 0.0
    %717 = vmatpush1.msra.mxu0 0.0
    %718 = vmatprep.subr.mxu0 0.0
    %719 = vmatpush1.msra.mxu0 0.0
    %720 = vmatprep.mubr.f32.mxu0 0.0
    %721 = vmatmul.mubr.f32.gmra.mrb[0].mxu0 %v654
    %v722 = vpop.f32.mrb[0].mxu0
    %v723 = vadd.f32 0.0, %v722
    %v724 = vpop.f32.mrb[0].mxu0
    %725 = vdwg.mxu0
    %727 = vrot.lane.b32.xlu0 %v645, 64
    %v728 = vpop.permute.xlu0 %727
    %v729 = vsel %vm653, %v728, 0
    %731 = vmatprep.subr.mxu0 0.0
    %732 = vmatpush1.msra.mxu0 %v55
    %733 = vmatprep.subr.mxu0 0.0
    %734 = vmatpush1.msra.mxu0 %v56
    %735 = vmatprep.subr.mxu0 0.0
    %736 = vmatpush1.msra.mxu0 %v57
    %737 = vmatprep.subr.mxu0 0.0
    %738 = vmatpush1.msra.mxu0 %v58
    %739 = vmatprep.subr.mxu0 0.0
    %740 = vmatpush1.msra.mxu0 0.0
    %741 = vmatprep.subr.mxu0 0.0
    %742 = vmatpush1.msra.mxu0 0.0
    %743 = vmatprep.subr.mxu0 0.0
    %744 = vmatpush1.msra.mxu0 0.0
    %745 = vmatprep.subr.mxu0 0.0
    %746 = vmatpush1.msra.mxu0 0.0
    %747 = vmatprep.subr.mxu0 0.0
    %748 = vmatpush1.msra.mxu0 0.0
    %749 = vmatprep.subr.mxu0 0.0
    %750 = vmatpush1.msra.mxu0 0.0
    %751 = vmatprep.subr.mxu0 0.0
    %752 = vmatpush1.msra.mxu0 0.0
    %753 = vmatprep.subr.mxu0 0.0
    %754 = vmatpush1.msra.mxu0 0.0
    %755 = vmatprep.subr.mxu0 0.0
    %756 = vmatpush1.msra.mxu0 0.0
    %757 = vmatprep.subr.mxu0 0.0
    %758 = vmatpush1.msra.mxu0 0.0
    %759 = vmatprep.subr.mxu0 0.0
    %760 = vmatpush1.msra.mxu0 0.0
    %761 = vmatprep.subr.mxu0 0.0
    %762 = vmatpush1.msra.mxu0 0.0
    %763 = vmatprep.subr.mxu0 0.0
    %764 = vmatpush1.msra.mxu0 0.0
    %765 = vmatprep.subr.mxu0 0.0
    %766 = vmatpush1.msra.mxu0 0.0
    %767 = vmatprep.subr.mxu0 0.0
    %768 = vmatpush1.msra.mxu0 0.0
    %769 = vmatprep.subr.mxu0 0.0
    %770 = vmatpush1.msra.mxu0 0.0
    %771 = vmatprep.subr.mxu0 0.0
    %772 = vmatpush1.msra.mxu0 0.0
    %773 = vmatprep.subr.mxu0 0.0
    %774 = vmatpush1.msra.mxu0 0.0
    %775 = vmatprep.subr.mxu0 0.0
    %776 = vmatpush1.msra.mxu0 0.0
    %777 = vmatprep.subr.mxu0 0.0
    %778 = vmatpush1.msra.mxu0 0.0
    %779 = vmatprep.subr.mxu0 0.0
    %780 = vmatpush1.msra.mxu0 0.0
    %781 = vmatprep.subr.mxu0 0.0
    %782 = vmatpush1.msra.mxu0 0.0
    %783 = vmatprep.subr.mxu0 0.0
    %784 = vmatpush1.msra.mxu0 0.0
    %785 = vmatprep.subr.mxu0 0.0
    %786 = vmatpush1.msra.mxu0 0.0
    %787 = vmatprep.subr.mxu0 0.0
    %788 = vmatpush1.msra.mxu0 0.0
    %789 = vmatprep.subr.mxu0 0.0
    %790 = vmatpush1.msra.mxu0 0.0
    %791 = vmatprep.subr.mxu0 0.0
    %792 = vmatpush1.msra.mxu0 0.0
    %793 = vmatprep.subr.mxu0 0.0
    %794 = vmatpush1.msra.mxu0 0.0
    %795 = vmatprep.mubr.f32.mxu0 0.0
    %796 = vmatmul.mubr.f32.gmra.mrb[0].mxu0 %v729
    %v797 = vpop.f32.mrb[0].mxu0
    %v798 = vadd.f32 0.0, %v797
    %v799 = vpop.f32.mrb[0].mxu0
    %800 = vdwg.mxu0
    %v801 = vadd.f32 %v648, %v723
    %v802 = vxor.u32 %v801, 2147483648
    %v803 = vmul.f32 %v802, 1.442695
    %v804 = vpow.pop %v803
    %v805 = vadd.f32 %v804, 1.0
    %v806 = vrcp.pop %v805
    %v807 = vmul.f32 1.0, %v806
    %v809 = vlaneseq
    %v810 = vshrl.u32 %v809, 7
    %v811 = vsub.s32 0, %v810
    %v812 = vrot.slane %v59, %v811
    %813 = vrot.lane.b32.xlu0 %v812, 64
    %v814 = vpop.permute.xlu0 %813
    %v816 = vadd.f32 %v723, %v814
    %818 = vrot.lane.b32.xlu0 %v816, 64
    %v819 = vpop.permute.xlu0 %818
    %v821 = vmul.f32 %v807, %v819
    %823 = vrot.lane.b32.xlu0 %v821, 64
    %v824 = vpop.permute.xlu0 %823
    %v826 = vadd.f32 %v648, %v824
    %v827 = vtanh.pop %v826
    %v829 = vrot.slane %v827, 2
    %v831 = vsub.f32 %v644, %v829
    %v833 = vrot.slane %v831, 6
    %834 = vrot.lane.b32.xlu0 %v833, 96
    %v835 = vpop.permute.xlu0 %834
    %v837 = vmul.f32 %v807, %v835
    %839 = vrot.lane.b32.xlu0 %v837, 32
    %v840 = vpop.permute.xlu0 %839
    %v842 = vadd.f32 %v827, %v840
    %v844 = vlaneseq
    %v845 = vshrl.u32 %v844, 7
    %v846 = vsub.s32 0, %v845
    %v847 = vrot.slane %v50, %v846
    %850 = vrot.lane.b32.xlu0 %v842, 64
    %v851 = vpop.permute.xlu0 %850
    %v852 = vsel %vm653, %v851, 0
    %854 = vmatprep.subr.mxu0 0.0
    %855 = vmatpush1.msra.mxu0 %v45
    %856 = vmatprep.subr.mxu0 0.0
    %857 = vmatpush1.msra.mxu0 %v46
    %858 = vmatprep.subr.mxu0 0.0
    %859 = vmatpush1.msra.mxu0 %v47
    %860 = vmatprep.subr.mxu0 0.0
    %861 = vmatpush1.msra.mxu0 %v48
    %862 = vmatprep.subr.mxu0 0.0
    %863 = vmatpush1.msra.mxu0 0.0
    %864 = vmatprep.subr.mxu0 0.0
    %865 = vmatpush1.msra.mxu0 0.0
    %866 = vmatprep.subr.mxu0 0.0
    %867 = vmatpush1.msra.mxu0 0.0
    %868 = vmatprep.subr.mxu0 0.0
    %869 = vmatpush1.msra.mxu0 0.0
    %870 = vmatprep.subr.mxu0 0.0
    %871 = vmatpush1.msra.mxu0 0.0
    %872 = vmatprep.subr.mxu0 0.0
    %873 = vmatpush1.msra.mxu0 0.0
    %874 = vmatprep.subr.mxu0 0.0
    %875 = vmatpush1.msra.mxu0 0.0
    %876 = vmatprep.subr.mxu0 0.0
    %877 = vmatpush1.msra.mxu0 0.0
    %878 = vmatprep.subr.mxu0 0.0
    %879 = vmatpush1.msra.mxu0 0.0
    %880 = vmatprep.subr.mxu0 0.0
    %881 = vmatpush1.msra.mxu0 0.0
    %882 = vmatprep.subr.mxu0 0.0
    %883 = vmatpush1.msra.mxu0 0.0
    %884 = vmatprep.subr.mxu0 0.0
    %885 = vmatpush1.msra.mxu0 0.0
    %886 = vmatprep.subr.mxu0 0.0
    %887 = vmatpush1.msra.mxu0 0.0
    %888 = vmatprep.subr.mxu0 0.0
    %889 = vmatpush1.msra.mxu0 0.0
    %890 = vmatprep.subr.mxu0 0.0
    %891 = vmatpush1.msra.mxu0 0.0
    %892 = vmatprep.subr.mxu0 0.0
    %893 = vmatpush1.msra.mxu0 0.0
    %894 = vmatprep.subr.mxu0 0.0
    %895 = vmatpush1.msra.mxu0 0.0
    %896 = vmatprep.subr.mxu0 0.0
    %897 = vmatpush1.msra.mxu0 0.0
    %898 = vmatprep.subr.mxu0 0.0
    %899 = vmatpush1.msra.mxu0 0.0
    %900 = vmatprep.subr.mxu0 0.0
    %901 = vmatpush1.msra.mxu0 0.0
    %902 = vmatprep.subr.mxu0 0.0
    %903 = vmatpush1.msra.mxu0 0.0
    %904 = vmatprep.subr.mxu0 0.0
    %905 = vmatpush1.msra.mxu0 0.0
    %906 = vmatprep.subr.mxu0 0.0
    %907 = vmatpush1.msra.mxu0 0.0
    %908 = vmatprep.subr.mxu0 0.0
    %909 = vmatpush1.msra.mxu0 0.0
    %910 = vmatprep.subr.mxu0 0.0
    %911 = vmatpush1.msra.mxu0 0.0
    %912 = vmatprep.subr.mxu0 0.0
    %913 = vmatpush1.msra.mxu0 0.0
    %914 = vmatprep.subr.mxu0 0.0
    %915 = vmatpush1.msra.mxu0 0.0
    %916 = vmatprep.subr.mxu0 0.0
    %917 = vmatpush1.msra.mxu0 0.0
    %918 = vmatprep.mubr.f32.mxu0 0.0
    %919 = vmatmul.mubr.f32.gmra.mrb[0].mxu0 %v852
    %v920 = vpop.f32.mrb[0].mxu0
    %v921 = vadd.f32 %v847, %v920
    %v922 = vpop.f32.mrb[0].mxu0
    %923 = vdwg.mxu0
    %v924 = vadd.f32 %v921, %v798
    %v925 = vxor.u32 %v924, 2147483648
    %v926 = vmul.f32 %v925, 1.442695
    %v927 = vpow.pop %v926
    %v928 = vadd.f32 %v927, 1.0
    %v929 = vrcp.pop %v928
    %v930 = vmul.f32 1.0, %v929
    %v932 = vlaneseq
    %v933 = vshrl.u32 %v932, 7
    %v934 = vsub.s32 0, %v933
    %v935 = vrot.slane %v60, %v934
    %936 = vrot.lane.b32.xlu0 %v935, 64
    %v937 = vpop.permute.xlu0 %936
    %v939 = vadd.f32 %v798, %v937
    %941 = vrot.lane.b32.xlu0 %v939, 64
    %v942 = vpop.permute.xlu0 %941
    %v944 = vmul.f32 %v930, %v942
    %946 = vrot.lane.b32.xlu0 %v944, 64
    %v947 = vpop.permute.xlu0 %946
    %v949 = vadd.f32 %v921, %v947
    %v950 = vtanh.pop %v949
    %v951 = vsub.f32 %v645, %v950
    %953 = vrot.lane.b32.xlu0 %v951, 96
    %v954 = vpop.permute.xlu0 %953
    %v956 = vmul.f32 %v930, %v954
    %958 = vrot.lane.b32.xlu0 %v956, 32
    %v959 = vpop.permute.xlu0 %958
    %v961 = vadd.f32 %v950, %v959
    %962 = vmatprep.subr.mxu0 0.0
    %963 = vmatpush1.msra.mxu0 %v51
    %964 = vmatprep.subr.mxu0 0.0
    %965 = vmatpush1.msra.mxu0 %v52
    %966 = vmatprep.subr.mxu0 0.0
    %967 = vmatpush1.msra.mxu0 %v53
    %968 = vmatprep.subr.mxu0 0.0
    %969 = vmatpush1.msra.mxu0 %v54
    %970 = vmatprep.subr.mxu0 0.0
    %971 = vmatpush1.msra.mxu0 0.0
    %972 = vmatprep.subr.mxu0 0.0
    %973 = vmatpush1.msra.mxu0 0.0
    %974 = vmatprep.subr.mxu0 0.0
    %975 = vmatpush1.msra.mxu0 0.0
    %976 = vmatprep.subr.mxu0 0.0
    %977 = vmatpush1.msra.mxu0 0.0
    %978 = vmatprep.subr.mxu0 0.0
    %979 = vmatpush1.msra.mxu0 0.0
    %980 = vmatprep.subr.mxu0 0.0
    %981 = vmatpush1.msra.mxu0 0.0
    %982 = vmatprep.subr.mxu0 0.0
    %983 = vmatpush1.msra.mxu0 0.0
    %984 = vmatprep.subr.mxu0 0.0
    %985 = vmatpush1.msra.mxu0 0.0
    %986 = vmatprep.subr.mxu0 0.0
    %987 = vmatpush1.msra.mxu0 0.0
    %988 = vmatprep.subr.mxu0 0.0
    %989 = vmatpush1.msra.mxu0 0.0
    %990 = vmatprep.subr.mxu0 0.0
    %991 = vmatpush1.msra.mxu0 0.0
    %992 = vmatprep.subr.mxu0 0.0
    %993 = vmatpush1.msra.mxu0 0.0
    %994 = vmatprep.subr.mxu0 0.0
    %995 = vmatpush1.msra.mxu0 0.0
    %996 = vmatprep.subr.mxu0 0.0
    %997 = vmatpush1.msra.mxu0 0.0
    %998 = vmatprep.subr.mxu0 0.0
    %999 = vmatpush1.msra.mxu0 0.0
    %1000 = vmatprep.subr.mxu0 0.0
    %1001 = vmatpush1.msra.mxu0 0.0
    %1002 = vmatprep.subr.mxu0 0.0
    %1003 = vmatpush1.msra.mxu0 0.0
    %1004 = vmatprep.subr.mxu0 0.0
    %1005 = vmatpush1.msra.mxu0 0.0
    %1006 = vmatprep.subr.mxu0 0.0
    %1007 = vmatpush1.msra.mxu0 0.0
    %1008 = vmatprep.subr.mxu0 0.0
    %1009 = vmatpush1.msra.mxu0 0.0
    %1010 = vmatprep.subr.mxu0 0.0
    %1011 = vmatpush1.msra.mxu0 0.0
    %1012 = vmatprep.subr.mxu0 0.0
    %1013 = vmatpush1.msra.mxu0 0.0
    %1014 = vmatprep.subr.mxu0 0.0
    %1015 = vmatpush1.msra.mxu0 0.0
    %1016 = vmatprep.subr.mxu0 0.0
    %1017 = vmatpush1.msra.mxu0 0.0
    %1018 = vmatprep.subr.mxu0 0.0
    %1019 = vmatpush1.msra.mxu0 0.0
    %1020 = vmatprep.subr.mxu0 0.0
    %1021 = vmatpush1.msra.mxu0 0.0
    %1022 = vmatprep.subr.mxu0 0.0
    %1023 = vmatpush1.msra.mxu0 0.0
    %1024 = vmatprep.subr.mxu0 0.0
    %1025 = vmatpush1.msra.mxu0 0.0
    %1026 = vmatprep.mubr.f32.mxu0 0.0
    %1027 = vmatmul.mubr.f32.gmra.mrb[0].mxu0 %v852
    %v1028 = vpop.f32.mrb[0].mxu0
    %v1029 = vadd.f32 0.0, %v1028
    %v1030 = vpop.f32.mrb[0].mxu0
    %1031 = vdwg.mxu0
    %1033 = vrot.lane.b32.xlu0 %v961, 64
    %v1034 = vpop.permute.xlu0 %1033
    %v1035 = vsel %vm653, %v1034, 0
    %1037 = vmatprep.subr.mxu0 0.0
    %1038 = vmatpush1.msra.mxu0 %v55
    %1039 = vmatprep.subr.mxu0 0.0
    %1040 = vmatpush1.msra.mxu0 %v56
    %1041 = vmatprep.subr.mxu0 0.0
    %1042 = vmatpush1.msra.mxu0 %v57
    %1043 = vmatprep.subr.mxu0 0.0
    %1044 = vmatpush1.msra.mxu0 %v58
    %1045 = vmatprep.subr.mxu0 0.0
    %1046 = vmatpush1.msra.mxu0 0.0
    %1047 = vmatprep.subr.mxu0 0.0
    %1048 = vmatpush1.msra.mxu0 0.0
    %1049 = vmatprep.subr.mxu0 0.0
    %1050 = vmatpush1.msra.mxu0 0.0
    %1051 = vmatprep.subr.mxu0 0.0
    %1052 = vmatpush1.msra.mxu0 0.0
    %1053 = vmatprep.subr.mxu0 0.0
    %1054 = vmatpush1.msra.mxu0 0.0
    %1055 = vmatprep.subr.mxu0 0.0
    %1056 = vmatpush1.msra.mxu0 0.0
    %1057 = vmatprep.subr.mxu0 0.0
    %1058 = vmatpush1.msra.mxu0 0.0
    %1059 = vmatprep.subr.mxu0 0.0
    %1060 = vmatpush1.msra.mxu0 0.0
    %1061 = vmatprep.subr.mxu0 0.0
    %1062 = vmatpush1.msra.mxu0 0.0
    %1063 = vmatprep.subr.mxu0 0.0
    %1064 = vmatpush1.msra.mxu0 0.0
    %1065 = vmatprep.subr.mxu0 0.0
    %1066 = vmatpush1.msra.mxu0 0.0
    %1067 = vmatprep.subr.mxu0 0.0
    %1068 = vmatpush1.msra.mxu0 0.0
    %1069 = vmatprep.subr.mxu0 0.0
    %1070 = vmatpush1.msra.mxu0 0.0
    %1071 = vmatprep.subr.mxu0 0.0
    %1072 = vmatpush1.msra.mxu0 0.0
    %1073 = vmatprep.subr.mxu0 0.0
    %1074 = vmatpush1.msra.mxu0 0.0
    %1075 = vmatprep.subr.mxu0 0.0
    %1076 = vmatpush1.msra.mxu0 0.0
    %1077 = vmatprep.subr.mxu0 0.0
    %1078 = vmatpush1.msra.mxu0 0.0
    %1079 = vmatprep.subr.mxu0 0.0
    %1080 = vmatpush1.msra.mxu0 0.0
    %1081 = vmatprep.subr.mxu0 0.0
    %1082 = vmatpush1.msra.mxu0 0.0
    %1083 = vmatprep.subr.mxu0 0.0
    %1084 = vmatpush1.msra.mxu0 0.0
    %1085 = vmatprep.subr.mxu0 0.0
    %1086 = vmatpush1.msra.mxu0 0.0
    %1087 = vmatprep.subr.mxu0 0.0
    %1088 = vmatpush1.msra.mxu0 0.0
    %1089 = vmatprep.subr.mxu0 0.0
    %1090 = vmatpush1.msra.mxu0 0.0
    %1091 = vmatprep.subr.mxu0 0.0
    %1092 = vmatpush1.msra.mxu0 0.0
    %1093 = vmatprep.subr.mxu0 0.0
    %1094 = vmatpush1.msra.mxu0 0.0
    %1095 = vmatprep.subr.mxu0 0.0
    %1096 = vmatpush1.msra.mxu0 0.0
    %1097 = vmatprep.subr.mxu0 0.0
    %1098 = vmatpush1.msra.mxu0 0.0
    %1099 = vmatprep.subr.mxu0 0.0
    %1100 = vmatpush1.msra.mxu0 0.0
    %1101 = vmatprep.mubr.f32.mxu0 0.0
    %1102 = vmatmul.mubr.f32.gmra.mrb[0].mxu0 %v1035
    %v1103 = vpop.f32.mrb[0].mxu0
    %v1104 = vadd.f32 0.0, %v1103
    %v1105 = vpop.f32.mrb[0].mxu0
    %1106 = vdwg.mxu0
    %v1108 = vrot.slane %v1029, 6
    %v1110 = vadd.f32 %v648, %v1108
    %v1111 = vxor.u32 %v1110, 2147483648
    %v1112 = vmul.f32 %v1111, 1.442695
    %v1113 = vpow.pop %v1112
    %v1114 = vadd.f32 %v1113, 1.0
    %v1115 = vrcp.pop %v1114
    %v1116 = vmul.f32 1.0, %v1115
    %v1117 = vadd.f32 %v1029, %v814
    %v1119 = vrot.slane %v1117, 6
    %1120 = vrot.lane.b32.xlu0 %v1119, 64
    %v1121 = vpop.permute.xlu0 %1120
    %v1123 = vmul.f32 %v1116, %v1121
    %1125 = vrot.lane.b32.xlu0 %v1123, 64
    %v1126 = vpop.permute.xlu0 %1125
    %v1128 = vadd.f32 %v648, %v1126
    %v1129 = vtanh.pop %v1128
    %v1131 = vrot.slane %v1129, 2
    %v1133 = vsub.f32 %v842, %v1131
    %v1135 = vrot.slane %v1133, 6
    %1136 = vrot.lane.b32.xlu0 %v1135, 96
    %v1137 = vpop.permute.xlu0 %1136
    %v1139 = vmul.f32 %v1116, %v1137
    %1141 = vrot.lane.b32.xlu0 %v1139, 32
    %v1142 = vpop.permute.xlu0 %1141
    %v1144 = vadd.f32 %v1129, %v1142
    %v1146 = vrot.slane %v1144, 2
    %1147 = vrot.lane.b32.xlu0 %v1146, 64
    %v1148 = vpop.permute.xlu0 %1147
    %v1149 = vsel %vm653, %v1148, 0
    %1151 = vmatprep.subr.mxu0 0.0
    %1152 = vmatpush1.msra.mxu0 %v45
    %1153 = vmatprep.subr.mxu0 0.0
    %1154 = vmatpush1.msra.mxu0 %v46
    %1155 = vmatprep.subr.mxu0 0.0
    %1156 = vmatpush1.msra.mxu0 %v47
    %1157 = vmatprep.subr.mxu0 0.0
    %1158 = vmatpush1.msra.mxu0 %v48
    %1159 = vmatprep.subr.mxu0 0.0
    %1160 = vmatpush1.msra.mxu0 0.0
    %1161 = vmatprep.subr.mxu0 0.0
    %1162 = vmatpush1.msra.mxu0 0.0
    %1163 = vmatprep.subr.mxu0 0.0
    %1164 = vmatpush1.msra.mxu0 0.0
    %1165 = vmatprep.subr.mxu0 0.0
    %1166 = vmatpush1.msra.mxu0 0.0
    %1167 = vmatprep.subr.mxu0 0.0
    %1168 = vmatpush1.msra.mxu0 0.0
    %1169 = vmatprep.subr.mxu0 0.0
    %1170 = vmatpush1.msra.mxu0 0.0
    %1171 = vmatprep.subr.mxu0 0.0
    %1172 = vmatpush1.msra.mxu0 0.0
    %1173 = vmatprep.subr.mxu0 0.0
    %1174 = vmatpush1.msra.mxu0 0.0
    %1175 = vmatprep.subr.mxu0 0.0
    %1176 = vmatpush1.msra.mxu0 0.0
    %1177 = vmatprep.subr.mxu0 0.0
    %1178 = vmatpush1.msra.mxu0 0.0
    %1179 = vmatprep.subr.mxu0 0.0
    %1180 = vmatpush1.msra.mxu0 0.0
    %1181 = vmatprep.subr.mxu0 0.0
    %1182 = vmatpush1.msra.mxu0 0.0
    %1183 = vmatprep.subr.mxu0 0.0
    %1184 = vmatpush1.msra.mxu0 0.0
    %1185 = vmatprep.subr.mxu0 0.0
    %1186 = vmatpush1.msra.mxu0 0.0
    %1187 = vmatprep.subr.mxu0 0.0
    %1188 = vmatpush1.msra.mxu0 0.0
    %1189 = vmatprep.subr.mxu0 0.0
    %1190 = vmatpush1.msra.mxu0 0.0
    %1191 = vmatprep.subr.mxu0 0.0
    %1192 = vmatpush1.msra.mxu0 0.0
    %1193 = vmatprep.subr.mxu0 0.0
    %1194 = vmatpush1.msra.mxu0 0.0
    %1195 = vmatprep.subr.mxu0 0.0
    %1196 = vmatpush1.msra.mxu0 0.0
    %1197 = vmatprep.subr.mxu0 0.0
    %1198 = vmatpush1.msra.mxu0 0.0
    %1199 = vmatprep.subr.mxu0 0.0
    %1200 = vmatpush1.msra.mxu0 0.0
    %1201 = vmatprep.subr.mxu0 0.0
    %1202 = vmatpush1.msra.mxu0 0.0
    %1203 = vmatprep.subr.mxu0 0.0
    %1204 = vmatpush1.msra.mxu0 0.0
    %1205 = vmatprep.subr.mxu0 0.0
    %1206 = vmatpush1.msra.mxu0 0.0
    %1207 = vmatprep.subr.mxu0 0.0
    %1208 = vmatpush1.msra.mxu0 0.0
    %1209 = vmatprep.subr.mxu0 0.0
    %1210 = vmatpush1.msra.mxu0 0.0
    %1211 = vmatprep.subr.mxu0 0.0
    %1212 = vmatpush1.msra.mxu0 0.0
    %1213 = vmatprep.subr.mxu0 0.0
    %1214 = vmatpush1.msra.mxu0 0.0
    %1215 = vmatprep.mubr.f32.mxu0 0.0
    %1216 = vmatmul.mubr.f32.gmra.mrb[0].mxu0 %v1149
    %v1217 = vpop.f32.mrb[0].mxu0
    %v1218 = vadd.f32 %v847, %v1217
    %v1219 = vpop.f32.mrb[0].mxu0
    %1220 = vdwg.mxu0
    %v1221 = vadd.f32 %v1218, %v1104
    %v1222 = vxor.u32 %v1221, 2147483648
    %v1223 = vmul.f32 %v1222, 1.442695
    %v1224 = vpow.pop %v1223
    %v1225 = vadd.f32 %v1224, 1.0
    %v1226 = vrcp.pop %v1225
    %v1227 = vmul.f32 1.0, %v1226
    %v1228 = vadd.f32 %v1104, %v937
    %1230 = vrot.lane.b32.xlu0 %v1228, 64
    %v1231 = vpop.permute.xlu0 %1230
    %v1233 = vmul.f32 %v1227, %v1231
    %1235 = vrot.lane.b32.xlu0 %v1233, 64
    %v1236 = vpop.permute.xlu0 %1235
    %v1238 = vadd.f32 %v1218, %v1236
    %v1239 = vtanh.pop %v1238
    %v1240 = vsub.f32 %v961, %v1239
    %1242 = vrot.lane.b32.xlu0 %v1240, 96
    %v1243 = vpop.permute.xlu0 %1242
    %v1245 = vmul.f32 %v1227, %v1243
    %1247 = vrot.lane.b32.xlu0 %v1245, 32
    %v1248 = vpop.permute.xlu0 %1247
    %v1250 = vadd.f32 %v1239, %v1248
    %1251 = vmatprep.subr.mxu0 0.0
    %1252 = vmatpush1.msra.mxu0 %v51
    %1253 = vmatprep.subr.mxu0 0.0
    %1254 = vmatpush1.msra.mxu0 %v52
    %1255 = vmatprep.subr.mxu0 0.0
    %1256 = vmatpush1.msra.mxu0 %v53
    %1257 = vmatprep.subr.mxu0 0.0
    %1258 = vmatpush1.msra.mxu0 %v54
    %1259 = vmatprep.subr.mxu0 0.0
    %1260 = vmatpush1.msra.mxu0 0.0
    %1261 = vmatprep.subr.mxu0 0.0
    %1262 = vmatpush1.msra.mxu0 0.0
    %1263 = vmatprep.subr.mxu0 0.0
    %1264 = vmatpush1.msra.mxu0 0.0
    %1265 = vmatprep.subr.mxu0 0.0
    %1266 = vmatpush1.msra.mxu0 0.0
    %1267 = vmatprep.subr.mxu0 0.0
    %1268 = vmatpush1.msra.mxu0 0.0
    %1269 = vmatprep.subr.mxu0 0.0
    %1270 = vmatpush1.msra.mxu0 0.0
    %1271 = vmatprep.subr.mxu0 0.0
    %1272 = vmatpush1.msra.mxu0 0.0
    %1273 = vmatprep.subr.mxu0 0.0
    %1274 = vmatpush1.msra.mxu0 0.0
    %1275 = vmatprep.subr.mxu0 0.0
    %1276 = vmatpush1.msra.mxu0 0.0
    %1277 = vmatprep.subr.mxu0 0.0
    %1278 = vmatpush1.msra.mxu0 0.0
    %1279 = vmatprep.subr.mxu0 0.0
    %1280 = vmatpush1.msra.mxu0 0.0
    %1281 = vmatprep.subr.mxu0 0.0
    %1282 = vmatpush1.msra.mxu0 0.0
    %1283 = vmatprep.subr.mxu0 0.0
    %1284 = vmatpush1.msra.mxu0 0.0
    %1285 = vmatprep.subr.mxu0 0.0
    %1286 = vmatpush1.msra.mxu0 0.0
    %1287 = vmatprep.subr.mxu0 0.0
    %1288 = vmatpush1.msra.mxu0 0.0
    %1289 = vmatprep.subr.mxu0 0.0
    %1290 = vmatpush1.msra.mxu0 0.0
    %1291 = vmatprep.subr.mxu0 0.0
    %1292 = vmatpush1.msra.mxu0 0.0
    %1293 = vmatprep.subr.mxu0 0.0
    %1294 = vmatpush1.msra.mxu0 0.0
    %1295 = vmatprep.subr.mxu0 0.0
    %1296 = vmatpush1.msra.mxu0 0.0
    %1297 = vmatprep.subr.mxu0 0.0
    %1298 = vmatpush1.msra.mxu0 0.0
    %1299 = vmatprep.subr.mxu0 0.0
    %1300 = vmatpush1.msra.mxu0 0.0
    %1301 = vmatprep.subr.mxu0 0.0
    %1302 = vmatpush1.msra.mxu0 0.0
    %1303 = vmatprep.subr.mxu0 0.0
    %1304 = vmatpush1.msra.mxu0 0.0
    %1305 = vmatprep.subr.mxu0 0.0
    %1306 = vmatpush1.msra.mxu0 0.0
    %1307 = vmatprep.subr.mxu0 0.0
    %1308 = vmatpush1.msra.mxu0 0.0
    %1309 = vmatprep.subr.mxu0 0.0
    %1310 = vmatpush1.msra.mxu0 0.0
    %1311 = vmatprep.subr.mxu0 0.0
    %1312 = vmatpush1.msra.mxu0 0.0
    %1313 = vmatprep.subr.mxu0 0.0
    %1314 = vmatpush1.msra.mxu0 0.0
    %1315 = vmatprep.mubr.f32.mxu0 0.0
    %1316 = vmatmul.mubr.f32.gmra.mrb[0].mxu0 %v1149
    %v1317 = vpop.f32.mrb[0].mxu0
    %v1318 = vadd.f32 0.0, %v1317
    %v1319 = vpop.f32.mrb[0].mxu0
    %1320 = vdwg.mxu0
    %1322 = vrot.lane.b32.xlu0 %v1250, 64
    %v1323 = vpop.permute.xlu0 %1322
    %v1324 = vsel %vm653, %v1323, 0
    %1326 = vmatprep.subr.mxu0 0.0
    %1327 = vmatpush1.msra.mxu0 %v55
    %1328 = vmatprep.subr.mxu0 0.0
    %1329 = vmatpush1.msra.mxu0 %v56
    %1330 = vmatprep.subr.mxu0 0.0
    %1331 = vmatpush1.msra.mxu0 %v57
    %1332 = vmatprep.subr.mxu0 0.0
    %1333 = vmatpush1.msra.mxu0 %v58
    %1334 = vmatprep.subr.mxu0 0.0
    %1335 = vmatpush1.msra.mxu0 0.0
    %1336 = vmatprep.subr.mxu0 0.0
    %1337 = vmatpush1.msra.mxu0 0.0
    %1338 = vmatprep.subr.mxu0 0.0
    %1339 = vmatpush1.msra.mxu0 0.0
    %1340 = vmatprep.subr.mxu0 0.0
    %1341 = vmatpush1.msra.mxu0 0.0
    %1342 = vmatprep.subr.mxu0 0.0
    %1343 = vmatpush1.msra.mxu0 0.0
    %1344 = vmatprep.subr.mxu0 0.0
    %1345 = vmatpush1.msra.mxu0 0.0
    %1346 = vmatprep.subr.mxu0 0.0
    %1347 = vmatpush1.msra.mxu0 0.0
    %1348 = vmatprep.subr.mxu0 0.0
    %1349 = vmatpush1.msra.mxu0 0.0
    %1350 = vmatprep.subr.mxu0 0.0
    %1351 = vmatpush1.msra.mxu0 0.0
    %1352 = vmatprep.subr.mxu0 0.0
    %1353 = vmatpush1.msra.mxu0 0.0
    %1354 = vmatprep.subr.mxu0 0.0
    %1355 = vmatpush1.msra.mxu0 0.0
    %1356 = vmatprep.subr.mxu0 0.0
    %1357 = vmatpush1.msra.mxu0 0.0
    %1358 = vmatprep.subr.mxu0 0.0
    %1359 = vmatpush1.msra.mxu0 0.0
    %1360 = vmatprep.subr.mxu0 0.0
    %1361 = vmatpush1.msra.mxu0 0.0
    %1362 = vmatprep.subr.mxu0 0.0
    %1363 = vmatpush1.msra.mxu0 0.0
    %1364 = vmatprep.subr.mxu0 0.0
    %1365 = vmatpush1.msra.mxu0 0.0
    %1366 = vmatprep.subr.mxu0 0.0
    %1367 = vmatpush1.msra.mxu0 0.0
    %1368 = vmatprep.subr.mxu0 0.0
    %1369 = vmatpush1.msra.mxu0 0.0
    %1370 = vmatprep.subr.mxu0 0.0
    %1371 = vmatpush1.msra.mxu0 0.0
    %1372 = vmatprep.subr.mxu0 0.0
    %1373 = vmatpush1.msra.mxu0 0.0
    %1374 = vmatprep.subr.mxu0 0.0
    %1375 = vmatpush1.msra.mxu0 0.0
    %1376 = vmatprep.subr.mxu0 0.0
    %1377 = vmatpush1.msra.mxu0 0.0
    %1378 = vmatprep.subr.mxu0 0.0
    %1379 = vmatpush1.msra.mxu0 0.0
    %1380 = vmatprep.subr.mxu0 0.0
    %1381 = vmatpush1.msra.mxu0 0.0
    %1382 = vmatprep.subr.mxu0 0.0
    %1383 = vmatpush1.msra.mxu0 0.0
    %1384 = vmatprep.subr.mxu0 0.0
    %1385 = vmatpush1.msra.mxu0 0.0
    %1386 = vmatprep.subr.mxu0 0.0
    %1387 = vmatpush1.msra.mxu0 0.0
    %1388 = vmatprep.subr.mxu0 0.0
    %1389 = vmatpush1.msra.mxu0 0.0
    %1390 = vmatprep.mubr.f32.mxu0 0.0
    %1391 = vmatmul.mubr.f32.gmra.mrb[0].mxu0 %v1324
    %v1392 = vpop.f32.mrb[0].mxu0
    %v1393 = vadd.f32 0.0, %v1392
    %v1394 = vpop.f32.mrb[0].mxu0
    %1395 = vdwg.mxu0
    %v1397 = vrot.slane %v1318, 4
    %v1399 = vadd.f32 %v648, %v1397
    %v1400 = vxor.u32 %v1399, 2147483648
    %v1401 = vmul.f32 %v1400, 1.442695
    %v1402 = vpow.pop %v1401
    %v1403 = vadd.f32 %v1402, 1.0
    %v1404 = vrcp.pop %v1403
    %v1405 = vmul.f32 1.0, %v1404
    %v1406 = vadd.f32 %v1318, %v814
    %v1408 = vrot.slane %v1406, 4
    %1409 = vrot.lane.b32.xlu0 %v1408, 64
    %v1410 = vpop.permute.xlu0 %1409
    %v1412 = vmul.f32 %v1405, %v1410
    %1414 = vrot.lane.b32.xlu0 %v1412, 64
    %v1415 = vpop.permute.xlu0 %1414
    %v1417 = vadd.f32 %v648, %v1415
    %v1418 = vtanh.pop %v1417
    %v1420 = vrot.slane %v1418, 2
    %v1422 = vsub.f32 %v1144, %v1420
    %v1424 = vrot.slane %v1422, 6
    %1425 = vrot.lane.b32.xlu0 %v1424, 96
    %v1426 = vpop.permute.xlu0 %1425
    %v1428 = vmul.f32 %v1405, %v1426
    %1430 = vrot.lane.b32.xlu0 %v1428, 32
    %v1431 = vpop.permute.xlu0 %1430
    %v1433 = vadd.f32 %v1418, %v1431
    %v1435 = vrot.slane %v1433, 4
    %1436 = vrot.lane.b32.xlu0 %v1435, 64
    %v1437 = vpop.permute.xlu0 %1436
    %v1438 = vsel %vm653, %v1437, 0
    %1440 = vmatprep.subr.mxu0 0.0
    %1441 = vmatpush1.msra.mxu0 %v45
    %1442 = vmatprep.subr.mxu0 0.0
    %1443 = vmatpush1.msra.mxu0 %v46
    %1444 = vmatprep.subr.mxu0 0.0
    %1445 = vmatpush1.msra.mxu0 %v47
    %1446 = vmatprep.subr.mxu0 0.0
    %1447 = vmatpush1.msra.mxu0 %v48
    %1448 = vmatprep.subr.mxu0 0.0
    %1449 = vmatpush1.msra.mxu0 0.0
    %1450 = vmatprep.subr.mxu0 0.0
    %1451 = vmatpush1.msra.mxu0 0.0
    %1452 = vmatprep.subr.mxu0 0.0
    %1453 = vmatpush1.msra.mxu0 0.0
    %1454 = vmatprep.subr.mxu0 0.0
    %1455 = vmatpush1.msra.mxu0 0.0
    %1456 = vmatprep.subr.mxu0 0.0
    %1457 = vmatpush1.msra.mxu0 0.0
    %1458 = vmatprep.subr.mxu0 0.0
    %1459 = vmatpush1.msra.mxu0 0.0
    %1460 = vmatprep.subr.mxu0 0.0
    %1461 = vmatpush1.msra.mxu0 0.0
    %1462 = vmatprep.subr.mxu0 0.0
    %1463 = vmatpush1.msra.mxu0 0.0
    %1464 = vmatprep.subr.mxu0 0.0
    %1465 = vmatpush1.msra.mxu0 0.0
    %1466 = vmatprep.subr.mxu0 0.0
    %1467 = vmatpush1.msra.mxu0 0.0
    %1468 = vmatprep.subr.mxu0 0.0
    %1469 = vmatpush1.msra.mxu0 0.0
    %1470 = vmatprep.subr.mxu0 0.0
    %1471 = vmatpush1.msra.mxu0 0.0
    %1472 = vmatprep.subr.mxu0 0.0
    %1473 = vmatpush1.msra.mxu0 0.0
    %1474 = vmatprep.subr.mxu0 0.0
    %1475 = vmatpush1.msra.mxu0 0.0
    %1476 = vmatprep.subr.mxu0 0.0
    %1477 = vmatpush1.msra.mxu0 0.0
    %1478 = vmatprep.subr.mxu0 0.0
    %1479 = vmatpush1.msra.mxu0 0.0
    %1480 = vmatprep.subr.mxu0 0.0
    %1481 = vmatpush1.msra.mxu0 0.0
    %1482 = vmatprep.subr.mxu0 0.0
    %1483 = vmatpush1.msra.mxu0 0.0
    %1484 = vmatprep.subr.mxu0 0.0
    %1485 = vmatpush1.msra.mxu0 0.0
    %1486 = vmatprep.subr.mxu0 0.0
    %1487 = vmatpush1.msra.mxu0 0.0
    %1488 = vmatprep.subr.mxu0 0.0
    %1489 = vmatpush1.msra.mxu0 0.0
    %1490 = vmatprep.subr.mxu0 0.0
    %1491 = vmatpush1.msra.mxu0 0.0
    %1492 = vmatprep.subr.mxu0 0.0
    %1493 = vmatpush1.msra.mxu0 0.0
    %1494 = vmatprep.subr.mxu0 0.0
    %1495 = vmatpush1.msra.mxu0 0.0
    %1496 = vmatprep.subr.mxu0 0.0
    %1497 = vmatpush1.msra.mxu0 0.0
    %1498 = vmatprep.subr.mxu0 0.0
    %1499 = vmatpush1.msra.mxu0 0.0
    %1500 = vmatprep.subr.mxu0 0.0
    %1501 = vmatpush1.msra.mxu0 0.0
    %1502 = vmatprep.subr.mxu0 0.0
    %1503 = vmatpush1.msra.mxu0 0.0
    %1504 = vmatprep.mubr.f32.mxu0 0.0
    %1505 = vmatmul.mubr.f32.gmra.mrb[0].mxu0 %v1438
    %v1506 = vpop.f32.mrb[0].mxu0
    %v1507 = vadd.f32 %v847, %v1506
    %v1508 = vpop.f32.mrb[0].mxu0
    %1509 = vdwg.mxu0
    %v1510 = vadd.f32 %v1507, %v1393
    %v1511 = vxor.u32 %v1510, 2147483648
    %v1512 = vmul.f32 %v1511, 1.442695
    %v1513 = vpow.pop %v1512
    %v1514 = vadd.f32 %v1513, 1.0
    %v1515 = vrcp.pop %v1514
    %v1516 = vmul.f32 1.0, %v1515
    %v1517 = vadd.f32 %v1393, %v937
    %1519 = vrot.lane.b32.xlu0 %v1517, 64
    %v1520 = vpop.permute.xlu0 %1519
    %v1522 = vmul.f32 %v1516, %v1520
    %1524 = vrot.lane.b32.xlu0 %v1522, 64
    %v1525 = vpop.permute.xlu0 %1524
    %v1527 = vadd.f32 %v1507, %v1525
    %v1528 = vtanh.pop %v1527
    %v1529 = vsub.f32 %v1250, %v1528
    %1531 = vrot.lane.b32.xlu0 %v1529, 96
    %v1532 = vpop.permute.xlu0 %1531
    %v1534 = vmul.f32 %v1516, %v1532
    %1536 = vrot.lane.b32.xlu0 %v1534, 32
    %v1537 = vpop.permute.xlu0 %1536
    %v1539 = vadd.f32 %v1528, %v1537
    %1540 = vmatprep.subr.mxu0 0.0
    %1541 = vmatpush1.msra.mxu0 %v51
    %1542 = vmatprep.subr.mxu0 0.0
    %1543 = vmatpush1.msra.mxu0 %v52
    %1544 = vmatprep.subr.mxu0 0.0
    %1545 = vmatpush1.msra.mxu0 %v53
    %1546 = vmatprep.subr.mxu0 0.0
    %1547 = vmatpush1.msra.mxu0 %v54
    %1548 = vmatprep.subr.mxu0 0.0
    %1549 = vmatpush1.msra.mxu0 0.0
    %1550 = vmatprep.subr.mxu0 0.0
    %1551 = vmatpush1.msra.mxu0 0.0
    %1552 = vmatprep.subr.mxu0 0.0
    %1553 = vmatpush1.msra.mxu0 0.0
    %1554 = vmatprep.subr.mxu0 0.0
    %1555 = vmatpush1.msra.mxu0 0.0
    %1556 = vmatprep.subr.mxu0 0.0
    %1557 = vmatpush1.msra.mxu0 0.0
    %1558 = vmatprep.subr.mxu0 0.0
    %1559 = vmatpush1.msra.mxu0 0.0
    %1560 = vmatprep.subr.mxu0 0.0
    %1561 = vmatpush1.msra.mxu0 0.0
    %1562 = vmatprep.subr.mxu0 0.0
    %1563 = vmatpush1.msra.mxu0 0.0
    %1564 = vmatprep.subr.mxu0 0.0
    %1565 = vmatpush1.msra.mxu0 0.0
    %1566 = vmatprep.subr.mxu0 0.0
    %1567 = vmatpush1.msra.mxu0 0.0
    %1568 = vmatprep.subr.mxu0 0.0
    %1569 = vmatpush1.msra.mxu0 0.0
    %1570 = vmatprep.subr.mxu0 0.0
    %1571 = vmatpush1.msra.mxu0 0.0
    %1572 = vmatprep.subr.mxu0 0.0
    %1573 = vmatpush1.msra.mxu0 0.0
    %1574 = vmatprep.subr.mxu0 0.0
    %1575 = vmatpush1.msra.mxu0 0.0
    %1576 = vmatprep.subr.mxu0 0.0
    %1577 = vmatpush1.msra.mxu0 0.0
    %1578 = vmatprep.subr.mxu0 0.0
    %1579 = vmatpush1.msra.mxu0 0.0
    %1580 = vmatprep.subr.mxu0 0.0
    %1581 = vmatpush1.msra.mxu0 0.0
    %1582 = vmatprep.subr.mxu0 0.0
    %1583 = vmatpush1.msra.mxu0 0.0
    %1584 = vmatprep.subr.mxu0 0.0
    %1585 = vmatpush1.msra.mxu0 0.0
    %1586 = vmatprep.subr.mxu0 0.0
    %1587 = vmatpush1.msra.mxu0 0.0
    %1588 = vmatprep.subr.mxu0 0.0
    %1589 = vmatpush1.msra.mxu0 0.0
    %1590 = vmatprep.subr.mxu0 0.0
    %1591 = vmatpush1.msra.mxu0 0.0
    %1592 = vmatprep.subr.mxu0 0.0
    %1593 = vmatpush1.msra.mxu0 0.0
    %1594 = vmatprep.subr.mxu0 0.0
    %1595 = vmatpush1.msra.mxu0 0.0
    %1596 = vmatprep.subr.mxu0 0.0
    %1597 = vmatpush1.msra.mxu0 0.0
    %1598 = vmatprep.subr.mxu0 0.0
    %1599 = vmatpush1.msra.mxu0 0.0
    %1600 = vmatprep.subr.mxu0 0.0
    %1601 = vmatpush1.msra.mxu0 0.0
    %1602 = vmatprep.subr.mxu0 0.0
    %1603 = vmatpush1.msra.mxu0 0.0
    %1604 = vmatprep.mubr.f32.mxu0 0.0
    %1605 = vmatmul.mubr.f32.gmra.mrb[0].mxu0 %v1438
    %v1606 = vpop.f32.mrb[0].mxu0
    %v1607 = vadd.f32 0.0, %v1606
    %v1608 = vpop.f32.mrb[0].mxu0
    %1609 = vdwg.mxu0
    %1611 = vrot.lane.b32.xlu0 %v1539, 64
    %v1612 = vpop.permute.xlu0 %1611
    %v1613 = vsel %vm653, %v1612, 0
    %1615 = vmatprep.subr.mxu0 0.0
    %1616 = vmatpush1.msra.mxu0 %v55
    %1617 = vmatprep.subr.mxu0 0.0
    %1618 = vmatpush1.msra.mxu0 %v56
    %1619 = vmatprep.subr.mxu0 0.0
    %1620 = vmatpush1.msra.mxu0 %v57
    %1621 = vmatprep.subr.mxu0 0.0
    %1622 = vmatpush1.msra.mxu0 %v58
    %1623 = vmatprep.subr.mxu0 0.0
    %1624 = vmatpush1.msra.mxu0 0.0
    %1625 = vmatprep.subr.mxu0 0.0
    %1626 = vmatpush1.msra.mxu0 0.0
    %1627 = vmatprep.subr.mxu0 0.0
    %1628 = vmatpush1.msra.mxu0 0.0
    %1629 = vmatprep.subr.mxu0 0.0
    %1630 = vmatpush1.msra.mxu0 0.0
    %1631 = vmatprep.subr.mxu0 0.0
    %1632 = vmatpush1.msra.mxu0 0.0
    %1633 = vmatprep.subr.mxu0 0.0
    %1634 = vmatpush1.msra.mxu0 0.0
    %1635 = vmatprep.subr.mxu0 0.0
    %1636 = vmatpush1.msra.mxu0 0.0
    %1637 = vmatprep.subr.mxu0 0.0
    %1638 = vmatpush1.msra.mxu0 0.0
    %1639 = vmatprep.subr.mxu0 0.0
    %1640 = vmatpush1.msra.mxu0 0.0
    %1641 = vmatprep.subr.mxu0 0.0
    %1642 = vmatpush1.msra.mxu0 0.0
    %1643 = vmatprep.subr.mxu0 0.0
    %1644 = vmatpush1.msra.mxu0 0.0
    %1645 = vmatprep.subr.mxu0 0.0
    %1646 = vmatpush1.msra.mxu0 0.0
    %1647 = vmatprep.subr.mxu0 0.0
    %1648 = vmatpush1.msra.mxu0 0.0
    %1649 = vmatprep.subr.mxu0 0.0
    %1650 = vmatpush1.msra.mxu0 0.0
    %1651 = vmatprep.subr.mxu0 0.0
    %1652 = vmatpush1.msra.mxu0 0.0
    %1653 = vmatprep.subr.mxu0 0.0
    %1654 = vmatpush1.msra.mxu0 0.0
    %1655 = vmatprep.subr.mxu0 0.0
    %1656 = vmatpush1.msra.mxu0 0.0
    %1657 = vmatprep.subr.mxu0 0.0
    %1658 = vmatpush1.msra.mxu0 0.0
    %1659 = vmatprep.subr.mxu0 0.0
    %1660 = vmatpush1.msra.mxu0 0.0
    %1661 = vmatprep.subr.mxu0 0.0
    %1662 = vmatpush1.msra.mxu0 0.0
    %1663 = vmatprep.subr.mxu0 0.0
    %1664 = vmatpush1.msra.mxu0 0.0
    %1665 = vmatprep.subr.mxu0 0.0
    %1666 = vmatpush1.msra.mxu0 0.0
    %1667 = vmatprep.subr.mxu0 0.0
    %1668 = vmatpush1.msra.mxu0 0.0
    %1669 = vmatprep.subr.mxu0 0.0
    %1670 = vmatpush1.msra.mxu0 0.0
    %1671 = vmatprep.subr.mxu0 0.0
    %1672 = vmatpush1.msra.mxu0 0.0
    %1673 = vmatprep.subr.mxu0 0.0
    %1674 = vmatpush1.msra.mxu0 0.0
    %1675 = vmatprep.subr.mxu0 0.0
    %1676 = vmatpush1.msra.mxu0 0.0
    %1677 = vmatprep.subr.mxu0 0.0
    %1678 = vmatpush1.msra.mxu0 0.0
    %1679 = vmatprep.mubr.f32.mxu0 0.0
    %1680 = vmatmul.mubr.f32.gmra.mrb[0].mxu0 %v1613
    %v1681 = vpop.f32.mrb[0].mxu0
    %v1682 = vadd.f32 0.0, %v1681
    %v1683 = vpop.f32.mrb[0].mxu0
    %1684 = vdwg.mxu0
    %v1686 = vrot.slane %v1607, 2
    %v1688 = vadd.f32 %v648, %v1686
    %v1689 = vxor.u32 %v1688, 2147483648
    %v1690 = vmul.f32 %v1689, 1.442695
    %v1691 = vpow.pop %v1690
    %v1692 = vadd.f32 %v1691, 1.0
    %v1693 = vrcp.pop %v1692
    %v1694 = vmul.f32 1.0, %v1693
    %v1695 = vadd.f32 %v1607, %v814
    %v1697 = vrot.slane %v1695, 2
    %1698 = vrot.lane.b32.xlu0 %v1697, 64
    %v1699 = vpop.permute.xlu0 %1698
    %v1701 = vmul.f32 %v1694, %v1699
    %1703 = vrot.lane.b32.xlu0 %v1701, 64
    %v1704 = vpop.permute.xlu0 %1703
    %v1706 = vadd.f32 %v648, %v1704
    %v1707 = vtanh.pop %v1706
    %v1709 = vrot.slane %v1707, 2
    %v1711 = vsub.f32 %v1433, %v1709
    %v1713 = vrot.slane %v1711, 6
    %1714 = vrot.lane.b32.xlu0 %v1713, 96
    %v1715 = vpop.permute.xlu0 %1714
    %v1717 = vmul.f32 %v1694, %v1715
    %1719 = vrot.lane.b32.xlu0 %v1717, 32
    %v1720 = vpop.permute.xlu0 %1719
    %v1722 = vadd.f32 %v1707, %v1720
    %v1724 = vrot.slane %v1722, 6
    %1725 = vrot.lane.b32.xlu0 %v1724, 64
    %v1726 = vpop.permute.xlu0 %1725
    %v1727 = vsel %vm653, %v1726, 0
    %1729 = vmatprep.subr.mxu0 0.0
    %1730 = vmatpush1.msra.mxu0 %v45
    %1731 = vmatprep.subr.mxu0 0.0
    %1732 = vmatpush1.msra.mxu0 %v46
    %1733 = vmatprep.subr.mxu0 0.0
    %1734 = vmatpush1.msra.mxu0 %v47
    %1735 = vmatprep.subr.mxu0 0.0
    %1736 = vmatpush1.msra.mxu0 %v48
    %1737 = vmatprep.subr.mxu0 0.0
    %1738 = vmatpush1.msra.mxu0 0.0
    %1739 = vmatprep.subr.mxu0 0.0
    %1740 = vmatpush1.msra.mxu0 0.0
    %1741 = vmatprep.subr.mxu0 0.0
    %1742 = vmatpush1.msra.mxu0 0.0
    %1743 = vmatprep.subr.mxu0 0.0
    %1744 = vmatpush1.msra.mxu0 0.0
    %1745 = vmatprep.subr.mxu0 0.0
    %1746 = vmatpush1.msra.mxu0 0.0
    %1747 = vmatprep.subr.mxu0 0.0
    %1748 = vmatpush1.msra.mxu0 0.0
    %1749 = vmatprep.subr.mxu0 0.0
    %1750 = vmatpush1.msra.mxu0 0.0
    %1751 = vmatprep.subr.mxu0 0.0
    %1752 = vmatpush1.msra.mxu0 0.0
    %1753 = vmatprep.subr.mxu0 0.0
    %1754 = vmatpush1.msra.mxu0 0.0
    %1755 = vmatprep.subr.mxu0 0.0
    %1756 = vmatpush1.msra.mxu0 0.0
    %1757 = vmatprep.subr.mxu0 0.0
    %1758 = vmatpush1.msra.mxu0 0.0
    %1759 = vmatprep.subr.mxu0 0.0
    %1760 = vmatpush1.msra.mxu0 0.0
    %1761 = vmatprep.subr.mxu0 0.0
    %1762 = vmatpush1.msra.mxu0 0.0
    %1763 = vmatprep.subr.mxu0 0.0
    %1764 = vmatpush1.msra.mxu0 0.0
    %1765 = vmatprep.subr.mxu0 0.0
    %1766 = vmatpush1.msra.mxu0 0.0
    %1767 = vmatprep.subr.mxu0 0.0
    %1768 = vmatpush1.msra.mxu0 0.0
    %1769 = vmatprep.subr.mxu0 0.0
    %1770 = vmatpush1.msra.mxu0 0.0
    %1771 = vmatprep.subr.mxu0 0.0
    %1772 = vmatpush1.msra.mxu0 0.0
    %1773 = vmatprep.subr.mxu0 0.0
    %1774 = vmatpush1.msra.mxu0 0.0
    %1775 = vmatprep.subr.mxu0 0.0
    %1776 = vmatpush1.msra.mxu0 0.0
    %1777 = vmatprep.subr.mxu0 0.0
    %1778 = vmatpush1.msra.mxu0 0.0
    %1779 = vmatprep.subr.mxu0 0.0
    %1780 = vmatpush1.msra.mxu0 0.0
    %1781 = vmatprep.subr.mxu0 0.0
    %1782 = vmatpush1.msra.mxu0 0.0
    %1783 = vmatprep.subr.mxu0 0.0
    %1784 = vmatpush1.msra.mxu0 0.0
    %1785 = vmatprep.subr.mxu0 0.0
    %1786 = vmatpush1.msra.mxu0 0.0
    %1787 = vmatprep.subr.mxu0 0.0
    %1788 = vmatpush1.msra.mxu0 0.0
    %1789 = vmatprep.subr.mxu0 0.0
    %1790 = vmatpush1.msra.mxu0 0.0
    %1791 = vmatprep.subr.mxu0 0.0
    %1792 = vmatpush1.msra.mxu0 0.0
    %1793 = vmatprep.mubr.f32.mxu0 0.0
    %1794 = vmatmul.mubr.f32.gmra.mrb[0].mxu0 %v1727
    %v1795 = vpop.f32.mrb[0].mxu0
    %v1796 = vadd.f32 %v847, %v1795
    %v1797 = vpop.f32.mrb[0].mxu0
    %1798 = vdwg.mxu0
    %v1799 = vadd.f32 %v1796, %v1682
    %v1800 = vxor.u32 %v1799, 2147483648
    %v1801 = vmul.f32 %v1800, 1.442695
    %v1802 = vpow.pop %v1801
    %v1803 = vadd.f32 %v1802, 1.0
    %v1804 = vrcp.pop %v1803
    %v1805 = vmul.f32 1.0, %v1804
    %v1806 = vadd.f32 %v1682, %v937
    %1808 = vrot.lane.b32.xlu0 %v1806, 64
    %v1809 = vpop.permute.xlu0 %1808
    %v1811 = vmul.f32 %v1805, %v1809
    %1813 = vrot.lane.b32.xlu0 %v1811, 64
    %v1814 = vpop.permute.xlu0 %1813
    %v1816 = vadd.f32 %v1796, %v1814
    %v1817 = vtanh.pop %v1816
    %v1818 = vsub.f32 %v1539, %v1817
    %1820 = vrot.lane.b32.xlu0 %v1818, 96
    %v1821 = vpop.permute.xlu0 %1820
    %v1823 = vmul.f32 %v1805, %v1821
    %1825 = vrot.lane.b32.xlu0 %v1823, 32
    %v1826 = vpop.permute.xlu0 %1825
    %v1828 = vadd.f32 %v1817, %v1826
    %v1829 = vrot.slane %v1250, 6
    %v1831 = vrot.slane %v1539, 4
    %v1834 = vrot.slane %v1828, 2
    %vm1836 = vcmask 1041408
    %v1837 = vsel %vm1836, %v961, %v1829
    %v1838 = vsel %vm268, %v1837, %v1831
    %vm1839 = vcmask 1045504
    %v1840 = vsel %vm1839, %v1838, %v1834
    %1842 = vrot.lane.b32.xlu0 %v1840, 64
    %v1843 = vpop.permute.xlu0 %1842
    %s1845 = scalar_lea.vmem %s9, %s646
    %1846 = vst.msk [vmem:[%s1845] sm:$0xff] %vm653, %v1843
  $region42: #{network_forward.2} parent=0 // loop_footer
    %s643 = sadd.s32 1, %s639
  $region43: #{network_forward.2} parent=0 // loop_footer_branch
    %638 = sbr.rel target = $region39
  $region44: #{network_forward.2} parent=0 // loop_exit
    _
  // Predicated region
  $region45: #{network_forward.2} parent=0 // pred_check
    _
  $region46: #{network_forward.2} parent=0 // pred_check_branch
    %1848 = sbr.rel (0) target = $region48
  $region47: #{network_forward.2} parent=0 // pred_region
    _
  $region48: #{network_forward.2} parent=0 // pred_fallthru
    _
  // Predicated region
  $region49: #{network_forward.2} parent=0 // pred_check
    _
  $region50: #{network_forward.2} parent=0 // pred_check_branch
    %1850 = sbr.rel (0) target = $region52
  $region51: #{network_forward.2} parent=0 // pred_region
    _
  $region52: #{network_forward.2} parent=0 // pred_fallthru
    _

// kernel: network_forward.3
$region0: #{network_forward.3}
  #allocation0 [shape = 'u32[]', space=smem, size = 0x4, offset = 0x4, fixed_abs, tag = 'smem constant byte address 0x4 - core index']
  #allocation1 [shape = 'u32[144,128]{1,0:T(1,128)}', space=vmem, size = 0x12000, scoped, tag = 'internal scratch']
  %s0 = inlined_call_operand.vmem [shape: f32[400,32], index: 0, kind: input, shape index: {}]
  %s1 = inlined_call_operand.vmem [shape: f32[400,8], index: 1, kind: input, shape index: {}]
  %s2 = inlined_call_operand.vmem [shape: f32[32,200], index: 2, kind: input, shape index: {}]
  %s3 = inlined_call_operand.vmem [shape: f32[1,200], index: 3, kind: input, shape index: {}]
  %s4 = inlined_call_operand.vmem [shape: f32[200,200], index: 4, kind: input, shape index: {}]
  %s5 = inlined_call_operand.vmem [shape: f32[1,200], index: 5, kind: input, shape index: {}]
  %s6 = inlined_call_operand.vmem [shape: f32[200,200], index: 6, kind: input, shape index: {}]
  %s7 = inlined_call_operand.vmem [shape: f32[1,200], index: 7, kind: input, shape index: {}]
  %s8 = inlined_call_operand.vmem [shape: f32[200,200], index: 8, kind: input, shape index: {}]
  %s9 = inlined_call_operand.vmem [shape: f32[1,200], index: 9, kind: input, shape index: {}]
  %s10 = inlined_call_operand.vmem [shape: f32[200,16], index: 10, kind: input, shape index: {}]
  %s11 = inlined_call_operand.vmem [shape: f32[1,16], index: 11, kind: input, shape index: {}]
  %s12 = inlined_call_operand.vmem [shape: f32[400,16], index: 12, kind: output, shape index: {}]
  %s13 = sld [smem:[#allocation0]]
  $region81: #{network_forward.3} parent=0
    _
  %s15 = ssub.s32 1, %s13
  %s16 = scalar_select 0, %s15, %s13
  loop: start=0, step=1, limit=4
  $region2: #{network_forward.3} parent=0 // loop_pre_header
    _
  $region3: #{network_forward.3} parent=0 // loop_header
    %s18 = sphi 0, %s22
    %p19 = scmp.ge.s32.totalorder %s18, 4
    %s28 = sphi 0, %s30
    %s31 = sphi 0, %s28
    %s32 = sphi 0, %s31
    %s48 = sphi 0, %s32
    %s54 = sphi 0, %s56
    %s57 = sphi 0, %s54
    %s58 = sphi 0, %s57
    %s74 = sphi 0, %s58
    %s78 = sphi 0, %s78
    %s80 = sphi 0, %s78
    %s81 = sphi 0, %s80
    %s95 = sphi 0, %s81
    %s99 = sphi 0, %s99
    %s101 = sphi 0, %s99
    %s102 = sphi 0, %s101
    %s116 = sphi 0, %s102
    %s120 = sphi 0, %s120
    %s122 = sphi 0, %s120
    %s123 = sphi 0, %s122
    %s137 = sphi 0, %s123
    %s141 = sphi 0, %s141
    %s143 = sphi 0, %s141
    %s144 = sphi 0, %s143
    %s158 = sphi 0, %s144
    %s162 = sphi 0, %s162
    %s164 = sphi 0, %s162
    %s165 = sphi 0, %s164
    %s179 = sphi 0, %s165
    %s183 = sphi 0, %s183
    %s185 = sphi 0, %s183
    %s186 = sphi 0, %s185
    %s200 = sphi 0, %s186
    %s204 = sphi 0, %s204
    %s206 = sphi 0, %s204
    %s207 = sphi 0, %s206
    %s221 = sphi 0, %s207
    %s225 = sphi 0, %s225
    %s227 = sphi 0, %s225
    %s228 = sphi 0, %s227
    %s242 = sphi 0, %s228
    %s246 = sphi 0, %s246
    %s248 = sphi 0, %s246
    %s249 = sphi 0, %s248
    %s263 = sphi 0, %s249
    %s267 = sphi 0, %s267
    %s269 = sphi 0, %s267
    %s270 = sphi 0, %s269
    %s284 = sphi 0, %s270
    %s290 = sphi 0, %s292
    %s293 = sphi 0, %s290
    %s294 = sphi 0, %s293
    %s310 = sphi 0, %s294
  $region4: #{network_forward.3} parent=0 // loop_header_branch
    %21 = sbr.rel (%p19) target = $region8
  $region5: #{network_forward.3} parent=0 // loop_body
    %s23 = ssub.s32 %s18, 1
    %s24 = ssub.s32 %s18, 2
    %s25 = sadd.s32 %s18, 1
    %s26 = ssub.s32 %s18, %s25
    %p27 = scmp.eq.s32.totalorder %s26, 0
    %s29 = sadd.s32 %s28, 1
    %s30 = scalar_select %p27, %s28, %s29
    %p33 = pneg %p27
    %p34 = scmp.eq.s32.totalorder %s18, 1
    %p35 = por %p33, %p34
    %p36 = scmp.ne.s32.totalorder %s28, %s31
    %p37 = scmp.eq.s32.totalorder %s18, 0
    %p38 = por %p36, %p37
    %p39 = scmp.ne.s32.totalorder %s28, %s31
    %p40 = scmp.eq.s32.totalorder %s23, 1
    %p41 = por %p39, %p40
    %p42 = scmp.ne.s32.totalorder %s31, %s32
    %p43 = scmp.eq.s32.totalorder %s23, 0
    %p44 = por %p42, %p43
    %p45 = scmp.ne.s32.totalorder %s31, %s32
    %p46 = scmp.eq.s32.totalorder %s24, 1
    %p47 = por %p45, %p46
    %p49 = scmp.ne.s32.totalorder %s32, %s48
    %p50 = scmp.eq.s32.totalorder %s24, 0
    %p51 = por %p49, %p50
    %s52 = ssub.s32 %s18, %s25
    %p53 = scmp.eq.s32.totalorder %s52, 0
    %s55 = sadd.s32 %s54, 1
    %s56 = scalar_select %p53, %s54, %s55
    %p59 = pneg %p53
    %p60 = scmp.eq.s32.totalorder %s18, 1
    %p61 = por %p59, %p60
    %p62 = scmp.ne.s32.totalorder %s54, %s57
    %p63 = scmp.eq.s32.totalorder %s18, 0
    %p64 = por %p62, %p63
    %p65 = scmp.ne.s32.totalorder %s54, %s57
    %p66 = scmp.eq.s32.totalorder %s23, 1
    %p67 = por %p65, %p66
    %p68 = scmp.ne.s32.totalorder %s57, %s58
    %p69 = scmp.eq.s32.totalorder %s23, 0
    %p70 = por %p68, %p69
    %p71 = scmp.ne.s32.totalorder %s57, %s58
    %p72 = scmp.eq.s32.totalorder %s24, 1
    %p73 = por %p71, %p72
    %p75 = scmp.ne.s32.totalorder %s58, %s74
    %p76 = scmp.eq.s32.totalorder %s24, 0
    %p77 = por %p75, %p76
    %s79 = sadd.s32 %s78, 1
    %p82 = scmp.eq.s32.totalorder %s18, 1
    %p83 = scmp.ne.s32.totalorder %s78, %s80
    %p84 = scmp.eq.s32.totalorder %s18, 0
    %p85 = por %p83, %p84
    %p86 = scmp.ne.s32.totalorder %s78, %s80
    %p87 = scmp.eq.s32.totalorder %s23, 1
    %p88 = por %p86, %p87
    %p89 = scmp.ne.s32.totalorder %s80, %s81
    %p90 = scmp.eq.s32.totalorder %s23, 0
    %p91 = por %p89, %p90
    %p92 = scmp.ne.s32.totalorder %s80, %s81
    %p93 = scmp.eq.s32.totalorder %s24, 1
    %p94 = por %p92, %p93
    %p96 = scmp.ne.s32.totalorder %s81, %s95
    %p97 = scmp.eq.s32.totalorder %s24, 0
    %p98 = por %p96, %p97
    %s100 = sadd.s32 %s99, 1
    %p103 = scmp.eq.s32.totalorder %s18, 1
    %p104 = scmp.ne.s32.totalorder %s99, %s101
    %p105 = scmp.eq.s32.totalorder %s18, 0
    %p106 = por %p104, %p105
    %p107 = scmp.ne.s32.totalorder %s99, %s101
    %p108 = scmp.eq.s32.totalorder %s23, 1
    %p109 = por %p107, %p108
    %p110 = scmp.ne.s32.totalorder %s101, %s102
    %p111 = scmp.eq.s32.totalorder %s23, 0
    %p112 = por %p110, %p111
    %p113 = scmp.ne.s32.totalorder %s101, %s102
    %p114 = scmp.eq.s32.totalorder %s24, 1
    %p115 = por %p113, %p114
    %p117 = scmp.ne.s32.totalorder %s102, %s116
    %p118 = scmp.eq.s32.totalorder %s24, 0
    %p119 = por %p117, %p118
    %s121 = sadd.s32 %s120, 1
    %p124 = scmp.eq.s32.totalorder %s18, 1
    %p125 = scmp.ne.s32.totalorder %s120, %s122
    %p126 = scmp.eq.s32.totalorder %s18, 0
    %p127 = por %p125, %p126
    %p128 = scmp.ne.s32.totalorder %s120, %s122
    %p129 = scmp.eq.s32.totalorder %s23, 1
    %p130 = por %p128, %p129
    %p131 = scmp.ne.s32.totalorder %s122, %s123
    %p132 = scmp.eq.s32.totalorder %s23, 0
    %p133 = por %p131, %p132
    %p134 = scmp.ne.s32.totalorder %s122, %s123
    %p135 = scmp.eq.s32.totalorder %s24, 1
    %p136 = por %p134, %p135
    %p138 = scmp.ne.s32.totalorder %s123, %s137
    %p139 = scmp.eq.s32.totalorder %s24, 0
    %p140 = por %p138, %p139
    %s142 = sadd.s32 %s141, 1
    %p145 = scmp.eq.s32.totalorder %s18, 1
    %p146 = scmp.ne.s32.totalorder %s141, %s143
    %p147 = scmp.eq.s32.totalorder %s18, 0
    %p148 = por %p146, %p147
    %p149 = scmp.ne.s32.totalorder %s141, %s143
    %p150 = scmp.eq.s32.totalorder %s23, 1
    %p151 = por %p149, %p150
    %p152 = scmp.ne.s32.totalorder %s143, %s144
    %p153 = scmp.eq.s32.totalorder %s23, 0
    %p154 = por %p152, %p153
    %p155 = scmp.ne.s32.totalorder %s143, %s144
    %p156 = scmp.eq.s32.totalorder %s24, 1
    %p157 = por %p155, %p156
    %p159 = scmp.ne.s32.totalorder %s144, %s158
    %p160 = scmp.eq.s32.totalorder %s24, 0
    %p161 = por %p159, %p160
    %s163 = sadd.s32 %s162, 1
    %p166 = scmp.eq.s32.totalorder %s18, 1
    %p167 = scmp.ne.s32.totalorder %s162, %s164
    %p168 = scmp.eq.s32.totalorder %s18, 0
    %p169 = por %p167, %p168
    %p170 = scmp.ne.s32.totalorder %s162, %s164
    %p171 = scmp.eq.s32.totalorder %s23, 1
    %p172 = por %p170, %p171
    %p173 = scmp.ne.s32.totalorder %s164, %s165
    %p174 = scmp.eq.s32.totalorder %s23, 0
    %p175 = por %p173, %p174
    %p176 = scmp.ne.s32.totalorder %s164, %s165
    %p177 = scmp.eq.s32.totalorder %s24, 1
    %p178 = por %p176, %p177
    %p180 = scmp.ne.s32.totalorder %s165, %s179
    %p181 = scmp.eq.s32.totalorder %s24, 0
    %p182 = por %p180, %p181
    %s184 = sadd.s32 %s183, 1
    %p187 = scmp.eq.s32.totalorder %s18, 1
    %p188 = scmp.ne.s32.totalorder %s183, %s185
    %p189 = scmp.eq.s32.totalorder %s18, 0
    %p190 = por %p188, %p189
    %p191 = scmp.ne.s32.totalorder %s183, %s185
    %p192 = scmp.eq.s32.totalorder %s23, 1
    %p193 = por %p191, %p192
    %p194 = scmp.ne.s32.totalorder %s185, %s186
    %p195 = scmp.eq.s32.totalorder %s23, 0
    %p196 = por %p194, %p195
    %p197 = scmp.ne.s32.totalorder %s185, %s186
    %p198 = scmp.eq.s32.totalorder %s24, 1
    %p199 = por %p197, %p198
    %p201 = scmp.ne.s32.totalorder %s186, %s200
    %p202 = scmp.eq.s32.totalorder %s24, 0
    %p203 = por %p201, %p202
    %s205 = sadd.s32 %s204, 1
    %p208 = scmp.eq.s32.totalorder %s18, 1
    %p209 = scmp.ne.s32.totalorder %s204, %s206
    %p210 = scmp.eq.s32.totalorder %s18, 0
    %p211 = por %p209, %p210
    %p212 = scmp.ne.s32.totalorder %s204, %s206
    %p213 = scmp.eq.s32.totalorder %s23, 1
    %p214 = por %p212, %p213
    %p215 = scmp.ne.s32.totalorder %s206, %s207
    %p216 = scmp.eq.s32.totalorder %s23, 0
    %p217 = por %p215, %p216
    %p218 = scmp.ne.s32.totalorder %s206, %s207
    %p219 = scmp.eq.s32.totalorder %s24, 1
    %p220 = por %p218, %p219
    %p222 = scmp.ne.s32.totalorder %s207, %s221
    %p223 = scmp.eq.s32.totalorder %s24, 0
    %p224 = por %p222, %p223
    %s226 = sadd.s32 %s225, 1
    %p229 = scmp.eq.s32.totalorder %s18, 1
    %p230 = scmp.ne.s32.totalorder %s225, %s227
    %p231 = scmp.eq.s32.totalorder %s18, 0
    %p232 = por %p230, %p231
    %p233 = scmp.ne.s32.totalorder %s225, %s227
    %p234 = scmp.eq.s32.totalorder %s23, 1
    %p235 = por %p233, %p234
    %p236 = scmp.ne.s32.totalorder %s227, %s228
    %p237 = scmp.eq.s32.totalorder %s23, 0
    %p238 = por %p236, %p237
    %p239 = scmp.ne.s32.totalorder %s227, %s228
    %p240 = scmp.eq.s32.totalorder %s24, 1
    %p241 = por %p239, %p240
    %p243 = scmp.ne.s32.totalorder %s228, %s242
    %p244 = scmp.eq.s32.totalorder %s24, 0
    %p245 = por %p243, %p244
    %s247 = sadd.s32 %s246, 1
    %p250 = scmp.eq.s32.totalorder %s18, 1
    %p251 = scmp.ne.s32.totalorder %s246, %s248
    %p252 = scmp.eq.s32.totalorder %s18, 0
    %p253 = por %p251, %p252
    %p254 = scmp.ne.s32.totalorder %s246, %s248
    %p255 = scmp.eq.s32.totalorder %s23, 1
    %p256 = por %p254, %p255
    %p257 = scmp.ne.s32.totalorder %s248, %s249
    %p258 = scmp.eq.s32.totalorder %s23, 0
    %p259 = por %p257, %p258
    %p260 = scmp.ne.s32.totalorder %s248, %s249
    %p261 = scmp.eq.s32.totalorder %s24, 1
    %p262 = por %p260, %p261
    %p264 = scmp.ne.s32.totalorder %s249, %s263
    %p265 = scmp.eq.s32.totalorder %s24, 0
    %p266 = por %p264, %p265
    %s268 = sadd.s32 %s267, 1
    %p271 = scmp.eq.s32.totalorder %s18, 1
    %p272 = scmp.ne.s32.totalorder %s267, %s269
    %p273 = scmp.eq.s32.totalorder %s18, 0
    %p274 = por %p272, %p273
    %p275 = scmp.ne.s32.totalorder %s267, %s269
    %p276 = scmp.eq.s32.totalorder %s23, 1
    %p277 = por %p275, %p276
    %p278 = scmp.ne.s32.totalorder %s269, %s270
    %p279 = scmp.eq.s32.totalorder %s23, 0
    %p280 = por %p278, %p279
    %p281 = scmp.ne.s32.totalorder %s269, %s270
    %p282 = scmp.eq.s32.totalorder %s24, 1
    %p283 = por %p281, %p282
    %p285 = scmp.ne.s32.totalorder %s270, %s284
    %p286 = scmp.eq.s32.totalorder %s24, 0
    %p287 = por %p285, %p286
    %s288 = ssub.s32 %s18, %s25
    %p289 = scmp.eq.s32.totalorder %s288, 0
    %s291 = sadd.s32 %s290, 1
    %s292 = scalar_select %p289, %s290, %s291
    %p295 = pneg %p289
    %p296 = scmp.eq.s32.totalorder %s18, 1
    %p297 = por %p295, %p296
    %p298 = scmp.ne.s32.totalorder %s290, %s293
    %p299 = scmp.eq.s32.totalorder %s18, 0
    %p300 = por %p298, %p299
    %p301 = scmp.ne.s32.totalorder %s290, %s293
    %p302 = scmp.eq.s32.totalorder %s23, 1
    %p303 = por %p301, %p302
    %p304 = scmp.ne.s32.totalorder %s293, %s294
    %p305 = scmp.eq.s32.totalorder %s23, 0
    %p306 = por %p304, %p305
    %p307 = scmp.ne.s32.totalorder %s293, %s294
    %p308 = scmp.eq.s32.totalorder %s24, 1
    %p309 = por %p307, %p308
    %p311 = scmp.ne.s32.totalorder %s294, %s310
    %p312 = scmp.eq.s32.totalorder %s24, 0
    %p313 = por %p311, %p312
    %p314 = scmp.le.s32.totalorder 1, %s18
    %p315 = scmp.lt.s32.totalorder %s18, 3
    %p316 = pnand %p314, %p315
    %p317 = pneg %p316
    // Predicated region
    $region9: #{network_forward.3} parent=5 // pred_check
      _
    $region10: #{network_forward.3} parent=5 // pred_check_branch
      %319 = sbr.rel (%p316) target = $region12
    $region11: #{network_forward.3} parent=5 // pred_region
      %s320 = ssub.s32 %s18, 1
      // Predicated region
      $region13: #{network_forward.3} parent=11 // pred_check
        %p321 = pneg %p91
      $region14: #{network_forward.3} parent=11 // pred_check_branch
        %323 = sbr.rel (%p321) target = $region16
      $region15: #{network_forward.3} parent=11 // pred_region
        _
      $region16: #{network_forward.3} parent=11 // pred_fallthru
        _
      // Predicated region
      $region17: #{network_forward.3} parent=11 // pred_check
        %p324 = pneg %p112
      $region18: #{network_forward.3} parent=11 // pred_check_branch
        %326 = sbr.rel (%p324) target = $region20
      $region19: #{network_forward.3} parent=11 // pred_region
        _
      $region20: #{network_forward.3} parent=11 // pred_fallthru
        _
      // Predicated region
      $region21: #{network_forward.3} parent=11 // pred_check
        %p327 = pneg %p133
      $region22: #{network_forward.3} parent=11 // pred_check_branch
        %329 = sbr.rel (%p327) target = $region24
      $region23: #{network_forward.3} parent=11 // pred_region
        _
      $region24: #{network_forward.3} parent=11 // pred_fallthru
        _
      // Predicated region
      $region25: #{network_forward.3} parent=11 // pred_check
        %p330 = pneg %p154
      $region26: #{network_forward.3} parent=11 // pred_check_branch
        %332 = sbr.rel (%p330) target = $region28
      $region27: #{network_forward.3} parent=11 // pred_region
        _
      $region28: #{network_forward.3} parent=11 // pred_fallthru
        _
      // Predicated region
      $region29: #{network_forward.3} parent=11 // pred_check
        %p333 = pneg %p175
      $region30: #{network_forward.3} parent=11 // pred_check_branch
        %335 = sbr.rel (%p333) target = $region32
      $region31: #{network_forward.3} parent=11 // pred_region
        _
      $region32: #{network_forward.3} parent=11 // pred_fallthru
        _
      // Predicated region
      $region33: #{network_forward.3} parent=11 // pred_check
        %p336 = pneg %p196
      $region34: #{network_forward.3} parent=11 // pred_check_branch
        %338 = sbr.rel (%p336) target = $region36
      $region35: #{network_forward.3} parent=11 // pred_region
        _
      $region36: #{network_forward.3} parent=11 // pred_fallthru
        _
      // Predicated region
      $region37: #{network_forward.3} parent=11 // pred_check
        %p339 = pneg %p217
      $region38: #{network_forward.3} parent=11 // pred_check_branch
        %341 = sbr.rel (%p339) target = $region40
      $region39: #{network_forward.3} parent=11 // pred_region
        _
      $region40: #{network_forward.3} parent=11 // pred_fallthru
        _
      // Predicated region
      $region41: #{network_forward.3} parent=11 // pred_check
        %p342 = pneg %p238
      $region42: #{network_forward.3} parent=11 // pred_check_branch
        %344 = sbr.rel (%p342) target = $region44
      $region43: #{network_forward.3} parent=11 // pred_region
        _
      $region44: #{network_forward.3} parent=11 // pred_fallthru
        _
      // Predicated region
      $region45: #{network_forward.3} parent=11 // pred_check
        %p345 = pneg %p259
      $region46: #{network_forward.3} parent=11 // pred_check_branch
        %347 = sbr.rel (%p345) target = $region48
      $region47: #{network_forward.3} parent=11 // pred_region
        _
      $region48: #{network_forward.3} parent=11 // pred_fallthru
        _
      // Predicated region
      $region49: #{network_forward.3} parent=11 // pred_check
        %p348 = pneg %p280
      $region50: #{network_forward.3} parent=11 // pred_check_branch
        %350 = sbr.rel (%p348) target = $region52
      $region51: #{network_forward.3} parent=11 // pred_region
        _
      $region52: #{network_forward.3} parent=11 // pred_fallthru
        _
    $region12: #{network_forward.3} parent=5 // pred_fallthru
      _
    %p351 = scmp.lt.s32.totalorder %s18, 2
    // Predicated region
    $region53: #{network_forward.3} parent=5 // pred_check
      %p352 = pneg %p351
    $region54: #{network_forward.3} parent=5 // pred_check_branch
      %354 = sbr.rel (%p352) target = $region56
    $region55: #{network_forward.3} parent=5 // pred_region
      // Predicated region
      $region57: #{network_forward.3} parent=55 // pred_check
        %p355 = pneg %p38
      $region58: #{network_forward.3} parent=55 // pred_check_branch
        %357 = sbr.rel (%p355) target = $region60
      $region59: #{network_forward.3} parent=55 // pred_region
        %s358 = smul.u32 25, %s18
        %p359 = scmp.lt.s32.totalorder %s358, 49
        %s360 = scalar_select %p359, %s358, 49
        %s361 = smul.addr %s360, 8
        %s362 = scalar_lea.vmem %s0, %s361
        %s363 = smul.u32 25, %s18
      $region60: #{network_forward.3} parent=55 // pred_fallthru
        _
      // Predicated region
      $region61: #{network_forward.3} parent=55 // pred_check
        %p364 = pneg %p64
      $region62: #{network_forward.3} parent=55 // pred_check_branch
        %366 = sbr.rel (%p364) target = $region64
      $region63: #{network_forward.3} parent=55 // pred_region
        %s367 = smul.u32 25, %s18
        %p368 = scmp.lt.s32.totalorder %s367, 49
        %s369 = scalar_select %p368, %s367, 49
        %s370 = smul.addr %s369, 8
        %s371 = scalar_lea.vmem %s1, %s370
        %s372 = smul.u32 25, %s18
      $region64: #{network_forward.3} parent=55 // pred_fallthru
        _
    $region56: #{network_forward.3} parent=5 // pred_fallthru
      _
    %p373 = scmp.le.s32.totalorder 1, %s18
    %p374 = scmp.lt.s32.totalorder %s18, 3
    %p375 = pnand %p373, %p374
    %p376 = pneg %p375
    // Predicated region
    $region65: #{network_forward.3} parent=5 // pred_check
      _
    $region66: #{network_forward.3} parent=5 // pred_check_branch
      %378 = sbr.rel (%p375) target = $region68
    $region67: #{network_forward.3} parent=5 // pred_region
      %s379 = ssub.s32 %s18, 1
      %s380 = smul.u32 25, %s23
      %p381 = scmp.lt.s32.totalorder %s380, 49
      %s382 = scalar_select %p381, %s380, 49
      %s383 = smul.addr %s382, 8
      %s384 = scalar_lea.vmem %s0, %s383
      %p385 = pneg %p44
      %p386 = pneg %p41
      %s387 = smul.u32 25, %s23
      %p388 = scmp.lt.s32.totalorder %s387, 49
      %s389 = scalar_select %p388, %s387, 49
      %s390 = smul.addr %s389, 8
      %s391 = scalar_lea.vmem %s1, %s390
      %p392 = pneg %p70
      %p393 = pneg %p67
      %p394 = pneg %p91
      %p395 = pneg %p88
      %p396 = pneg %p112
      %p397 = pneg %p109
      %p398 = pneg %p133
      %p399 = pneg %p130
      %p400 = pneg %p154
      %p401 = pneg %p151
      %p402 = pneg %p175
      %p403 = pneg %p172
      %p404 = pneg %p196
      %p405 = pneg %p193
      %p406 = pneg %p217
      %p407 = pneg %p214
      %p408 = pneg %p238
      %p409 = pneg %p235
      %p410 = pneg %p259
      %p411 = pneg %p256
      %p412 = pneg %p280
      %p413 = pneg %p277
      %p414 = pneg %p306
      %p415 = pneg %p303
      %s416 = smul.u32 25, %s23
      %p417 = scmp.lt.s32.totalorder %s416, 49
      %s418 = scalar_select %p417, %s416, 49
      %s419 = smul.addr %s418, 8
      %s420 = scalar_lea.vmem %s12, %s419
      %s421 = smul.u32 25, %s23
      %p422 = scmp.lt.s32.totalorder %s421, 49
      %s423 = scalar_select %p422, %s421, 49
      %s424 = smul.addr %s423, 8
      %s425 = scalar_lea.vmem %s0, %s424
      %s426 = smul.u32 25, %s23
      %s427 = smul.u32 25, %s23
      %p428 = scmp.lt.s32.totalorder %s427, 49
      %s429 = scalar_select %p428, %s427, 49
      %s430 = smul.addr %s429, 8
      %s431 = scalar_lea.vmem %s1, %s430
      %s432 = smul.u32 25, %s23
      %s433 = smul.u32 25, %s23
      %p434 = scmp.lt.s32.totalorder %s433, 49
      %s435 = scalar_select %p434, %s433, 49
      %s436 = smul.addr %s435, 8
      %s437 = scalar_lea.vmem %s12, %s436
      %s438 = smul.u32 25, %s23
      %v439 = vld [vmem:[%s425] sm:$0xff]
      %v440 = vld [vmem:[%s425 + $0x8] sm:$0xff]
      %v441 = vld [vmem:[%s425 + $0x10] sm:$0xff]
      %v442 = vld [vmem:[%s425 + $0x18] sm:$0xff]
      %v443 = vld [vmem:[%s425 + $0x20] sm:$0xff]
      %v444 = vld [vmem:[%s425 + $0x28] sm:$0xff]
      %v445 = vld [vmem:[%s425 + $0x30] sm:$0xff]
      %v446 = vld [vmem:[%s425 + $0x38] sm:$0xff]
      %v447 = vld [vmem:[%s425 + $0x40] sm:$0xff]
      %v448 = vld [vmem:[%s425 + $0x48] sm:$0xff]
      %v449 = vld [vmem:[%s425 + $0x50] sm:$0xff]
      %v450 = vld [vmem:[%s425 + $0x58] sm:$0xff]
      %v451 = vld [vmem:[%s425 + $0x60] sm:$0xff]
      %v452 = vld [vmem:[%s425 + $0x68] sm:$0xff]
      %v453 = vld [vmem:[%s425 + $0x70] sm:$0xff]
      %v454 = vld [vmem:[%s425 + $0x78] sm:$0xff]
      %v455 = vld [vmem:[%s425 + $0x80] sm:$0xff]
      %v456 = vld [vmem:[%s425 + $0x88] sm:$0xff]
      %v457 = vld [vmem:[%s425 + $0x90] sm:$0xff]
      %v458 = vld [vmem:[%s425 + $0x98] sm:$0xff]
      %v459 = vld [vmem:[%s425 + $0xa0] sm:$0xff]
      %v460 = vld [vmem:[%s425 + $0xa8] sm:$0xff]
      %v461 = vld [vmem:[%s425 + $0xb0] sm:$0xff]
      %v462 = vld [vmem:[%s425 + $0xb8] sm:$0xff]
      %v463 = vld [vmem:[%s425 + $0xc0] sm:$0xff]
      %v464 = vld [vmem:[%s2] sm:$0xff]
      %v465 = vld [vmem:[%s2 + $0x8] sm:$0xff]
      %v466 = vld [vmem:[%s2 + $0x10] sm:$0xff]
      %v467 = vld [vmem:[%s2 + $0x18] sm:$0xff]
      %v468 = vld [vmem:[%s2 + $0x20] sm:$0xff]
      %v469 = vld [vmem:[%s2 + $0x28] sm:$0xff]
      %v470 = vld [vmem:[%s2 + $0x30] sm:$0xff]
      %v471 = vld [vmem:[%s2 + $0x38] sm:$0xff]
      %v472 = vld [vmem:[%s3] sm:$0x3]
      %v474 = vlaneseq
      %v475 = vshrl.u32 %v474, 7
      %v476 = vsub.s32 0, %v475
      %v477 = vrot.slane %v472, %v476
      %v478 = vlaneseq
      %v479 = vshrl.u32 %v478, 7
      %v480 = vsub.s32 1, %v479
      %v481 = vrot.slane %v472, %v480
      %vm484 = vcmask 261120
      %v486 = vsel %vm484, %v439, 0
      %v489 = vsel %vm484, %v440, 0
      %v492 = vsel %vm484, %v441, 0
      %v495 = vsel %vm484, %v442, 0
      %v498 = vsel %vm484, %v443, 0
      %v501 = vsel %vm484, %v444, 0
      %v504 = vsel %vm484, %v445, 0
      %v507 = vsel %vm484, %v446, 0
      %v510 = vsel %vm484, %v447, 0
      %v513 = vsel %vm484, %v448, 0
      %v516 = vsel %vm484, %v449, 0
      %v519 = vsel %vm484, %v450, 0
      %v522 = vsel %vm484, %v451, 0
      %v525 = vsel %vm484, %v452, 0
      %v528 = vsel %vm484, %v453, 0
      %v531 = vsel %vm484, %v454, 0
      %v534 = vsel %vm484, %v455, 0
      %v537 = vsel %vm484, %v456, 0
      %v540 = vsel %vm484, %v457, 0
      %v543 = vsel %vm484, %v458, 0
      %v546 = vsel %vm484, %v459, 0
      %v549 = vsel %vm484, %v460, 0
      %v552 = vsel %vm484, %v461, 0
      %v555 = vsel %vm484, %v462, 0
      %v558 = vsel %vm484, %v463, 0
      %560 = vmatprep.subr.mxu0 %v465
      %561 = vmatpush1.msra.mxu0 %v464
      %562 = vmatprep.subr.mxu0 %v467
      %563 = vmatpush1.msra.mxu0 %v466
      %564 = vmatprep.subr.mxu0 %v469
      %565 = vmatpush1.msra.mxu0 %v468
      %566 = vmatprep.subr.mxu0 %v471
      %567 = vmatpush1.msra.mxu0 %v470
      %568 = vmatprep.subr.mxu0 0.0
      %569 = vmatpush1.msra.mxu0 0.0
      %570 = vmatprep.subr.mxu0 0.0
      %571 = vmatpush1.msra.mxu0 0.0
      %572 = vmatprep.subr.mxu0 0.0
      %573 = vmatpush1.msra.mxu0 0.0
      %574 = vmatprep.subr.mxu0 0.0
      %575 = vmatpush1.msra.mxu0 0.0
      %576 = vmatprep.subr.mxu0 0.0
      %577 = vmatpush1.msra.mxu0 0.0
      %578 = vmatprep.subr.mxu0 0.0
      %579 = vmatpush1.msra.mxu0 0.0
      %580 = vmatprep.subr.mxu0 0.0
      %581 = vmatpush1.msra.mxu0 0.0
      %582 = vmatprep.subr.mxu0 0.0
      %583 = vmatpush1.msra.mxu0 0.0
      %584 = vmatprep.subr.mxu0 0.0
      %585 = vmatpush1.msra.mxu0 0.0
      %586 = vmatprep.subr.mxu0 0.0
      %587 = vmatpush1.msra.mxu0 0.0
      %588 = vmatprep.subr.mxu0 0.0
      %589 = vmatpush1.msra.mxu0 0.0
      %590 = vmatprep.subr.mxu0 0.0
      %591 = vmatpush1.msra.mxu0 0.0
      %592 = vmatprep.subr.mxu0 0.0
      %593 = vmatpush1.msra.mxu0 0.0
      %594 = vmatprep.subr.mxu0 0.0
      %595 = vmatpush1.msra.mxu0 0.0
      %596 = vmatprep.subr.mxu0 0.0
      %597 = vmatpush1.msra.mxu0 0.0
      %598 = vmatprep.subr.mxu0 0.0
      %599 = vmatpush1.msra.mxu0 0.0
      %600 = vmatprep.subr.mxu0 0.0
      %601 = vmatpush1.msra.mxu0 0.0
      %602 = vmatprep.subr.mxu0 0.0
      %603 = vmatpush1.msra.mxu0 0.0
      %604 = vmatprep.subr.mxu0 0.0
      %605 = vmatpush1.msra.mxu0 0.0
      %606 = vmatprep.subr.mxu0 0.0
      %607 = vmatpush1.msra.mxu0 0.0
      %608 = vmatprep.subr.mxu0 0.0
      %609 = vmatpush1.msra.mxu0 0.0
      %610 = vmatprep.subr.mxu0 0.0
      %611 = vmatpush1.msra.mxu0 0.0
      %612 = vmatprep.subr.mxu0 0.0
      %613 = vmatpush1.msra.mxu0 0.0
      %614 = vmatprep.subr.mxu0 0.0
      %615 = vmatpush1.msra.mxu0 0.0
      %616 = vmatprep.subr.mxu0 0.0
      %617 = vmatpush1.msra.mxu0 0.0
      %618 = vmatprep.subr.mxu0 0.0
      %619 = vmatpush1.msra.mxu0 0.0
      %620 = vmatprep.subr.mxu0 0.0
      %621 = vmatpush1.msra.mxu0 0.0
      %622 = vmatprep.subr.mxu0 0.0
      %623 = vmatpush1.msra.mxu0 0.0
      %624 = vmatprep.mubr.f32.mxu0 0.0
      %625 = vmatmul.mubr.f32.gmra.mrb[0].mxu0 %v486
      %v626 = vpop.f32.mrb[0].mxu0
      %v627 = vadd.f32 %v477, %v626
      %v628 = vpop.f32.mrb[0].mxu0
      %v629 = vadd.f32 %v481, %v628
      %630 = vmatprep.mubr.f32.mxu0 0.0
      %631 = vmatmul.mubr.f32.gmra.mrb[0].mxu0 %v489
      %v632 = vpop.f32.mrb[0].mxu0
      %v633 = vadd.f32 %v477, %v632
      %v634 = vpop.f32.mrb[0].mxu0
      %v635 = vadd.f32 %v481, %v634
      %636 = vmatprep.mubr.f32.mxu0 0.0
      %637 = vmatmul.mubr.f32.gmra.mrb[0].mxu0 %v492
      %v638 = vpop.f32.mrb[0].mxu0
      %v639 = vadd.f32 %v477, %v638
      %v640 = vpop.f32.mrb[0].mxu0
      %v641 = vadd.f32 %v481, %v640
      %642 = vmatprep.mubr.f32.mxu0 0.0
      %643 = vmatmul.mubr.f32.gmra.mrb[0].mxu0 %v495
      %v644 = vpop.f32.mrb[0].mxu0
      %v645 = vadd.f32 %v477, %v644
      %v646 = vpop.f32.mrb[0].mxu0
      %v647 = vadd.f32 %v481, %v646
      %648 = vmatprep.mubr.f32.mxu0 0.0
      %649 = vmatmul.mubr.f32.gmra.mrb[0].mxu0 %v498
      %v650 = vpop.f32.mrb[0].mxu0
      %v651 = vadd.f32 %v477, %v650
      %v652 = vpop.f32.mrb[0].mxu0
      %v653 = vadd.f32 %v481, %v652
      %654 = vmatprep.mubr.f32.mxu0 0.0
      %655 = vmatmul.mubr.f32.gmra.mrb[0].mxu0 %v501
      %v656 = vpop.f32.mrb[0].mxu0
      %v657 = vadd.f32 %v477, %v656
      %v658 = vpop.f32.mrb[0].mxu0
      %v659 = vadd.f32 %v481, %v658
      %660 = vmatprep.mubr.f32.mxu0 0.0
      %661 = vmatmul.mubr.f32.gmra.mrb[0].mxu0 %v504
      %v662 = vpop.f32.mrb[0].mxu0
      %v663 = vadd.f32 %v477, %v662
      %v664 = vpop.f32.mrb[0].mxu0
      %v665 = vadd.f32 %v481, %v664
      %666 = vmatprep.mubr.f32.mxu0 0.0
      %667 = vmatmul.mubr.f32.gmra.mrb[0].mxu0 %v507
      %v668 = vpop.f32.mrb[0].mxu0
      %v669 = vadd.f32 %v477, %v668
      %v670 = vpop.f32.mrb[0].mxu0
      %v671 = vadd.f32 %v481, %v670
      %672 = vmatprep.mubr.f32.mxu0 0.0
      %673 = vmatmul.mubr.f32.gmra.mrb[0].mxu0 %v510
      %v674 = vpop.f32.mrb[0].mxu0
      %v675 = vadd.f32 %v477, %v674
      %v676 = vpop.f32.mrb[0].mxu0
      %v677 = vadd.f32 %v481, %v676
      %678 = vmatprep.mubr.f32.mxu0 0.0
      %679 = vmatmul.mubr.f32.gmra.mrb[0].mxu0 %v513
      %v680 = vpop.f32.mrb[0].mxu0
      %v681 = vadd.f32 %v477, %v680
      %v682 = vpop.f32.mrb[0].mxu0
      %v683 = vadd.f32 %v481, %v682
      %684 = vmatprep.mubr.f32.mxu0 0.0
      %685 = vmatmul.mubr.f32.gmra.mrb[0].mxu0 %v516
      %v686 = vpop.f32.mrb[0].mxu0
      %v687 = vadd.f32 %v477, %v686
      %v688 = vpop.f32.mrb[0].mxu0
      %v689 = vadd.f32 %v481, %v688
      %690 = vmatprep.mubr.f32.mxu0 0.0
      %691 = vmatmul.mubr.f32.gmra.mrb[0].mxu0 %v519
      %v692 = vpop.f32.mrb[0].mxu0
      %v693 = vadd.f32 %v477, %v692
      %v694 = vpop.f32.mrb[0].mxu0
      %v695 = vadd.f32 %v481, %v694
      %696 = vmatprep.mubr.f32.mxu0 0.0
      %697 = vmatmul.mubr.f32.gmra.mrb[0].mxu0 %v522
      %v698 = vpop.f32.mrb[0].mxu0
      %v699 = vadd.f32 %v477, %v698
      %v700 = vpop.f32.mrb[0].mxu0
      %v701 = vadd.f32 %v481, %v700
      %702 = vmatprep.mubr.f32.mxu0 0.0
      %703 = vmatmul.mubr.f32.gmra.mrb[0].mxu0 %v525
      %v704 = vpop.f32.mrb[0].mxu0
      %v705 = vadd.f32 %v477, %v704
      %v706 = vpop.f32.mrb[0].mxu0
      %v707 = vadd.f32 %v481, %v706
      %708 = vmatprep.mubr.f32.mxu0 0.0
      %709 = vmatmul.mubr.f32.gmra.mrb[0].mxu0 %v528
      %v710 = vpop.f32.mrb[0].mxu0
      %v711 = vadd.f32 %v477, %v710
      %v712 = vpop.f32.mrb[0].mxu0
      %v713 = vadd.f32 %v481, %v712
      %714 = vmatprep.mubr.f32.mxu0 0.0
      %715 = vmatmul.mubr.f32.gmra.mrb[0].mxu0 %v531
      %v716 = vpop.f32.mrb[0].mxu0
      %v717 = vadd.f32 %v477, %v716
      %v718 = vpop.f32.mrb[0].mxu0
      %v719 = vadd.f32 %v481, %v718
      %720 = vmatprep.mubr.f32.mxu0 0.0
      %721 = vmatmul.mubr.f32.gmra.mrb[0].mxu0 %v534
      %v722 = vpop.f32.mrb[0].mxu0
      %v723 = vadd.f32 %v477, %v722
      %v724 = vpop.f32.mrb[0].mxu0
      %v725 = vadd.f32 %v481, %v724
      %726 = vmatprep.mubr.f32.mxu0 0.0
      %727 = vmatmul.mubr.f32.gmra.mrb[0].mxu0 %v537
      %v728 = vpop.f32.mrb[0].mxu0
      %v729 = vadd.f32 %v477, %v728
      %v730 = vpop.f32.mrb[0].mxu0
      %v731 = vadd.f32 %v481, %v730
      %732 = vmatprep.mubr.f32.mxu0 0.0
      %733 = vmatmul.mubr.f32.gmra.mrb[0].mxu0 %v540
      %v734 = vpop.f32.mrb[0].mxu0
      %v735 = vadd.f32 %v477, %v734
      %v736 = vpop.f32.mrb[0].mxu0
      %v737 = vadd.f32 %v481, %v736
      %738 = vmatprep.mubr.f32.mxu0 0.0
      %739 = vmatmul.mubr.f32.gmra.mrb[0].mxu0 %v543
      %v740 = vpop.f32.mrb[0].mxu0
      %v741 = vadd.f32 %v477, %v740
      %v742 = vpop.f32.mrb[0].mxu0
      %v743 = vadd.f32 %v481, %v742
      %744 = vmatprep.mubr.f32.mxu0 0.0
      %745 = vmatmul.mubr.f32.gmra.mrb[0].mxu0 %v546
      %v746 = vpop.f32.mrb[0].mxu0
      %v747 = vadd.f32 %v477, %v746
      %v748 = vpop.f32.mrb[0].mxu0
      %v749 = vadd.f32 %v481, %v748
      %750 = vmatprep.mubr.f32.mxu0 0.0
      %751 = vmatmul.mubr.f32.gmra.mrb[0].mxu0 %v549
      %v752 = vpop.f32.mrb[0].mxu0
      %v753 = vadd.f32 %v477, %v752
      %v754 = vpop.f32.mrb[0].mxu0
      %v755 = vadd.f32 %v481, %v754
      %756 = vmatprep.mubr.f32.mxu0 0.0
      %757 = vmatmul.mubr.f32.gmra.mrb[0].mxu0 %v552
      %v758 = vpop.f32.mrb[0].mxu0
      %v759 = vadd.f32 %v477, %v758
      %v760 = vpop.f32.mrb[0].mxu0
      %v761 = vadd.f32 %v481, %v760
      %762 = vmatprep.mubr.f32.mxu0 0.0
      %763 = vmatmul.mubr.f32.gmra.mrb[0].mxu0 %v555
      %v764 = vpop.f32.mrb[0].mxu0
      %v765 = vadd.f32 %v477, %v764
      %v766 = vpop.f32.mrb[0].mxu0
      %v767 = vadd.f32 %v481, %v766
      %768 = vmatprep.mubr.f32.mxu0 0.0
      %769 = vmatmul.mubr.f32.gmra.mrb[0].mxu0 %v558
      %v770 = vpop.f32.mrb[0].mxu0
      %v771 = vadd.f32 %v477, %v770
      %v772 = vpop.f32.mrb[0].mxu0
      %v773 = vadd.f32 %v481, %v772
      %774 = vdwg.mxu0
      %v775 = vld [vmem:[%s431] sm:$0xff]
      %v776 = vld [vmem:[%s431 + $0x8] sm:$0xff]
      %v777 = vld [vmem:[%s431 + $0x10] sm:$0xff]
      %v778 = vld [vmem:[%s431 + $0x18] sm:$0xff]
      %v779 = vld [vmem:[%s431 + $0x20] sm:$0xff]
      %v780 = vld [vmem:[%s431 + $0x28] sm:$0xff]
      %v781 = vld [vmem:[%s431 + $0x30] sm:$0xff]
      %v782 = vld [vmem:[%s431 + $0x38] sm:$0xff]
      %v783 = vld [vmem:[%s431 + $0x40] sm:$0xff]
      %v784 = vld [vmem:[%s431 + $0x48] sm:$0xff]
      %v785 = vld [vmem:[%s431 + $0x50] sm:$0xff]
      %v786 = vld [vmem:[%s431 + $0x58] sm:$0xff]
      %v787 = vld [vmem:[%s431 + $0x60] sm:$0xff]
      %v788 = vld [vmem:[%s431 + $0x68] sm:$0xff]
      %v789 = vld [vmem:[%s431 + $0x70] sm:$0xff]
      %v790 = vld [vmem:[%s431 + $0x78] sm:$0xff]
      %v791 = vld [vmem:[%s431 + $0x80] sm:$0xff]
      %v792 = vld [vmem:[%s431 + $0x88] sm:$0xff]
      %v793 = vld [vmem:[%s431 + $0x90] sm:$0xff]
      %v794 = vld [vmem:[%s431 + $0x98] sm:$0xff]
      %v795 = vld [vmem:[%s431 + $0xa0] sm:$0xff]
      %v796 = vld [vmem:[%s431 + $0xa8] sm:$0xff]
      %v797 = vld [vmem:[%s431 + $0xb0] sm:$0xff]
      %v798 = vld [vmem:[%s431 + $0xb8] sm:$0xff]
      %v799 = vld [vmem:[%s431 + $0xc0] sm:$0xff]
      %801 = vset.pattern.permute.xlu0 0
      %802 = vperm.xlu0 %801, %v775
      %v803 = vpop.permute.xlu0 %802
      %806 = vset.pattern.permute.xlu0 0
      %807 = vperm.xlu0 %806, %v776
      %v808 = vpop.permute.xlu0 %807
      %811 = vset.pattern.permute.xlu0 0
      %812 = vperm.xlu0 %811, %v777
      %v813 = vpop.permute.xlu0 %812
      %816 = vset.pattern.permute.xlu0 0
      %817 = vperm.xlu0 %816, %v778
      %v818 = vpop.permute.xlu0 %817
      %821 = vset.pattern.permute.xlu0 0
      %822 = vperm.xlu0 %821, %v779
      %v823 = vpop.permute.xlu0 %822
      %826 = vset.pattern.permute.xlu0 0
      %827 = vperm.xlu0 %826, %v780
      %v828 = vpop.permute.xlu0 %827
      %831 = vset.pattern.permute.xlu0 0
      %832 = vperm.xlu0 %831, %v781
      %v833 = vpop.permute.xlu0 %832
      %836 = vset.pattern.permute.xlu0 0
      %837 = vperm.xlu0 %836, %v782
      %v838 = vpop.permute.xlu0 %837
      %841 = vset.pattern.permute.xlu0 0
      %842 = vperm.xlu0 %841, %v783
      %v843 = vpop.permute.xlu0 %842
      %846 = vset.pattern.permute.xlu0 0
      %847 = vperm.xlu0 %846, %v784
      %v848 = vpop.permute.xlu0 %847
      %851 = vset.pattern.permute.xlu0 0
      %852 = vperm.xlu0 %851, %v785
      %v853 = vpop.permute.xlu0 %852
      %856 = vset.pattern.permute.xlu0 0
      %857 = vperm.xlu0 %856, %v786
      %v858 = vpop.permute.xlu0 %857
      %861 = vset.pattern.permute.xlu0 0
      %862 = vperm.xlu0 %861, %v787
      %v863 = vpop.permute.xlu0 %862
      %866 = vset.pattern.permute.xlu0 0
      %867 = vperm.xlu0 %866, %v788
      %v868 = vpop.permute.xlu0 %867
      %871 = vset.pattern.permute.xlu0 0
      %872 = vperm.xlu0 %871, %v789
      %v873 = vpop.permute.xlu0 %872
      %876 = vset.pattern.permute.xlu0 0
      %877 = vperm.xlu0 %876, %v790
      %v878 = vpop.permute.xlu0 %877
      %881 = vset.pattern.permute.xlu0 0
      %882 = vperm.xlu0 %881, %v791
      %v883 = vpop.permute.xlu0 %882
      %886 = vset.pattern.permute.xlu0 0
      %887 = vperm.xlu0 %886, %v792
      %v888 = vpop.permute.xlu0 %887
      %891 = vset.pattern.permute.xlu0 0
      %892 = vperm.xlu0 %891, %v793
      %v893 = vpop.permute.xlu0 %892
      %896 = vset.pattern.permute.xlu0 0
      %897 = vperm.xlu0 %896, %v794
      %v898 = vpop.permute.xlu0 %897
      %901 = vset.pattern.permute.xlu0 0
      %902 = vperm.xlu0 %901, %v795
      %v903 = vpop.permute.xlu0 %902
      %906 = vset.pattern.permute.xlu0 0
      %907 = vperm.xlu0 %906, %v796
      %v908 = vpop.permute.xlu0 %907
      %911 = vset.pattern.permute.xlu0 0
      %912 = vperm.xlu0 %911, %v797
      %v913 = vpop.permute.xlu0 %912
      %916 = vset.pattern.permute.xlu0 0
      %917 = vperm.xlu0 %916, %v798
      %v918 = vpop.permute.xlu0 %917
      %921 = vset.pattern.permute.xlu0 0
      %922 = vperm.xlu0 %921, %v799
      %v923 = vpop.permute.xlu0 %922
      %v925 = vmul.f32 %v627, %v803
      %v926 = vmul.f32 %v629, %v803
      %v927 = vmul.f32 %v633, %v808
      %v928 = vmul.f32 %v635, %v808
      %v929 = vmul.f32 %v639, %v813
      %v930 = vmul.f32 %v641, %v813
      %v931 = vmul.f32 %v645, %v818
      %v932 = vmul.f32 %v647, %v818
      %v933 = vmul.f32 %v651, %v823
      %v934 = vmul.f32 %v653, %v823
      %v935 = vmul.f32 %v657, %v828
      %v936 = vmul.f32 %v659, %v828
      %v937 = vmul.f32 %v663, %v833
      %v938 = vmul.f32 %v665, %v833
      %v939 = vmul.f32 %v669, %v838
      %v940 = vmul.f32 %v671, %v838
      %v941 = vmul.f32 %v675, %v843
      %v942 = vmul.f32 %v677, %v843
      %v943 = vmul.f32 %v681, %v848
      %v944 = vmul.f32 %v683, %v848
      %v945 = vmul.f32 %v687, %v853
      %v946 = vmul.f32 %v689, %v853
      %v947 = vmul.f32 %v693, %v858
      %v948 = vmul.f32 %v695, %v858
      %v949 = vmul.f32 %v699, %v863
      %v950 = vmul.f32 %v701, %v863
      %v951 = vmul.f32 %v705, %v868
      %v952 = vmul.f32 %v707, %v868
      %v953 = vmul.f32 %v711, %v873
      %v954 = vmul.f32 %v713, %v873
      %v955 = vmul.f32 %v717, %v878
      %v956 = vmul.f32 %v719, %v878
      %v957 = vmul.f32 %v723, %v883
      %v958 = vmul.f32 %v725, %v883
      %v959 = vmul.f32 %v729, %v888
      %v960 = vmul.f32 %v731, %v888
      %v961 = vmul.f32 %v735, %v893
      %v962 = vmul.f32 %v737, %v893
      %v963 = vmul.f32 %v741, %v898
      %v964 = vmul.f32 %v743, %v898
      %v965 = vmul.f32 %v747, %v903
      %v966 = vmul.f32 %v749, %v903
      %v967 = vmul.f32 %v753, %v908
      %v968 = vmul.f32 %v755, %v908
      %v969 = vmul.f32 %v759, %v913
      %v970 = vmul.f32 %v761, %v913
      %v971 = vmul.f32 %v765, %v918
      %v972 = vmul.f32 %v767, %v918
      %v973 = vmul.f32 %v771, %v923
      %v974 = vmul.f32 %v773, %v923
      %975 = vset.pattern.permute.xlu0 1
      %976 = vperm.xlu0 %975, %v775
      %v977 = vpop.permute.xlu0 %976
      %979 = vset.pattern.permute.xlu0 1
      %980 = vperm.xlu0 %979, %v776
      %v981 = vpop.permute.xlu0 %980
      %983 = vset.pattern.permute.xlu0 1
      %984 = vperm.xlu0 %983, %v777
      %v985 = vpop.permute.xlu0 %984
      %987 = vset.pattern.permute.xlu0 1
      %988 = vperm.xlu0 %987, %v778
      %v989 = vpop.permute.xlu0 %988
      %991 = vset.pattern.permute.xlu0 1
      %992 = vperm.xlu0 %991, %v779
      %v993 = vpop.permute.xlu0 %992
      %995 = vset.pattern.permute.xlu0 1
      %996 = vperm.xlu0 %995, %v780
      %v997 = vpop.permute.xlu0 %996
      %999 = vset.pattern.permute.xlu0 1
      %1000 = vperm.xlu0 %999, %v781
      %v1001 = vpop.permute.xlu0 %1000
      %1003 = vset.pattern.permute.xlu0 1
      %1004 = vperm.xlu0 %1003, %v782
      %v1005 = vpop.permute.xlu0 %1004
      %1007 = vset.pattern.permute.xlu0 1
      %1008 = vperm.xlu0 %1007, %v783
      %v1009 = vpop.permute.xlu0 %1008
      %1011 = vset.pattern.permute.xlu0 1
      %1012 = vperm.xlu0 %1011, %v784
      %v1013 = vpop.permute.xlu0 %1012
      %1015 = vset.pattern.permute.xlu0 1
      %1016 = vperm.xlu0 %1015, %v785
      %v1017 = vpop.permute.xlu0 %1016
      %1019 = vset.pattern.permute.xlu0 1
      %1020 = vperm.xlu0 %1019, %v786
      %v1021 = vpop.permute.xlu0 %1020
      %1023 = vset.pattern.permute.xlu0 1
      %1024 = vperm.xlu0 %1023, %v787
      %v1025 = vpop.permute.xlu0 %1024
      %1027 = vset.pattern.permute.xlu0 1
      %1028 = vperm.xlu0 %1027, %v788
      %v1029 = vpop.permute.xlu0 %1028
      %1031 = vset.pattern.permute.xlu0 1
      %1032 = vperm.xlu0 %1031, %v789
      %v1033 = vpop.permute.xlu0 %1032
      %1035 = vset.pattern.permute.xlu0 1
      %1036 = vperm.xlu0 %1035, %v790
      %v1037 = vpop.permute.xlu0 %1036
      %1039 = vset.pattern.permute.xlu0 1
      %1040 = vperm.xlu0 %1039, %v791
      %v1041 = vpop.permute.xlu0 %1040
      %1043 = vset.pattern.permute.xlu0 1
      %1044 = vperm.xlu0 %1043, %v792
      %v1045 = vpop.permute.xlu0 %1044
      %1047 = vset.pattern.permute.xlu0 1
      %1048 = vperm.xlu0 %1047, %v793
      %v1049 = vpop.permute.xlu0 %1048
      %1051 = vset.pattern.permute.xlu0 1
      %1052 = vperm.xlu0 %1051, %v794
      %v1053 = vpop.permute.xlu0 %1052
      %1055 = vset.pattern.permute.xlu0 1
      %1056 = vperm.xlu0 %1055, %v795
      %v1057 = vpop.permute.xlu0 %1056
      %1059 = vset.pattern.permute.xlu0 1
      %1060 = vperm.xlu0 %1059, %v796
      %v1061 = vpop.permute.xlu0 %1060
      %1063 = vset.pattern.permute.xlu0 1
      %1064 = vperm.xlu0 %1063, %v797
      %v1065 = vpop.permute.xlu0 %1064
      %1067 = vset.pattern.permute.xlu0 1
      %1068 = vperm.xlu0 %1067, %v798
      %v1069 = vpop.permute.xlu0 %1068
      %1071 = vset.pattern.permute.xlu0 1
      %1072 = vperm.xlu0 %1071, %v799
      %v1073 = vpop.permute.xlu0 %1072
      %v1075 = vadd.f32 %v925, %v977
      %v1076 = vadd.f32 %v926, %v977
      %v1077 = vadd.f32 %v927, %v981
      %v1078 = vadd.f32 %v928, %v981
      %v1079 = vadd.f32 %v929, %v985
      %v1080 = vadd.f32 %v930, %v985
      %v1081 = vadd.f32 %v931, %v989
      %v1082 = vadd.f32 %v932, %v989
      %v1083 = vadd.f32 %v933, %v993
      %v1084 = vadd.f32 %v934, %v993
      %v1085 = vadd.f32 %v935, %v997
      %v1086 = vadd.f32 %v936, %v997
      %v1087 = vadd.f32 %v937, %v1001
      %v1088 = vadd.f32 %v938, %v1001
      %v1089 = vadd.f32 %v939, %v1005
      %v1090 = vadd.f32 %v940, %v1005
      %v1091 = vadd.f32 %v941, %v1009
      %v1092 = vadd.f32 %v942, %v1009
      %v1093 = vadd.f32 %v943, %v1013
      %v1094 = vadd.f32 %v944, %v1013
      %v1095 = vadd.f32 %v945, %v1017
      %v1096 = vadd.f32 %v946, %v1017
      %v1097 = vadd.f32 %v947, %v1021
      %v1098 = vadd.f32 %v948, %v1021
      %v1099 = vadd.f32 %v949, %v1025
      %v1100 = vadd.f32 %v950, %v1025
      %v1101 = vadd.f32 %v951, %v1029
      %v1102 = vadd.f32 %v952, %v1029
      %v1103 = vadd.f32 %v953, %v1033
      %v1104 = vadd.f32 %v954, %v1033
      %v1105 = vadd.f32 %v955, %v1037
      %v1106 = vadd.f32 %v956, %v1037
      %v1107 = vadd.f32 %v957, %v1041
      %v1108 = vadd.f32 %v958, %v1041
      %v1109 = vadd.f32 %v959, %v1045
      %v1110 = vadd.f32 %v960, %v1045
      %v1111 = vadd.f32 %v961, %v1049
      %v1112 = vadd.f32 %v962, %v1049
      %v1113 = vadd.f32 %v963, %v1053
      %v1114 = vadd.f32 %v964, %v1053
      %v1115 = vadd.f32 %v965, %v1057
      %v1116 = vadd.f32 %v966, %v1057
      %v1117 = vadd.f32 %v967, %v1061
      %v1118 = vadd.f32 %v968, %v1061
      %v1119 = vadd.f32 %v969, %v1065
      %v1120 = vadd.f32 %v970, %v1065
      %v1121 = vadd.f32 %v971, %v1069
      %v1122 = vadd.f32 %v972, %v1069
      %v1123 = vadd.f32 %v973, %v1073
      %v1124 = vadd.f32 %v974, %v1073
      %v1125 = vmax.f32 %v1075, 0.0
      %v1126 = vmax.f32 %v1076, 0.0
      %v1127 = vmax.f32 %v1077, 0.0
      %v1128 = vmax.f32 %v1078, 0.0
      %v1129 = vmax.f32 %v1079, 0.0
      %v1130 = vmax.f32 %v1080, 0.0
      %v1131 = vmax.f32 %v1081, 0.0
      %v1132 = vmax.f32 %v1082, 0.0
      %v1133 = vmax.f32 %v1083, 0.0
      %v1134 = vmax.f32 %v1084, 0.0
      %v1135 = vmax.f32 %v1085, 0.0
      %v1136 = vmax.f32 %v1086, 0.0
      %v1137 = vmax.f32 %v1087, 0.0
      %v1138 = vmax.f32 %v1088, 0.0
      %v1139 = vmax.f32 %v1089, 0.0
      %v1140 = vmax.f32 %v1090, 0.0
      %v1141 = vmax.f32 %v1091, 0.0
      %v1142 = vmax.f32 %v1092, 0.0
      %v1143 = vmax.f32 %v1093, 0.0
      %v1144 = vmax.f32 %v1094, 0.0
      %v1145 = vmax.f32 %v1095, 0.0
      %v1146 = vmax.f32 %v1096, 0.0
      %v1147 = vmax.f32 %v1097, 0.0
      %v1148 = vmax.f32 %v1098, 0.0
      %v1149 = vmax.f32 %v1099, 0.0
      %v1150 = vmax.f32 %v1100, 0.0
      %v1151 = vmax.f32 %v1101, 0.0
      %v1152 = vmax.f32 %v1102, 0.0
      %v1153 = vmax.f32 %v1103, 0.0
      %v1154 = vmax.f32 %v1104, 0.0
      %v1155 = vmax.f32 %v1105, 0.0
      %v1156 = vmax.f32 %v1106, 0.0
      %v1157 = vmax.f32 %v1107, 0.0
      %v1158 = vmax.f32 %v1108, 0.0
      %v1159 = vmax.f32 %v1109, 0.0
      %v1160 = vmax.f32 %v1110, 0.0
      %v1161 = vmax.f32 %v1111, 0.0
      %v1162 = vmax.f32 %v1112, 0.0
      %v1163 = vmax.f32 %v1113, 0.0
      %v1164 = vmax.f32 %v1114, 0.0
      %v1165 = vmax.f32 %v1115, 0.0
      %v1166 = vmax.f32 %v1116, 0.0
      %v1167 = vmax.f32 %v1117, 0.0
      %v1168 = vmax.f32 %v1118, 0.0
      %v1169 = vmax.f32 %v1119, 0.0
      %v1170 = vmax.f32 %v1120, 0.0
      %v1171 = vmax.f32 %v1121, 0.0
      %v1172 = vmax.f32 %v1122, 0.0
      %v1173 = vmax.f32 %v1123, 0.0
      %v1174 = vmax.f32 %v1124, 0.0
      %v1175 = vld [vmem:[%s4] sm:$0xff]
      %v1176 = vld [vmem:[%s4 + $0x8] sm:$0xff]
      %v1177 = vld [vmem:[%s4 + $0x10] sm:$0xff]
      %v1178 = vld [vmem:[%s4 + $0x18] sm:$0xff]
      %v1179 = vld [vmem:[%s4 + $0x20] sm:$0xff]
      %v1180 = vld [vmem:[%s4 + $0x28] sm:$0xff]
      %v1181 = vld [vmem:[%s4 + $0x30] sm:$0xff]
      %v1182 = vld [vmem:[%s4 + $0x38] sm:$0xff]
      %v1183 = vld [vmem:[%s4 + $0x40] sm:$0xff]
      %v1184 = vld [vmem:[%s4 + $0x48] sm:$0xff]
      %v1185 = vld [vmem:[%s4 + $0x50] sm:$0xff]
      %v1186 = vld [vmem:[%s4 + $0x58] sm:$0xff]
      %v1187 = vld [vmem:[%s4 + $0x60] sm:$0xff]
      %v1188 = vld [vmem:[%s4 + $0x68] sm:$0xff]
      %v1189 = vld [vmem:[%s4 + $0x70] sm:$0xff]
      %v1190 = vld [vmem:[%s4 + $0x78] sm:$0xff]
      %v1191 = vld [vmem:[%s4 + $0x80] sm:$0xff]
      %v1192 = vld [vmem:[%s4 + $0x88] sm:$0xff]
      %v1193 = vld [vmem:[%s4 + $0x90] sm:$0xff]
      %v1194 = vld [vmem:[%s4 + $0x98] sm:$0xff]
      %v1195 = vld [vmem:[%s4 + $0xa0] sm:$0xff]
      %v1196 = vld [vmem:[%s4 + $0xa8] sm:$0xff]
      %v1197 = vld [vmem:[%s4 + $0xb0] sm:$0xff]
      %v1198 = vld [vmem:[%s4 + $0xb8] sm:$0xff]
      %v1199 = vld [vmem:[%s4 + $0xc0] sm:$0xff]
      %v1200 = vld [vmem:[%s4 + $0xc8] sm:$0xff]
      %v1201 = vld [vmem:[%s4 + $0xd0] sm:$0xff]
      %v1202 = vld [vmem:[%s4 + $0xd8] sm:$0xff]
      %v1203 = vld [vmem:[%s4 + $0xe0] sm:$0xff]
      %v1204 = vld [vmem:[%s4 + $0xe8] sm:$0xff]
      %v1205 = vld [vmem:[%s4 + $0xf0] sm:$0xff]
      %v1206 = vld [vmem:[%s4 + $0xf8] sm:$0xff]
      %v1207 = vld [vmem:[%s4 + $0x100] sm:$0xff]
      %v1208 = vld [vmem:[%s4 + $0x108] sm:$0xff]
      %v1209 = vld [vmem:[%s4 + $0x110] sm:$0xff]
      %v1210 = vld [vmem:[%s4 + $0x118] sm:$0xff]
      %v1211 = vld [vmem:[%s4 + $0x120] sm:$0xff]
      %v1212 = vld [vmem:[%s4 + $0x128] sm:$0xff]
      %v1213 = vld [vmem:[%s4 + $0x130] sm:$0xff]
      %v1214 = vld [vmem:[%s4 + $0x138] sm:$0xff]
      %v1215 = vld [vmem:[%s4 + $0x140] sm:$0xff]
      %v1216 = vld [vmem:[%s4 + $0x148] sm:$0xff]
      %v1217 = vld [vmem:[%s4 + $0x150] sm:$0xff]
      %v1218 = vld [vmem:[%s4 + $0x158] sm:$0xff]
      %v1219 = vld [vmem:[%s4 + $0x160] sm:$0xff]
      %v1220 = vld [vmem:[%s4 + $0x168] sm:$0xff]
      %v1221 = vld [vmem:[%s4 + $0x170] sm:$0xff]
      %v1222 = vld [vmem:[%s4 + $0x178] sm:$0xff]
      %v1223 = vld [vmem:[%s4 + $0x180] sm:$0xff]
      %v1224 = vld [vmem:[%s4 + $0x188] sm:$0xff]
      %v1225 = vld [vmem:[%s5] sm:$0x3]
      %v1227 = vlaneseq
      %v1228 = vshrl.u32 %v1227, 7
      %v1229 = vsub.s32 0, %v1228
      %v1230 = vrot.slane %v1225, %v1229
      %v1231 = vlaneseq
      %v1232 = vshrl.u32 %v1231, 7
      %v1233 = vsub.s32 1, %v1232
      %v1234 = vrot.slane %v1225, %v1233
      %vm1237 = vcmask 588800
      %v1239 = vsel %vm1237, %v1126, 0
      %v1242 = vsel %vm1237, %v1128, 0
      %v1245 = vsel %vm1237, %v1130, 0
      %v1248 = vsel %vm1237, %v1132, 0
      %v1251 = vsel %vm1237, %v1134, 0
      %v1254 = vsel %vm1237, %v1136, 0
      %v1257 = vsel %vm1237, %v1138, 0
      %v1260 = vsel %vm1237, %v1140, 0
      %v1263 = vsel %vm1237, %v1142, 0
      %v1266 = vsel %vm1237, %v1144, 0
      %v1269 = vsel %vm1237, %v1146, 0
      %v1272 = vsel %vm1237, %v1148, 0
      %v1275 = vsel %vm1237, %v1150, 0
      %v1278 = vsel %vm1237, %v1152, 0
      %v1281 = vsel %vm1237, %v1154, 0
      %v1284 = vsel %vm1237, %v1156, 0
      %v1287 = vsel %vm1237, %v1158, 0
      %v1290 = vsel %vm1237, %v1160, 0
      %v1293 = vsel %vm1237, %v1162, 0
      %v1296 = vsel %vm1237, %v1164, 0
      %v1299 = vsel %vm1237, %v1166, 0
      %v1302 = vsel %vm1237, %v1168, 0
      %v1305 = vsel %vm1237, %v1170, 0
      %v1308 = vsel %vm1237, %v1172, 0
      %v1311 = vsel %vm1237, %v1174, 0
      %1313 = vmatprep.subr.mxu0 %v1176
      %1314 = vmatpush1.msra.mxu0 %v1175
      %1315 = vmatprep.subr.mxu0 %v1178
      %1316 = vmatpush1.msra.mxu0 %v1177
      %1317 = vmatprep.subr.mxu0 %v1180
      %1318 = vmatpush1.msra.mxu0 %v1179
      %1319 = vmatprep.subr.mxu0 %v1182
      %1320 = vmatpush1.msra.mxu0 %v1181
      %1321 = vmatprep.subr.mxu0 %v1184
      %1322 = vmatpush1.msra.mxu0 %v1183
      %1323 = vmatprep.subr.mxu0 %v1186
      %1324 = vmatpush1.msra.mxu0 %v1185
      %1325 = vmatprep.subr.mxu0 %v1188
      %1326 = vmatpush1.msra.mxu0 %v1187
      %1327 = vmatprep.subr.mxu0 %v1190
      %1328 = vmatpush1.msra.mxu0 %v1189
      %1329 = vmatprep.subr.mxu0 %v1192
      %1330 = vmatpush1.msra.mxu0 %v1191
      %1331 = vmatprep.subr.mxu0 %v1194
      %1332 = vmatpush1.msra.mxu0 %v1193
      %1333 = vmatprep.subr.mxu0 %v1196
      %1334 = vmatpush1.msra.mxu0 %v1195
      %1335 = vmatprep.subr.mxu0 %v1198
      %1336 = vmatpush1.msra.mxu0 %v1197
      %1337 = vmatprep.subr.mxu0 %v1200
      %1338 = vmatpush1.msra.mxu0 %v1199
      %1339 = vmatprep.subr.mxu0 %v1202
      %1340 = vmatpush1.msra.mxu0 %v1201
      %1341 = vmatprep.subr.mxu0 %v1204
      %1342 = vmatpush1.msra.mxu0 %v1203
      %1343 = vmatprep.subr.mxu0 %v1206
      %1344 = vmatpush1.msra.mxu0 %v1205
      %1345 = vmatprep.subr.mxu0 %v1208
      %1346 = vmatpush1.msra.mxu0 %v1207
      %1347 = vmatprep.subr.mxu0 %v1210
      %1348 = vmatpush1.msra.mxu0 %v1209
      %1349 = vmatprep.subr.mxu0 %v1212
      %1350 = vmatpush1.msra.mxu0 %v1211
      %1351 = vmatprep.subr.mxu0 %v1214
      %1352 = vmatpush1.msra.mxu0 %v1213
      %1353 = vmatprep.subr.mxu0 %v1216
      %1354 = vmatpush1.msra.mxu0 %v1215
      %1355 = vmatprep.subr.mxu0 %v1218
      %1356 = vmatpush1.msra.mxu0 %v1217
      %1357 = vmatprep.subr.mxu0 %v1220
      %1358 = vmatpush1.msra.mxu0 %v1219
      %1359 = vmatprep.subr.mxu0 %v1222
      %1360 = vmatpush1.msra.mxu0 %v1221
      %1361 = vmatprep.subr.mxu0 %v1224
      %1362 = vmatpush1.msra.mxu0 %v1223
      %1363 = vmatprep.subr.mxu0 0.0
      %1364 = vmatpush1.msra.mxu0 0.0
      %1365 = vmatprep.subr.mxu0 0.0
      %1366 = vmatpush1.msra.mxu0 0.0
      %1367 = vmatprep.subr.mxu0 0.0
      %1368 = vmatpush1.msra.mxu0 0.0
      %1369 = vmatprep.subr.mxu0 0.0
      %1370 = vmatpush1.msra.mxu0 0.0
      %1371 = vmatprep.subr.mxu0 0.0
      %1372 = vmatpush1.msra.mxu0 0.0
      %1373 = vmatprep.subr.mxu0 0.0
      %1374 = vmatpush1.msra.mxu0 0.0
      %1375 = vmatprep.subr.mxu0 0.0
      %1376 = vmatpush1.msra.mxu0 0.0
      %1377 = vmatprep.mubr.f32.mxu0 %v1239
      %1378 = vmatmul.mubr.f32.gmra.mrb[0].mxu0 %v1125
      %v1379 = vpop.f32.mrb[0].mxu0
      %v1380 = vadd.f32 %v1230, %v1379
      %v1381 = vpop.f32.mrb[0].mxu0
      %v1382 = vadd.f32 %v1234, %v1381
      %1383 = vmatprep.mubr.f32.mxu0 %v1242
      %1384 = vmatmul.mubr.f32.gmra.mrb[0].mxu0 %v1127
      %v1385 = vpop.f32.mrb[0].mxu0
      %v1386 = vadd.f32 %v1230, %v1385
      %v1387 = vpop.f32.mrb[0].mxu0
      %v1388 = vadd.f32 %v1234, %v1387
      %1389 = vmatprep.mubr.f32.mxu0 %v1245
      %1390 = vmatmul.mubr.f32.gmra.mrb[0].mxu0 %v1129
      %v1391 = vpop.f32.mrb[0].mxu0
      %v1392 = vadd.f32 %v1230, %v1391
      %v1393 = vpop.f32.mrb[0].mxu0
      %v1394 = vadd.f32 %v1234, %v1393
      %1395 = vmatprep.mubr.f32.mxu0 %v1248
      %1396 = vmatmul.mubr.f32.gmra.mrb[0].mxu0 %v1131
      %v1397 = vpop.f32.mrb[0].mxu0
      %v1398 = vadd.f32 %v1230, %v1397
      %v1399 = vpop.f32.mrb[0].mxu0
      %v1400 = vadd.f32 %v1234, %v1399
      %1401 = vmatprep.mubr.f32.mxu0 %v1251
      %1402 = vmatmul.mubr.f32.gmra.mrb[0].mxu0 %v1133
      %v1403 = vpop.f32.mrb[0].mxu0
      %v1404 = vadd.f32 %v1230, %v1403
      %v1405 = vpop.f32.mrb[0].mxu0
      %v1406 = vadd.f32 %v1234, %v1405
      %1407 = vmatprep.mubr.f32.mxu0 %v1254
      %1408 = vmatmul.mubr.f32.gmra.mrb[0].mxu0 %v1135
      %v1409 = vpop.f32.mrb[0].mxu0
      %v1410 = vadd.f32 %v1230, %v1409
      %v1411 = vpop.f32.mrb[0].mxu0
      %v1412 = vadd.f32 %v1234, %v1411
      %1413 = vmatprep.mubr.f32.mxu0 %v1257
      %1414 = vmatmul.mubr.f32.gmra.mrb[0].mxu0 %v1137
      %v1415 = vpop.f32.mrb[0].mxu0
      %v1416 = vadd.f32 %v1230, %v1415
      %v1417 = vpop.f32.mrb[0].mxu0
      %v1418 = vadd.f32 %v1234, %v1417
      %1419 = vmatprep.mubr.f32.mxu0 %v1260
      %1420 = vmatmul.mubr.f32.gmra.mrb[0].mxu0 %v1139
      %v1421 = vpop.f32.mrb[0].mxu0
      %v1422 = vadd.f32 %v1230, %v1421
      %v1423 = vpop.f32.mrb[0].mxu0
      %v1424 = vadd.f32 %v1234, %v1423
      %1425 = vmatprep.mubr.f32.mxu0 %v1263
      %1426 = vmatmul.mubr.f32.gmra.mrb[0].mxu0 %v1141
      %v1427 = vpop.f32.mrb[0].mxu0
      %v1428 = vadd.f32 %v1230, %v1427
      %v1429 = vpop.f32.mrb[0].mxu0
      %v1430 = vadd.f32 %v1234, %v1429
      %1431 = vmatprep.mubr.f32.mxu0 %v1266
      %1432 = vmatmul.mubr.f32.gmra.mrb[0].mxu0 %v1143
      %v1433 = vpop.f32.mrb[0].mxu0
      %v1434 = vadd.f32 %v1230, %v1433
      %v1435 = vpop.f32.mrb[0].mxu0
      %v1436 = vadd.f32 %v1234, %v1435
      %1437 = vmatprep.mubr.f32.mxu0 %v1269
      %1438 = vmatmul.mubr.f32.gmra.mrb[0].mxu0 %v1145
      %v1439 = vpop.f32.mrb[0].mxu0
      %v1440 = vadd.f32 %v1230, %v1439
      %v1441 = vpop.f32.mrb[0].mxu0
      %v1442 = vadd.f32 %v1234, %v1441
      %1443 = vmatprep.mubr.f32.mxu0 %v1272
      %1444 = vmatmul.mubr.f32.gmra.mrb[0].mxu0 %v1147
      %v1445 = vpop.f32.mrb[0].mxu0
      %v1446 = vadd.f32 %v1230, %v1445
      %v1447 = vpop.f32.mrb[0].mxu0
      %v1448 = vadd.f32 %v1234, %v1447
      %1449 = vmatprep.mubr.f32.mxu0 %v1275
      %1450 = vmatmul.mubr.f32.gmra.mrb[0].mxu0 %v1149
      %v1451 = vpop.f32.mrb[0].mxu0
      %v1452 = vadd.f32 %v1230, %v1451
      %v1453 = vpop.f32.mrb[0].mxu0
      %v1454 = vadd.f32 %v1234, %v1453
      %1455 = vmatprep.mubr.f32.mxu0 %v1278
      %1456 = vmatmul.mubr.f32.gmra.mrb[0].mxu0 %v1151
      %v1457 = vpop.f32.mrb[0].mxu0
      %v1458 = vadd.f32 %v1230, %v1457
      %v1459 = vpop.f32.mrb[0].mxu0
      %v1460 = vadd.f32 %v1234, %v1459
      %1461 = vmatprep.mubr.f32.mxu0 %v1281
      %1462 = vmatmul.mubr.f32.gmra.mrb[0].mxu0 %v1153
      %v1463 = vpop.f32.mrb[0].mxu0
      %v1464 = vadd.f32 %v1230, %v1463
      %v1465 = vpop.f32.mrb[0].mxu0
      %v1466 = vadd.f32 %v1234, %v1465
      %1467 = vmatprep.mubr.f32.mxu0 %v1284
      %1468 = vmatmul.mubr.f32.gmra.mrb[0].mxu0 %v1155
      %v1469 = vpop.f32.mrb[0].mxu0
      %v1470 = vadd.f32 %v1230, %v1469
      %v1471 = vpop.f32.mrb[0].mxu0
      %v1472 = vadd.f32 %v1234, %v1471
      %1473 = vmatprep.mubr.f32.mxu0 %v1287
      %1474 = vmatmul.mubr.f32.gmra.mrb[0].mxu0 %v1157
      %v1475 = vpop.f32.mrb[0].mxu0
      %v1476 = vadd.f32 %v1230, %v1475
      %v1477 = vpop.f32.mrb[0].mxu0
      %v1478 = vadd.f32 %v1234, %v1477
      %1479 = vmatprep.mubr.f32.mxu0 %v1290
      %1480 = vmatmul.mubr.f32.gmra.mrb[0].mxu0 %v1159
      %v1481 = vpop.f32.mrb[0].mxu0
      %v1482 = vadd.f32 %v1230, %v1481
      %v1483 = vpop.f32.mrb[0].mxu0
      %v1484 = vadd.f32 %v1234, %v1483
      %1485 = vmatprep.mubr.f32.mxu0 %v1293
      %1486 = vmatmul.mubr.f32.gmra.mrb[0].mxu0 %v1161
      %v1487 = vpop.f32.mrb[0].mxu0
      %v1488 = vadd.f32 %v1230, %v1487
      %v1489 = vpop.f32.mrb[0].mxu0
      %v1490 = vadd.f32 %v1234, %v1489
      %1491 = vmatprep.mubr.f32.mxu0 %v1296
      %1492 = vmatmul.mubr.f32.gmra.mrb[0].mxu0 %v1163
      %v1493 = vpop.f32.mrb[0].mxu0
      %v1494 = vadd.f32 %v1230, %v1493
      %v1495 = vpop.f32.mrb[0].mxu0
      %v1496 = vadd.f32 %v1234, %v1495
      %1497 = vmatprep.mubr.f32.mxu0 %v1299
      %1498 = vmatmul.mubr.f32.gmra.mrb[0].mxu0 %v1165
      %v1499 = vpop.f32.mrb[0].mxu0
      %v1500 = vadd.f32 %v1230, %v1499
      %v1501 = vpop.f32.mrb[0].mxu0
      %v1502 = vadd.f32 %v1234, %v1501
      %1503 = vmatprep.mubr.f32.mxu0 %v1302
      %1504 = vmatmul.mubr.f32.gmra.mrb[0].mxu0 %v1167
      %v1505 = vpop.f32.mrb[0].mxu0
      %v1506 = vadd.f32 %v1230, %v1505
      %v1507 = vpop.f32.mrb[0].mxu0
      %v1508 = vadd.f32 %v1234, %v1507
      %1509 = vmatprep.mubr.f32.mxu0 %v1305
      %1510 = vmatmul.mubr.f32.gmra.mrb[0].mxu0 %v1169
      %v1511 = vpop.f32.mrb[0].mxu0
      %v1512 = vadd.f32 %v1230, %v1511
      %v1513 = vpop.f32.mrb[0].mxu0
      %v1514 = vadd.f32 %v1234, %v1513
      %1515 = vmatprep.mubr.f32.mxu0 %v1308
      %1516 = vmatmul.mubr.f32.gmra.mrb[0].mxu0 %v1171
      %v1517 = vpop.f32.mrb[0].mxu0
      %v1518 = vadd.f32 %v1230, %v1517
      %v1519 = vpop.f32.mrb[0].mxu0
      %v1520 = vadd.f32 %v1234, %v1519
      %1521 = vmatprep.mubr.f32.mxu0 %v1311
      %1522 = vmatmul.mubr.f32.gmra.mrb[0].mxu0 %v1173
      %v1523 = vpop.f32.mrb[0].mxu0
      %v1524 = vadd.f32 %v1230, %v1523
      %v1525 = vpop.f32.mrb[0].mxu0
      %v1526 = vadd.f32 %v1234, %v1525
      %1527 = vdwg.mxu0
      %1528 = vset.pattern.permute.xlu0 2
      %1529 = vperm.xlu0 %1528, %v775
      %v1530 = vpop.permute.xlu0 %1529
      %1532 = vset.pattern.permute.xlu0 2
      %1533 = vperm.xlu0 %1532, %v776
      %v1534 = vpop.permute.xlu0 %1533
      %1536 = vset.pattern.permute.xlu0 2
      %1537 = vperm.xlu0 %1536, %v777
      %v1538 = vpop.permute.xlu0 %1537
      %1540 = vset.pattern.permute.xlu0 2
      %1541 = vperm.xlu0 %1540, %v778
      %v1542 = vpop.permute.xlu0 %1541
      %1544 = vset.pattern.permute.xlu0 2
      %1545 = vperm.xlu0 %1544, %v779
      %v1546 = vpop.permute.xlu0 %1545
      %1548 = vset.pattern.permute.xlu0 2
      %1549 = vperm.xlu0 %1548, %v780
      %v1550 = vpop.permute.xlu0 %1549
      %1552 = vset.pattern.permute.xlu0 2
      %1553 = vperm.xlu0 %1552, %v781
      %v1554 = vpop.permute.xlu0 %1553
      %1556 = vset.pattern.permute.xlu0 2
      %1557 = vperm.xlu0 %1556, %v782
      %v1558 = vpop.permute.xlu0 %1557
      %1560 = vset.pattern.permute.xlu0 2
      %1561 = vperm.xlu0 %1560, %v783
      %v1562 = vpop.permute.xlu0 %1561
      %1564 = vset.pattern.permute.xlu0 2
      %1565 = vperm.xlu0 %1564, %v784
      %v1566 = vpop.permute.xlu0 %1565
      %1568 = vset.pattern.permute.xlu0 2
      %1569 = vperm.xlu0 %1568, %v785
      %v1570 = vpop.permute.xlu0 %1569
      %1572 = vset.pattern.permute.xlu0 2
      %1573 = vperm.xlu0 %1572, %v786
      %v1574 = vpop.permute.xlu0 %1573
      %1576 = vset.pattern.permute.xlu0 2
      %1577 = vperm.xlu0 %1576, %v787
      %v1578 = vpop.permute.xlu0 %1577
      %1580 = vset.pattern.permute.xlu0 2
      %1581 = vperm.xlu0 %1580, %v788
      %v1582 = vpop.permute.xlu0 %1581
      %1584 = vset.pattern.permute.xlu0 2
      %1585 = vperm.xlu0 %1584, %v789
      %v1586 = vpop.permute.xlu0 %1585
      %1588 = vset.pattern.permute.xlu0 2
      %1589 = vperm.xlu0 %1588, %v790
      %v1590 = vpop.permute.xlu0 %1589
      %1592 = vset.pattern.permute.xlu0 2
      %1593 = vperm.xlu0 %1592, %v791
      %v1594 = vpop.permute.xlu0 %1593
      %1596 = vset.pattern.permute.xlu0 2
      %1597 = vperm.xlu0 %1596, %v792
      %v1598 = vpop.permute.xlu0 %1597
      %1600 = vset.pattern.permute.xlu0 2
      %1601 = vperm.xlu0 %1600, %v793
      %v1602 = vpop.permute.xlu0 %1601
      %1604 = vset.pattern.permute.xlu0 2
      %1605 = vperm.xlu0 %1604, %v794
      %v1606 = vpop.permute.xlu0 %1605
      %1608 = vset.pattern.permute.xlu0 2
      %1609 = vperm.xlu0 %1608, %v795
      %v1610 = vpop.permute.xlu0 %1609
      %1612 = vset.pattern.permute.xlu0 2
      %1613 = vperm.xlu0 %1612, %v796
      %v1614 = vpop.permute.xlu0 %1613
      %1616 = vset.pattern.permute.xlu0 2
      %1617 = vperm.xlu0 %1616, %v797
      %v1618 = vpop.permute.xlu0 %1617
      %1620 = vset.pattern.permute.xlu0 2
      %1621 = vperm.xlu0 %1620, %v798
      %v1622 = vpop.permute.xlu0 %1621
      %1624 = vset.pattern.permute.xlu0 2
      %1625 = vperm.xlu0 %1624, %v799
      %v1626 = vpop.permute.xlu0 %1625
      %v1628 = vmul.f32 %v1380, %v1530
      %v1629 = vmul.f32 %v1382, %v1530
      %v1630 = vmul.f32 %v1386, %v1534
      %v1631 = vmul.f32 %v1388, %v1534
      %v1632 = vmul.f32 %v1392, %v1538
      %v1633 = vmul.f32 %v1394, %v1538
      %v1634 = vmul.f32 %v1398, %v1542
      %v1635 = vmul.f32 %v1400, %v1542
      %v1636 = vmul.f32 %v1404, %v1546
      %v1637 = vmul.f32 %v1406, %v1546
      %v1638 = vmul.f32 %v1410, %v1550
      %v1639 = vmul.f32 %v1412, %v1550
      %v1640 = vmul.f32 %v1416, %v1554
      %v1641 = vmul.f32 %v1418, %v1554
      %v1642 = vmul.f32 %v1422, %v1558
      %v1643 = vmul.f32 %v1424, %v1558
      %v1644 = vmul.f32 %v1428, %v1562
      %v1645 = vmul.f32 %v1430, %v1562
      %v1646 = vmul.f32 %v1434, %v1566
      %v1647 = vmul.f32 %v1436, %v1566
      %v1648 = vmul.f32 %v1440, %v1570
      %v1649 = vmul.f32 %v1442, %v1570
      %v1650 = vmul.f32 %v1446, %v1574
      %v1651 = vmul.f32 %v1448, %v1574
      %v1652 = vmul.f32 %v1452, %v1578
      %v1653 = vmul.f32 %v1454, %v1578
      %v1654 = vmul.f32 %v1458, %v1582
      %v1655 = vmul.f32 %v1460, %v1582
      %v1656 = vmul.f32 %v1464, %v1586
      %v1657 = vmul.f32 %v1466, %v1586
      %v1658 = vmul.f32 %v1470, %v1590
      %v1659 = vmul.f32 %v1472, %v1590
      %v1660 = vmul.f32 %v1476, %v1594
      %v1661 = vmul.f32 %v1478, %v1594
      %v1662 = vmul.f32 %v1482, %v1598
      %v1663 = vmul.f32 %v1484, %v1598
      %v1664 = vmul.f32 %v1488, %v1602
      %v1665 = vmul.f32 %v1490, %v1602
      %v1666 = vmul.f32 %v1494, %v1606
      %v1667 = vmul.f32 %v1496, %v1606
      %v1668 = vmul.f32 %v1500, %v1610
      %v1669 = vmul.f32 %v1502, %v1610
      %v1670 = vmul.f32 %v1506, %v1614
      %v1671 = vmul.f32 %v1508, %v1614
      %v1672 = vmul.f32 %v1512, %v1618
      %v1673 = vmul.f32 %v1514, %v1618
      %v1674 = vmul.f32 %v1518, %v1622
      %v1675 = vmul.f32 %v1520, %v1622
      %v1676 = vmul.f32 %v1524, %v1626
      %v1677 = vmul.f32 %v1526, %v1626
      %1678 = vset.pattern.permute.xlu0 3
      %1679 = vperm.xlu0 %1678, %v775
      %v1680 = vpop.permute.xlu0 %1679
      %1682 = vset.pattern.permute.xlu0 3
      %1683 = vperm.xlu0 %1682, %v776
      %v1684 = vpop.permute.xlu0 %1683
      %1686 = vset.pattern.permute.xlu0 3
      %1687 = vperm.xlu0 %1686, %v777
      %v1688 = vpop.permute.xlu0 %1687
      %1690 = vset.pattern.permute.xlu0 3
      %1691 = vperm.xlu0 %1690, %v778
      %v1692 = vpop.permute.xlu0 %1691
      %1694 = vset.pattern.permute.xlu0 3
      %1695 = vperm.xlu0 %1694, %v779
      %v1696 = vpop.permute.xlu0 %1695
      %1698 = vset.pattern.permute.xlu0 3
      %1699 = vperm.xlu0 %1698, %v780
      %v1700 = vpop.permute.xlu0 %1699
      %1702 = vset.pattern.permute.xlu0 3
      %1703 = vperm.xlu0 %1702, %v781
      %v1704 = vpop.permute.xlu0 %1703
      %1706 = vset.pattern.permute.xlu0 3
      %1707 = vperm.xlu0 %1706, %v782
      %v1708 = vpop.permute.xlu0 %1707
      %1710 = vset.pattern.permute.xlu0 3
      %1711 = vperm.xlu0 %1710, %v783
      %v1712 = vpop.permute.xlu0 %1711
      %1714 = vset.pattern.permute.xlu0 3
      %1715 = vperm.xlu0 %1714, %v784
      %v1716 = vpop.permute.xlu0 %1715
      %1718 = vset.pattern.permute.xlu0 3
      %1719 = vperm.xlu0 %1718, %v785
      %v1720 = vpop.permute.xlu0 %1719
      %1722 = vset.pattern.permute.xlu0 3
      %1723 = vperm.xlu0 %1722, %v786
      %v1724 = vpop.permute.xlu0 %1723
      %1726 = vset.pattern.permute.xlu0 3
      %1727 = vperm.xlu0 %1726, %v787
      %v1728 = vpop.permute.xlu0 %1727
      %1730 = vset.pattern.permute.xlu0 3
      %1731 = vperm.xlu0 %1730, %v788
      %v1732 = vpop.permute.xlu0 %1731
      %1734 = vset.pattern.permute.xlu0 3
      %1735 = vperm.xlu0 %1734, %v789
      %v1736 = vpop.permute.xlu0 %1735
      %1738 = vset.pattern.permute.xlu0 3
      %1739 = vperm.xlu0 %1738, %v790
      %v1740 = vpop.permute.xlu0 %1739
      %1742 = vset.pattern.permute.xlu0 3
      %1743 = vperm.xlu0 %1742, %v791
      %v1744 = vpop.permute.xlu0 %1743
      %1746 = vset.pattern.permute.xlu0 3
      %1747 = vperm.xlu0 %1746, %v792
      %v1748 = vpop.permute.xlu0 %1747
      %1750 = vset.pattern.permute.xlu0 3
      %1751 = vperm.xlu0 %1750, %v793
      %v1752 = vpop.permute.xlu0 %1751
      %1754 = vset.pattern.permute.xlu0 3
      %1755 = vperm.xlu0 %1754, %v794
      %v1756 = vpop.permute.xlu0 %1755
      %1758 = vset.pattern.permute.xlu0 3
      %1759 = vperm.xlu0 %1758, %v795
      %v1760 = vpop.permute.xlu0 %1759
      %1762 = vset.pattern.permute.xlu0 3
      %1763 = vperm.xlu0 %1762, %v796
      %v1764 = vpop.permute.xlu0 %1763
      %1766 = vset.pattern.permute.xlu0 3
      %1767 = vperm.xlu0 %1766, %v797
      %v1768 = vpop.permute.xlu0 %1767
      %1770 = vset.pattern.permute.xlu0 3
      %1771 = vperm.xlu0 %1770, %v798
      %v1772 = vpop.permute.xlu0 %1771
      %1774 = vset.pattern.permute.xlu0 3
      %1775 = vperm.xlu0 %1774, %v799
      %v1776 = vpop.permute.xlu0 %1775
      %v1778 = vadd.f32 %v1628, %v1680
      %v1779 = vadd.f32 %v1629, %v1680
      %v1780 = vadd.f32 %v1630, %v1684
      %v1781 = vadd.f32 %v1631, %v1684
      %v1782 = vadd.f32 %v1632, %v1688
      %v1783 = vadd.f32 %v1633, %v1688
      %v1784 = vadd.f32 %v1634, %v1692
      %v1785 = vadd.f32 %v1635, %v1692
      %v1786 = vadd.f32 %v1636, %v1696
      %v1787 = vadd.f32 %v1637, %v1696
      %v1788 = vadd.f32 %v1638, %v1700
      %v1789 = vadd.f32 %v1639, %v1700
      %v1790 = vadd.f32 %v1640, %v1704
      %v1791 = vadd.f32 %v1641, %v1704
      %v1792 = vadd.f32 %v1642, %v1708
      %v1793 = vadd.f32 %v1643, %v1708
      %v1794 = vadd.f32 %v1644, %v1712
      %v1795 = vadd.f32 %v1645, %v1712
      %v1796 = vadd.f32 %v1646, %v1716
      %v1797 = vadd.f32 %v1647, %v1716
      %v1798 = vadd.f32 %v1648, %v1720
      %v1799 = vadd.f32 %v1649, %v1720
      %v1800 = vadd.f32 %v1650, %v1724
      %v1801 = vadd.f32 %v1651, %v1724
      %v1802 = vadd.f32 %v1652, %v1728
      %v1803 = vadd.f32 %v1653, %v1728
      %v1804 = vadd.f32 %v1654, %v1732
      %v1805 = vadd.f32 %v1655, %v1732
      %v1806 = vadd.f32 %v1656, %v1736
      %v1807 = vadd.f32 %v1657, %v1736
      %v1808 = vadd.f32 %v1658, %v1740
      %v1809 = vadd.f32 %v1659, %v1740
      %v1810 = vadd.f32 %v1660, %v1744
      %v1811 = vadd.f32 %v1661, %v1744
      %v1812 = vadd.f32 %v1662, %v1748
      %v1813 = vadd.f32 %v1663, %v1748
      %v1814 = vadd.f32 %v1664, %v1752
      %v1815 = vadd.f32 %v1665, %v1752
      %v1816 = vadd.f32 %v1666, %v1756
      %v1817 = vadd.f32 %v1667, %v1756
      %v1818 = vadd.f32 %v1668, %v1760
      %v1819 = vadd.f32 %v1669, %v1760
      %v1820 = vadd.f32 %v1670, %v1764
      %v1821 = vadd.f32 %v1671, %v1764
      %v1822 = vadd.f32 %v1672, %v1768
      %v1823 = vadd.f32 %v1673, %v1768
      %v1824 = vadd.f32 %v1674, %v1772
      %v1825 = vadd.f32 %v1675, %v1772
      %v1826 = vadd.f32 %v1676, %v1776
      %v1827 = vadd.f32 %v1677, %v1776
      %v1828 = vmax.f32 %v1778, 0.0
      %v1829 = vmax.f32 %v1779, 0.0
      %v1830 = vmax.f32 %v1780, 0.0
      %v1831 = vmax.f32 %v1781, 0.0
      %v1832 = vmax.f32 %v1782, 0.0
      %v1833 = vmax.f32 %v1783, 0.0
      %v1834 = vmax.f32 %v1784, 0.0
      %v1835 = vmax.f32 %v1785, 0.0
      %v1836 = vmax.f32 %v1786, 0.0
      %v1837 = vmax.f32 %v1787, 0.0
      %v1838 = vmax.f32 %v1788, 0.0
      %v1839 = vmax.f32 %v1789, 0.0
      %v1840 = vmax.f32 %v1790, 0.0
      %v1841 = vmax.f32 %v1791, 0.0
      %v1842 = vmax.f32 %v1792, 0.0
      %v1843 = vmax.f32 %v1793, 0.0
      %v1844 = vmax.f32 %v1794, 0.0
      %v1845 = vmax.f32 %v1795, 0.0
      %v1846 = vmax.f32 %v1796, 0.0
      %v1847 = vmax.f32 %v1797, 0.0
      %v1848 = vmax.f32 %v1798, 0.0
      %v1849 = vmax.f32 %v1799, 0.0
      %v1850 = vmax.f32 %v1800, 0.0
      %v1851 = vmax.f32 %v1801, 0.0
      %v1852 = vmax.f32 %v1802, 0.0
      %v1853 = vmax.f32 %v1803, 0.0
      %v1854 = vmax.f32 %v1804, 0.0
      %v1855 = vmax.f32 %v1805, 0.0
      %v1856 = vmax.f32 %v1806, 0.0
      %v1857 = vmax.f32 %v1807, 0.0
      %v1858 = vmax.f32 %v1808, 0.0
      %v1859 = vmax.f32 %v1809, 0.0
      %v1860 = vmax.f32 %v1810, 0.0
      %v1861 = vmax.f32 %v1811, 0.0
      %v1862 = vmax.f32 %v1812, 0.0
      %v1863 = vmax.f32 %v1813, 0.0
      %v1864 = vmax.f32 %v1814, 0.0
      %v1865 = vmax.f32 %v1815, 0.0
      %v1866 = vmax.f32 %v1816, 0.0
      %v1867 = vmax.f32 %v1817, 0.0
      %v1868 = vmax.f32 %v1818, 0.0
      %v1869 = vmax.f32 %v1819, 0.0
      %v1870 = vmax.f32 %v1820, 0.0
      %v1871 = vmax.f32 %v1821, 0.0
      %v1872 = vmax.f32 %v1822, 0.0
      %v1873 = vmax.f32 %v1823, 0.0
      %v1874 = vmax.f32 %v1824, 0.0
      %v1875 = vmax.f32 %v1825, 0.0
      %v1876 = vmax.f32 %v1826, 0.0
      %v1877 = vmax.f32 %v1827, 0.0
      %v1878 = vld [vmem:[%s6] sm:$0xff]
      %v1879 = vld [vmem:[%s6 + $0x8] sm:$0xff]
      %v1880 = vld [vmem:[%s6 + $0x10] sm:$0xff]
      %v1881 = vld [vmem:[%s6 + $0x18] sm:$0xff]
      %v1882 = vld [vmem:[%s6 + $0x20] sm:$0xff]
      %v1883 = vld [vmem:[%s6 + $0x28] sm:$0xff]
      %v1884 = vld [vmem:[%s6 + $0x30] sm:$0xff]
      %v1885 = vld [vmem:[%s6 + $0x38] sm:$0xff]
      %v1886 = vld [vmem:[%s6 + $0x40] sm:$0xff]
      %v1887 = vld [vmem:[%s6 + $0x48] sm:$0xff]
      %v1888 = vld [vmem:[%s6 + $0x50] sm:$0xff]
      %v1889 = vld [vmem:[%s6 + $0x58] sm:$0xff]
      %v1890 = vld [vmem:[%s6 + $0x60] sm:$0xff]
      %v1891 = vld [vmem:[%s6 + $0x68] sm:$0xff]
      %v1892 = vld [vmem:[%s6 + $0x70] sm:$0xff]
      %v1893 = vld [vmem:[%s6 + $0x78] sm:$0xff]
      %v1894 = vld [vmem:[%s6 + $0x80] sm:$0xff]
      %v1895 = vld [vmem:[%s6 + $0x88] sm:$0xff]
      %v1896 = vld [vmem:[%s6 + $0x90] sm:$0xff]
      %v1897 = vld [vmem:[%s6 + $0x98] sm:$0xff]
      %v1898 = vld [vmem:[%s6 + $0xa0] sm:$0xff]
      %v1899 = vld [vmem:[%s6 + $0xa8] sm:$0xff]
      %v1900 = vld [vmem:[%s6 + $0xb0] sm:$0xff]
      %v1901 = vld [vmem:[%s6 + $0xb8] sm:$0xff]
      %v1902 = vld [vmem:[%s6 + $0xc0] sm:$0xff]
      %v1903 = vld [vmem:[%s6 + $0xc8] sm:$0xff]
      %v1904 = vld [vmem:[%s6 + $0xd0] sm:$0xff]
      %v1905 = vld [vmem:[%s6 + $0xd8] sm:$0xff]
      %v1906 = vld [vmem:[%s6 + $0xe0] sm:$0xff]
      %v1907 = vld [vmem:[%s6 + $0xe8] sm:$0xff]
      %v1908 = vld [vmem:[%s6 + $0xf0] sm:$0xff]
      %v1909 = vld [vmem:[%s6 + $0xf8] sm:$0xff]
      %v1910 = vld [vmem:[%s6 + $0x100] sm:$0xff]
      %v1911 = vld [vmem:[%s6 + $0x108] sm:$0xff]
      %v1912 = vld [vmem:[%s6 + $0x110] sm:$0xff]
      %v1913 = vld [vmem:[%s6 + $0x118] sm:$0xff]
      %v1914 = vld [vmem:[%s6 + $0x120] sm:$0xff]
      %v1915 = vld [vmem:[%s6 + $0x128] sm:$0xff]
      %v1916 = vld [vmem:[%s6 + $0x130] sm:$0xff]
      %v1917 = vld [vmem:[%s6 + $0x138] sm:$0xff]
      %v1918 = vld [vmem:[%s6 + $0x140] sm:$0xff]
      %v1919 = vld [vmem:[%s6 + $0x148] sm:$0xff]
      %v1920 = vld [vmem:[%s6 + $0x150] sm:$0xff]
      %v1921 = vld [vmem:[%s6 + $0x158] sm:$0xff]
      %v1922 = vld [vmem:[%s6 + $0x160] sm:$0xff]
      %v1923 = vld [vmem:[%s6 + $0x168] sm:$0xff]
      %v1924 = vld [vmem:[%s6 + $0x170] sm:$0xff]
      %v1925 = vld [vmem:[%s6 + $0x178] sm:$0xff]
      %v1926 = vld [vmem:[%s6 + $0x180] sm:$0xff]
      %v1927 = vld [vmem:[%s6 + $0x188] sm:$0xff]
      %v1928 = vld [vmem:[%s7] sm:$0x3]
      %v1930 = vlaneseq
      %v1931 = vshrl.u32 %v1930, 7
      %v1932 = vsub.s32 0, %v1931
      %v1933 = vrot.slane %v1928, %v1932
      %v1934 = vlaneseq
      %v1935 = vshrl.u32 %v1934, 7
      %v1936 = vsub.s32 1, %v1935
      %v1937 = vrot.slane %v1928, %v1936
      %v1941 = vsel %vm1237, %v1829, 0
      %v1944 = vsel %vm1237, %v1831, 0
      %v1947 = vsel %vm1237, %v1833, 0
      %v1950 = vsel %vm1237, %v1835, 0
      %v1953 = vsel %vm1237, %v1837, 0
      %v1956 = vsel %vm1237, %v1839, 0
      %v1959 = vsel %vm1237, %v1841, 0
      %v1962 = vsel %vm1237, %v1843, 0
      %v1965 = vsel %vm1237, %v1845, 0
      %v1968 = vsel %vm1237, %v1847, 0
      %v1971 = vsel %vm1237, %v1849, 0
      %v1974 = vsel %vm1237, %v1851, 0
      %v1977 = vsel %vm1237, %v1853, 0
      %v1980 = vsel %vm1237, %v1855, 0
      %v1983 = vsel %vm1237, %v1857, 0
      %v1986 = vsel %vm1237, %v1859, 0
      %v1989 = vsel %vm1237, %v1861, 0
      %v1992 = vsel %vm1237, %v1863, 0
      %v1995 = vsel %vm1237, %v1865, 0
      %v1998 = vsel %vm1237, %v1867, 0
      %v2001 = vsel %vm1237, %v1869, 0
      %v2004 = vsel %vm1237, %v1871, 0
      %v2007 = vsel %vm1237, %v1873, 0
      %v2010 = vsel %vm1237, %v1875, 0
      %v2013 = vsel %vm1237, %v1877, 0
      %2015 = vmatprep.subr.mxu0 %v1879
      %2016 = vmatpush1.msra.mxu0 %v1878
      %2017 = vmatprep.subr.mxu0 %v1881
      %2018 = vmatpush1.msra.mxu0 %v1880
      %2019 = vmatprep.subr.mxu0 %v1883
      %2020 = vmatpush1.msra.mxu0 %v1882
      %2021 = vmatprep.subr.mxu0 %v1885
      %2022 = vmatpush1.msra.mxu0 %v1884
      %2023 = vmatprep.subr.mxu0 %v1887
      %2024 = vmatpush1.msra.mxu0 %v1886
      %2025 = vmatprep.subr.mxu0 %v1889
      %2026 = vmatpush1.msra.mxu0 %v1888
      %2027 = vmatprep.subr.mxu0 %v1891
      %2028 = vmatpush1.msra.mxu0 %v1890
      %2029 = vmatprep.subr.mxu0 %v1893
      %2030 = vmatpush1.msra.mxu0 %v1892
      %2031 = vmatprep.subr.mxu0 %v1895
      %2032 = vmatpush1.msra.mxu0 %v1894
      %2033 = vmatprep.subr.mxu0 %v1897
      %2034 = vmatpush1.msra.mxu0 %v1896
      %2035 = vmatprep.subr.mxu0 %v1899
      %2036 = vmatpush1.msra.mxu0 %v1898
      %2037 = vmatprep.subr.mxu0 %v1901
      %2038 = vmatpush1.msra.mxu0 %v1900
      %2039 = vmatprep.subr.mxu0 %v1903
      %2040 = vmatpush1.msra.mxu0 %v1902
      %2041 = vmatprep.subr.mxu0 %v1905
      %2042 = vmatpush1.msra.mxu0 %v1904
      %2043 = vmatprep.subr.mxu0 %v1907
      %2044 = vmatpush1.msra.mxu0 %v1906
      %2045 = vmatprep.subr.mxu0 %v1909
      %2046 = vmatpush1.msra.mxu0 %v1908
      %2047 = vmatprep.subr.mxu0 %v1911
      %2048 = vmatpush1.msra.mxu0 %v1910
      %2049 = vmatprep.subr.mxu0 %v1913
      %2050 = vmatpush1.msra.mxu0 %v1912
      %2051 = vmatprep.subr.mxu0 %v1915
      %2052 = vmatpush1.msra.mxu0 %v1914
      %2053 = vmatprep.subr.mxu0 %v1917
      %2054 = vmatpush1.msra.mxu0 %v1916
      %2055 = vmatprep.subr.mxu0 %v1919
      %2056 = vmatpush1.msra.mxu0 %v1918
      %2057 = vmatprep.subr.mxu0 %v1921
      %2058 = vmatpush1.msra.mxu0 %v1920
      %2059 = vmatprep.subr.mxu0 %v1923
      %2060 = vmatpush1.msra.mxu0 %v1922
      %2061 = vmatprep.subr.mxu0 %v1925
      %2062 = vmatpush1.msra.mxu0 %v1924
      %2063 = vmatprep.subr.mxu0 %v1927
      %2064 = vmatpush1.msra.mxu0 %v1926
      %2065 = vmatprep.subr.mxu0 0.0
      %2066 = vmatpush1.msra.mxu0 0.0
      %2067 = vmatprep.subr.mxu0 0.0
      %2068 = vmatpush1.msra.mxu0 0.0
      %2069 = vmatprep.subr.mxu0 0.0
      %2070 = vmatpush1.msra.mxu0 0.0
      %2071 = vmatprep.subr.mxu0 0.0
      %2072 = vmatpush1.msra.mxu0 0.0
      %2073 = vmatprep.subr.mxu0 0.0
      %2074 = vmatpush1.msra.mxu0 0.0
      %2075 = vmatprep.subr.mxu0 0.0
      %2076 = vmatpush1.msra.mxu0 0.0
      %2077 = vmatprep.subr.mxu0 0.0
      %2078 = vmatpush1.msra.mxu0 0.0
      %2079 = vmatprep.mubr.f32.mxu0 %v1941
      %2080 = vmatmul.mubr.f32.gmra.mrb[0].mxu0 %v1828
      %v2081 = vpop.f32.mrb[0].mxu0
      %v2082 = vadd.f32 %v1933, %v2081
      %v2083 = vpop.f32.mrb[0].mxu0
      %v2084 = vadd.f32 %v1937, %v2083
      %2085 = vmatprep.mubr.f32.mxu0 %v1944
      %2086 = vmatmul.mubr.f32.gmra.mrb[0].mxu0 %v1830
      %v2087 = vpop.f32.mrb[0].mxu0
      %v2088 = vadd.f32 %v1933, %v2087
      %v2089 = vpop.f32.mrb[0].mxu0
      %v2090 = vadd.f32 %v1937, %v2089
      %2091 = vmatprep.mubr.f32.mxu0 %v1947
      %2092 = vmatmul.mubr.f32.gmra.mrb[0].mxu0 %v1832
      %v2093 = vpop.f32.mrb[0].mxu0
      %v2094 = vadd.f32 %v1933, %v2093
      %v2095 = vpop.f32.mrb[0].mxu0
      %v2096 = vadd.f32 %v1937, %v2095
      %2097 = vmatprep.mubr.f32.mxu0 %v1950
      %2098 = vmatmul.mubr.f32.gmra.mrb[0].mxu0 %v1834
      %v2099 = vpop.f32.mrb[0].mxu0
      %v2100 = vadd.f32 %v1933, %v2099
      %v2101 = vpop.f32.mrb[0].mxu0
      %v2102 = vadd.f32 %v1937, %v2101
      %2103 = vmatprep.mubr.f32.mxu0 %v1953
      %2104 = vmatmul.mubr.f32.gmra.mrb[0].mxu0 %v1836
      %v2105 = vpop.f32.mrb[0].mxu0
      %v2106 = vadd.f32 %v1933, %v2105
      %v2107 = vpop.f32.mrb[0].mxu0
      %v2108 = vadd.f32 %v1937, %v2107
      %2109 = vmatprep.mubr.f32.mxu0 %v1956
      %2110 = vmatmul.mubr.f32.gmra.mrb[0].mxu0 %v1838
      %v2111 = vpop.f32.mrb[0].mxu0
      %v2112 = vadd.f32 %v1933, %v2111
      %v2113 = vpop.f32.mrb[0].mxu0
      %v2114 = vadd.f32 %v1937, %v2113
      %2115 = vmatprep.mubr.f32.mxu0 %v1959
      %2116 = vmatmul.mubr.f32.gmra.mrb[0].mxu0 %v1840
      %v2117 = vpop.f32.mrb[0].mxu0
      %v2118 = vadd.f32 %v1933, %v2117
      %v2119 = vpop.f32.mrb[0].mxu0
      %v2120 = vadd.f32 %v1937, %v2119
      %2121 = vmatprep.mubr.f32.mxu0 %v1962
      %2122 = vmatmul.mubr.f32.gmra.mrb[0].mxu0 %v1842
      %v2123 = vpop.f32.mrb[0].mxu0
      %v2124 = vadd.f32 %v1933, %v2123
      %v2125 = vpop.f32.mrb[0].mxu0
      %v2126 = vadd.f32 %v1937, %v2125
      %2127 = vmatprep.mubr.f32.mxu0 %v1965
      %2128 = vmatmul.mubr.f32.gmra.mrb[0].mxu0 %v1844
      %v2129 = vpop.f32.mrb[0].mxu0
      %v2130 = vadd.f32 %v1933, %v2129
      %v2131 = vpop.f32.mrb[0].mxu0
      %v2132 = vadd.f32 %v1937, %v2131
      %2133 = vmatprep.mubr.f32.mxu0 %v1968
      %2134 = vmatmul.mubr.f32.gmra.mrb[0].mxu0 %v1846
      %v2135 = vpop.f32.mrb[0].mxu0
      %v2136 = vadd.f32 %v1933, %v2135
      %v2137 = vpop.f32.mrb[0].mxu0
      %v2138 = vadd.f32 %v1937, %v2137
      %2139 = vmatprep.mubr.f32.mxu0 %v1971
      %2140 = vmatmul.mubr.f32.gmra.mrb[0].mxu0 %v1848
      %v2141 = vpop.f32.mrb[0].mxu0
      %v2142 = vadd.f32 %v1933, %v2141
      %v2143 = vpop.f32.mrb[0].mxu0
      %v2144 = vadd.f32 %v1937, %v2143
      %2145 = vmatprep.mubr.f32.mxu0 %v1974
      %2146 = vmatmul.mubr.f32.gmra.mrb[0].mxu0 %v1850
      %v2147 = vpop.f32.mrb[0].mxu0
      %v2148 = vadd.f32 %v1933, %v2147
      %v2149 = vpop.f32.mrb[0].mxu0
      %v2150 = vadd.f32 %v1937, %v2149
      %2151 = vmatprep.mubr.f32.mxu0 %v1977
      %2152 = vmatmul.mubr.f32.gmra.mrb[0].mxu0 %v1852
      %v2153 = vpop.f32.mrb[0].mxu0
      %v2154 = vadd.f32 %v1933, %v2153
      %v2155 = vpop.f32.mrb[0].mxu0
      %v2156 = vadd.f32 %v1937, %v2155
      %2157 = vmatprep.mubr.f32.mxu0 %v1980
      %2158 = vmatmul.mubr.f32.gmra.mrb[0].mxu0 %v1854
      %v2159 = vpop.f32.mrb[0].mxu0
      %v2160 = vadd.f32 %v1933, %v2159
      %v2161 = vpop.f32.mrb[0].mxu0
      %v2162 = vadd.f32 %v1937, %v2161
      %2163 = vmatprep.mubr.f32.mxu0 %v1983
      %2164 = vmatmul.mubr.f32.gmra.mrb[0].mxu0 %v1856
      %v2165 = vpop.f32.mrb[0].mxu0
      %v2166 = vadd.f32 %v1933, %v2165
      %v2167 = vpop.f32.mrb[0].mxu0
      %v2168 = vadd.f32 %v1937, %v2167
      %2169 = vmatprep.mubr.f32.mxu0 %v1986
      %2170 = vmatmul.mubr.f32.gmra.mrb[0].mxu0 %v1858
      %v2171 = vpop.f32.mrb[0].mxu0
      %v2172 = vadd.f32 %v1933, %v2171
      %v2173 = vpop.f32.mrb[0].mxu0
      %v2174 = vadd.f32 %v1937, %v2173
      %2175 = vmatprep.mubr.f32.mxu0 %v1989
      %2176 = vmatmul.mubr.f32.gmra.mrb[0].mxu0 %v1860
      %v2177 = vpop.f32.mrb[0].mxu0
      %v2178 = vadd.f32 %v1933, %v2177
      %v2179 = vpop.f32.mrb[0].mxu0
      %v2180 = vadd.f32 %v1937, %v2179
      %2181 = vmatprep.mubr.f32.mxu0 %v1992
      %2182 = vmatmul.mubr.f32.gmra.mrb[0].mxu0 %v1862
      %v2183 = vpop.f32.mrb[0].mxu0
      %v2184 = vadd.f32 %v1933, %v2183
      %v2185 = vpop.f32.mrb[0].mxu0
      %v2186 = vadd.f32 %v1937, %v2185
      %2187 = vmatprep.mubr.f32.mxu0 %v1995
      %2188 = vmatmul.mubr.f32.gmra.mrb[0].mxu0 %v1864
      %v2189 = vpop.f32.mrb[0].mxu0
      %v2190 = vadd.f32 %v1933, %v2189
      %v2191 = vpop.f32.mrb[0].mxu0
      %v2192 = vadd.f32 %v1937, %v2191
      %2193 = vmatprep.mubr.f32.mxu0 %v1998
      %2194 = vmatmul.mubr.f32.gmra.mrb[0].mxu0 %v1866
      %v2195 = vpop.f32.mrb[0].mxu0
      %v2196 = vadd.f32 %v1933, %v2195
      %v2197 = vpop.f32.mrb[0].mxu0
      %v2198 = vadd.f32 %v1937, %v2197
      %2199 = vmatprep.mubr.f32.mxu0 %v2001
      %2200 = vmatmul.mubr.f32.gmra.mrb[0].mxu0 %v1868
      %v2201 = vpop.f32.mrb[0].mxu0
      %v2202 = vadd.f32 %v1933, %v2201
      %v2203 = vpop.f32.mrb[0].mxu0
      %v2204 = vadd.f32 %v1937, %v2203
      %2205 = vmatprep.mubr.f32.mxu0 %v2004
      %2206 = vmatmul.mubr.f32.gmra.mrb[0].mxu0 %v1870
      %v2207 = vpop.f32.mrb[0].mxu0
      %v2208 = vadd.f32 %v1933, %v2207
      %v2209 = vpop.f32.mrb[0].mxu0
      %v2210 = vadd.f32 %v1937, %v2209
      %2211 = vmatprep.mubr.f32.mxu0 %v2007
      %2212 = vmatmul.mubr.f32.gmra.mrb[0].mxu0 %v1872
      %v2213 = vpop.f32.mrb[0].mxu0
      %v2214 = vadd.f32 %v1933, %v2213
      %v2215 = vpop.f32.mrb[0].mxu0
      %v2216 = vadd.f32 %v1937, %v2215
      %2217 = vmatprep.mubr.f32.mxu0 %v2010
      %2218 = vmatmul.mubr.f32.gmra.mrb[0].mxu0 %v1874
      %v2219 = vpop.f32.mrb[0].mxu0
      %v2220 = vadd.f32 %v1933, %v2219
      %v2221 = vpop.f32.mrb[0].mxu0
      %v2222 = vadd.f32 %v1937, %v2221
      %2223 = vmatprep.mubr.f32.mxu0 %v2013
      %2224 = vmatmul.mubr.f32.gmra.mrb[0].mxu0 %v1876
      %v2225 = vpop.f32.mrb[0].mxu0
      %v2226 = vadd.f32 %v1933, %v2225
      %v2227 = vpop.f32.mrb[0].mxu0
      %v2228 = vadd.f32 %v1937, %v2227
      %2229 = vdwg.mxu0
      %2230 = vset.pattern.permute.xlu0 4
      %2231 = vperm.xlu0 %2230, %v775
      %v2232 = vpop.permute.xlu0 %2231
      %2234 = vset.pattern.permute.xlu0 4
      %2235 = vperm.xlu0 %2234, %v776
      %v2236 = vpop.permute.xlu0 %2235
      %2238 = vset.pattern.permute.xlu0 4
      %2239 = vperm.xlu0 %2238, %v777
      %v2240 = vpop.permute.xlu0 %2239
      %2242 = vset.pattern.permute.xlu0 4
      %2243 = vperm.xlu0 %2242, %v778
      %v2244 = vpop.permute.xlu0 %2243
      %2246 = vset.pattern.permute.xlu0 4
      %2247 = vperm.xlu0 %2246, %v779
      %v2248 = vpop.permute.xlu0 %2247
      %2250 = vset.pattern.permute.xlu0 4
      %2251 = vperm.xlu0 %2250, %v780
      %v2252 = vpop.permute.xlu0 %2251
      %2254 = vset.pattern.permute.xlu0 4
      %2255 = vperm.xlu0 %2254, %v781
      %v2256 = vpop.permute.xlu0 %2255
      %2258 = vset.pattern.permute.xlu0 4
      %2259 = vperm.xlu0 %2258, %v782
      %v2260 = vpop.permute.xlu0 %2259
      %2262 = vset.pattern.permute.xlu0 4
      %2263 = vperm.xlu0 %2262, %v783
      %v2264 = vpop.permute.xlu0 %2263
      %2266 = vset.pattern.permute.xlu0 4
      %2267 = vperm.xlu0 %2266, %v784
      %v2268 = vpop.permute.xlu0 %2267
      %2270 = vset.pattern.permute.xlu0 4
      %2271 = vperm.xlu0 %2270, %v785
      %v2272 = vpop.permute.xlu0 %2271
      %2274 = vset.pattern.permute.xlu0 4
      %2275 = vperm.xlu0 %2274, %v786
      %v2276 = vpop.permute.xlu0 %2275
      %2278 = vset.pattern.permute.xlu0 4
      %2279 = vperm.xlu0 %2278, %v787
      %v2280 = vpop.permute.xlu0 %2279
      %2282 = vset.pattern.permute.xlu0 4
      %2283 = vperm.xlu0 %2282, %v788
      %v2284 = vpop.permute.xlu0 %2283
      %2286 = vset.pattern.permute.xlu0 4
      %2287 = vperm.xlu0 %2286, %v789
      %v2288 = vpop.permute.xlu0 %2287
      %2290 = vset.pattern.permute.xlu0 4
      %2291 = vperm.xlu0 %2290, %v790
      %v2292 = vpop.permute.xlu0 %2291
      %2294 = vset.pattern.permute.xlu0 4
      %2295 = vperm.xlu0 %2294, %v791
      %v2296 = vpop.permute.xlu0 %2295
      %2298 = vset.pattern.permute.xlu0 4
      %2299 = vperm.xlu0 %2298, %v792
      %v2300 = vpop.permute.xlu0 %2299
      %2302 = vset.pattern.permute.xlu0 4
      %2303 = vperm.xlu0 %2302, %v793
      %v2304 = vpop.permute.xlu0 %2303
      %2306 = vset.pattern.permute.xlu0 4
      %2307 = vperm.xlu0 %2306, %v794
      %v2308 = vpop.permute.xlu0 %2307
      %2310 = vset.pattern.permute.xlu0 4
      %2311 = vperm.xlu0 %2310, %v795
      %v2312 = vpop.permute.xlu0 %2311
      %2314 = vset.pattern.permute.xlu0 4
      %2315 = vperm.xlu0 %2314, %v796
      %v2316 = vpop.permute.xlu0 %2315
      %2318 = vset.pattern.permute.xlu0 4
      %2319 = vperm.xlu0 %2318, %v797
      %v2320 = vpop.permute.xlu0 %2319
      %2322 = vset.pattern.permute.xlu0 4
      %2323 = vperm.xlu0 %2322, %v798
      %v2324 = vpop.permute.xlu0 %2323
      %2326 = vset.pattern.permute.xlu0 4
      %2327 = vperm.xlu0 %2326, %v799
      %v2328 = vpop.permute.xlu0 %2327
      %v2330 = vmul.f32 %v2082, %v2232
      %v2331 = vmul.f32 %v2084, %v2232
      %v2332 = vmul.f32 %v2088, %v2236
      %v2333 = vmul.f32 %v2090, %v2236
      %v2334 = vmul.f32 %v2094, %v2240
      %v2335 = vmul.f32 %v2096, %v2240
      %v2336 = vmul.f32 %v2100, %v2244
      %v2337 = vmul.f32 %v2102, %v2244
      %v2338 = vmul.f32 %v2106, %v2248
      %v2339 = vmul.f32 %v2108, %v2248
      %v2340 = vmul.f32 %v2112, %v2252
      %v2341 = vmul.f32 %v2114, %v2252
      %v2342 = vmul.f32 %v2118, %v2256
      %v2343 = vmul.f32 %v2120, %v2256
      %v2344 = vmul.f32 %v2124, %v2260
      %v2345 = vmul.f32 %v2126, %v2260
      %v2346 = vmul.f32 %v2130, %v2264
      %v2347 = vmul.f32 %v2132, %v2264
      %v2348 = vmul.f32 %v2136, %v2268
      %v2349 = vmul.f32 %v2138, %v2268
      %v2350 = vmul.f32 %v2142, %v2272
      %v2351 = vmul.f32 %v2144, %v2272
      %v2352 = vmul.f32 %v2148, %v2276
      %v2353 = vmul.f32 %v2150, %v2276
      %v2354 = vmul.f32 %v2154, %v2280
      %v2355 = vmul.f32 %v2156, %v2280
      %v2356 = vmul.f32 %v2160, %v2284
      %v2357 = vmul.f32 %v2162, %v2284
      %v2358 = vmul.f32 %v2166, %v2288
      %v2359 = vmul.f32 %v2168, %v2288
      %v2360 = vmul.f32 %v2172, %v2292
      %v2361 = vmul.f32 %v2174, %v2292
      %v2362 = vmul.f32 %v2178, %v2296
      %v2363 = vmul.f32 %v2180, %v2296
      %v2364 = vmul.f32 %v2184, %v2300
      %v2365 = vmul.f32 %v2186, %v2300
      %v2366 = vmul.f32 %v2190, %v2304
      %v2367 = vmul.f32 %v2192, %v2304
      %v2368 = vmul.f32 %v2196, %v2308
      %v2369 = vmul.f32 %v2198, %v2308
      %v2370 = vmul.f32 %v2202, %v2312
      %v2371 = vmul.f32 %v2204, %v2312
      %v2372 = vmul.f32 %v2208, %v2316
      %v2373 = vmul.f32 %v2210, %v2316
      %v2374 = vmul.f32 %v2214, %v2320
      %v2375 = vmul.f32 %v2216, %v2320
      %v2376 = vmul.f32 %v2220, %v2324
      %v2377 = vmul.f32 %v2222, %v2324
      %v2378 = vmul.f32 %v2226, %v2328
      %v2379 = vmul.f32 %v2228, %v2328
      %2380 = vset.pattern.permute.xlu0 5
      %2381 = vperm.xlu0 %2380, %v775
      %v2382 = vpop.permute.xlu0 %2381
      %2384 = vset.pattern.permute.xlu0 5
      %2385 = vperm.xlu0 %2384, %v776
      %v2386 = vpop.permute.xlu0 %2385
      %2388 = vset.pattern.permute.xlu0 5
      %2389 = vperm.xlu0 %2388, %v777
      %v2390 = vpop.permute.xlu0 %2389
      %2392 = vset.pattern.permute.xlu0 5
      %2393 = vperm.xlu0 %2392, %v778
      %v2394 = vpop.permute.xlu0 %2393
      %2396 = vset.pattern.permute.xlu0 5
      %2397 = vperm.xlu0 %2396, %v779
      %v2398 = vpop.permute.xlu0 %2397
      %2400 = vset.pattern.permute.xlu0 5
      %2401 = vperm.xlu0 %2400, %v780
      %v2402 = vpop.permute.xlu0 %2401
      %2404 = vset.pattern.permute.xlu0 5
      %2405 = vperm.xlu0 %2404, %v781
      %v2406 = vpop.permute.xlu0 %2405
      %2408 = vset.pattern.permute.xlu0 5
      %2409 = vperm.xlu0 %2408, %v782
      %v2410 = vpop.permute.xlu0 %2409
      %2412 = vset.pattern.permute.xlu0 5
      %2413 = vperm.xlu0 %2412, %v783
      %v2414 = vpop.permute.xlu0 %2413
      %2416 = vset.pattern.permute.xlu0 5
      %2417 = vperm.xlu0 %2416, %v784
      %v2418 = vpop.permute.xlu0 %2417
      %2420 = vset.pattern.permute.xlu0 5
      %2421 = vperm.xlu0 %2420, %v785
      %v2422 = vpop.permute.xlu0 %2421
      %2424 = vset.pattern.permute.xlu0 5
      %2425 = vperm.xlu0 %2424, %v786
      %v2426 = vpop.permute.xlu0 %2425
      %2428 = vset.pattern.permute.xlu0 5
      %2429 = vperm.xlu0 %2428, %v787
      %v2430 = vpop.permute.xlu0 %2429
      %2432 = vset.pattern.permute.xlu0 5
      %2433 = vperm.xlu0 %2432, %v788
      %v2434 = vpop.permute.xlu0 %2433
      %2436 = vset.pattern.permute.xlu0 5
      %2437 = vperm.xlu0 %2436, %v789
      %v2438 = vpop.permute.xlu0 %2437
      %2440 = vset.pattern.permute.xlu0 5
      %2441 = vperm.xlu0 %2440, %v790
      %v2442 = vpop.permute.xlu0 %2441
      %2444 = vset.pattern.permute.xlu0 5
      %2445 = vperm.xlu0 %2444, %v791
      %v2446 = vpop.permute.xlu0 %2445
      %2448 = vset.pattern.permute.xlu0 5
      %2449 = vperm.xlu0 %2448, %v792
      %v2450 = vpop.permute.xlu0 %2449
      %2452 = vset.pattern.permute.xlu0 5
      %2453 = vperm.xlu0 %2452, %v793
      %v2454 = vpop.permute.xlu0 %2453
      %2456 = vset.pattern.permute.xlu0 5
      %2457 = vperm.xlu0 %2456, %v794
      %v2458 = vpop.permute.xlu0 %2457
      %2460 = vset.pattern.permute.xlu0 5
      %2461 = vperm.xlu0 %2460, %v795
      %v2462 = vpop.permute.xlu0 %2461
      %2464 = vset.pattern.permute.xlu0 5
      %2465 = vperm.xlu0 %2464, %v796
      %v2466 = vpop.permute.xlu0 %2465
      %2468 = vset.pattern.permute.xlu0 5
      %2469 = vperm.xlu0 %2468, %v797
      %v2470 = vpop.permute.xlu0 %2469
      %2472 = vset.pattern.permute.xlu0 5
      %2473 = vperm.xlu0 %2472, %v798
      %v2474 = vpop.permute.xlu0 %2473
      %2476 = vset.pattern.permute.xlu0 5
      %2477 = vperm.xlu0 %2476, %v799
      %v2478 = vpop.permute.xlu0 %2477
      %v2480 = vadd.f32 %v2330, %v2382
      %v2481 = vadd.f32 %v2331, %v2382
      %v2482 = vadd.f32 %v2332, %v2386
      %v2483 = vadd.f32 %v2333, %v2386
      %v2484 = vadd.f32 %v2334, %v2390
      %v2485 = vadd.f32 %v2335, %v2390
      %v2486 = vadd.f32 %v2336, %v2394
      %v2487 = vadd.f32 %v2337, %v2394
      %v2488 = vadd.f32 %v2338, %v2398
      %v2489 = vadd.f32 %v2339, %v2398
      %v2490 = vadd.f32 %v2340, %v2402
      %v2491 = vadd.f32 %v2341, %v2402
      %v2492 = vadd.f32 %v2342, %v2406
      %v2493 = vadd.f32 %v2343, %v2406
      %v2494 = vadd.f32 %v2344, %v2410
      %v2495 = vadd.f32 %v2345, %v2410
      %v2496 = vadd.f32 %v2346, %v2414
      %v2497 = vadd.f32 %v2347, %v2414
      %v2498 = vadd.f32 %v2348, %v2418
      %v2499 = vadd.f32 %v2349, %v2418
      %v2500 = vadd.f32 %v2350, %v2422
      %v2501 = vadd.f32 %v2351, %v2422
      %v2502 = vadd.f32 %v2352, %v2426
      %v2503 = vadd.f32 %v2353, %v2426
      %v2504 = vadd.f32 %v2354, %v2430
      %v2505 = vadd.f32 %v2355, %v2430
      %v2506 = vadd.f32 %v2356, %v2434
      %v2507 = vadd.f32 %v2357, %v2434
      %v2508 = vadd.f32 %v2358, %v2438
      %v2509 = vadd.f32 %v2359, %v2438
      %v2510 = vadd.f32 %v2360, %v2442
      %v2511 = vadd.f32 %v2361, %v2442
      %v2512 = vadd.f32 %v2362, %v2446
      %v2513 = vadd.f32 %v2363, %v2446
      %v2514 = vadd.f32 %v2364, %v2450
      %v2515 = vadd.f32 %v2365, %v2450
      %v2516 = vadd.f32 %v2366, %v2454
      %v2517 = vadd.f32 %v2367, %v2454
      %v2518 = vadd.f32 %v2368, %v2458
      %v2519 = vadd.f32 %v2369, %v2458
      %v2520 = vadd.f32 %v2370, %v2462
      %v2521 = vadd.f32 %v2371, %v2462
      %v2522 = vadd.f32 %v2372, %v2466
      %v2523 = vadd.f32 %v2373, %v2466
      %v2524 = vadd.f32 %v2374, %v2470
      %v2525 = vadd.f32 %v2375, %v2470
      %v2526 = vadd.f32 %v2376, %v2474
      %v2527 = vadd.f32 %v2377, %v2474
      %v2528 = vadd.f32 %v2378, %v2478
      %v2529 = vadd.f32 %v2379, %v2478
      %v2530 = vmax.f32 %v2480, 0.0
      %v2531 = vmax.f32 %v2481, 0.0
      %v2532 = vmax.f32 %v2482, 0.0
      %v2533 = vmax.f32 %v2483, 0.0
      %v2534 = vmax.f32 %v2484, 0.0
      %v2535 = vmax.f32 %v2485, 0.0
      %v2536 = vmax.f32 %v2486, 0.0
      %v2537 = vmax.f32 %v2487, 0.0
      %v2538 = vmax.f32 %v2488, 0.0
      %v2539 = vmax.f32 %v2489, 0.0
      %v2540 = vmax.f32 %v2490, 0.0
      %v2541 = vmax.f32 %v2491, 0.0
      %v2542 = vmax.f32 %v2492, 0.0
      %v2543 = vmax.f32 %v2493, 0.0
      %v2544 = vmax.f32 %v2494, 0.0
      %v2545 = vmax.f32 %v2495, 0.0
      %v2546 = vmax.f32 %v2496, 0.0
      %v2547 = vmax.f32 %v2497, 0.0
      %v2548 = vmax.f32 %v2498, 0.0
      %v2549 = vmax.f32 %v2499, 0.0
      %v2550 = vmax.f32 %v2500, 0.0
      %v2551 = vmax.f32 %v2501, 0.0
      %v2552 = vmax.f32 %v2502, 0.0
      %v2553 = vmax.f32 %v2503, 0.0
      %v2554 = vmax.f32 %v2504, 0.0
      %v2555 = vmax.f32 %v2505, 0.0
      %v2556 = vmax.f32 %v2506, 0.0
      %v2557 = vmax.f32 %v2507, 0.0
      %v2558 = vmax.f32 %v2508, 0.0
      %v2559 = vmax.f32 %v2509, 0.0
      %v2560 = vmax.f32 %v2510, 0.0
      %v2561 = vmax.f32 %v2511, 0.0
      %v2562 = vmax.f32 %v2512, 0.0
      %v2563 = vmax.f32 %v2513, 0.0
      %v2564 = vmax.f32 %v2514, 0.0
      %v2565 = vmax.f32 %v2515, 0.0
      %v2566 = vmax.f32 %v2516, 0.0
      %v2567 = vmax.f32 %v2517, 0.0
      %v2568 = vmax.f32 %v2518, 0.0
      %v2569 = vmax.f32 %v2519, 0.0
      %v2570 = vmax.f32 %v2520, 0.0
      %v2571 = vmax.f32 %v2521, 0.0
      %v2572 = vmax.f32 %v2522, 0.0
      %v2573 = vmax.f32 %v2523, 0.0
      %v2574 = vmax.f32 %v2524, 0.0
      %v2575 = vmax.f32 %v2525, 0.0
      %v2576 = vmax.f32 %v2526, 0.0
      %v2577 = vmax.f32 %v2527, 0.0
      %v2578 = vmax.f32 %v2528, 0.0
      %v2579 = vmax.f32 %v2529, 0.0
      %v2580 = vld [vmem:[%s8] sm:$0xff]
      %v2581 = vld [vmem:[%s8 + $0x8] sm:$0xff]
      %v2582 = vld [vmem:[%s8 + $0x10] sm:$0xff]
      %v2583 = vld [vmem:[%s8 + $0x18] sm:$0xff]
      %v2584 = vld [vmem:[%s8 + $0x20] sm:$0xff]
      %v2585 = vld [vmem:[%s8 + $0x28] sm:$0xff]
      %v2586 = vld [vmem:[%s8 + $0x30] sm:$0xff]
      %v2587 = vld [vmem:[%s8 + $0x38] sm:$0xff]
      %v2588 = vld [vmem:[%s8 + $0x40] sm:$0xff]
      %v2589 = vld [vmem:[%s8 + $0x48] sm:$0xff]
      %v2590 = vld [vmem:[%s8 + $0x50] sm:$0xff]
      %v2591 = vld [vmem:[%s8 + $0x58] sm:$0xff]
      %v2592 = vld [vmem:[%s8 + $0x60] sm:$0xff]
      %v2593 = vld [vmem:[%s8 + $0x68] sm:$0xff]
      %v2594 = vld [vmem:[%s8 + $0x70] sm:$0xff]
      %v2595 = vld [vmem:[%s8 + $0x78] sm:$0xff]
      %v2596 = vld [vmem:[%s8 + $0x80] sm:$0xff]
      %v2597 = vld [vmem:[%s8 + $0x88] sm:$0xff]
      %v2598 = vld [vmem:[%s8 + $0x90] sm:$0xff]
      %v2599 = vld [vmem:[%s8 + $0x98] sm:$0xff]
      %v2600 = vld [vmem:[%s8 + $0xa0] sm:$0xff]
      %v2601 = vld [vmem:[%s8 + $0xa8] sm:$0xff]
      %v2602 = vld [vmem:[%s8 + $0xb0] sm:$0xff]
      %v2603 = vld [vmem:[%s8 + $0xb8] sm:$0xff]
      %v2604 = vld [vmem:[%s8 + $0xc0] sm:$0xff]
      %v2605 = vld [vmem:[%s8 + $0xc8] sm:$0xff]
      %v2606 = vld [vmem:[%s8 + $0xd0] sm:$0xff]
      %v2607 = vld [vmem:[%s8 + $0xd8] sm:$0xff]
      %v2608 = vld [vmem:[%s8 + $0xe0] sm:$0xff]
      %v2609 = vld [vmem:[%s8 + $0xe8] sm:$0xff]
      %v2610 = vld [vmem:[%s8 + $0xf0] sm:$0xff]
      %v2611 = vld [vmem:[%s8 + $0xf8] sm:$0xff]
      %v2612 = vld [vmem:[%s8 + $0x100] sm:$0xff]
      %v2613 = vld [vmem:[%s8 + $0x108] sm:$0xff]
      %v2614 = vld [vmem:[%s8 + $0x110] sm:$0xff]
      %v2615 = vld [vmem:[%s8 + $0x118] sm:$0xff]
      %v2616 = vld [vmem:[%s8 + $0x120] sm:$0xff]
      %v2617 = vld [vmem:[%s8 + $0x128] sm:$0xff]
      %v2618 = vld [vmem:[%s8 + $0x130] sm:$0xff]
      %v2619 = vld [vmem:[%s8 + $0x138] sm:$0xff]
      %v2620 = vld [vmem:[%s8 + $0x140] sm:$0xff]
      %v2621 = vld [vmem:[%s8 + $0x148] sm:$0xff]
      %v2622 = vld [vmem:[%s8 + $0x150] sm:$0xff]
      %v2623 = vld [vmem:[%s8 + $0x158] sm:$0xff]
      %v2624 = vld [vmem:[%s8 + $0x160] sm:$0xff]
      %v2625 = vld [vmem:[%s8 + $0x168] sm:$0xff]
      %v2626 = vld [vmem:[%s8 + $0x170] sm:$0xff]
      %v2627 = vld [vmem:[%s8 + $0x178] sm:$0xff]
      %v2628 = vld [vmem:[%s8 + $0x180] sm:$0xff]
      %v2629 = vld [vmem:[%s8 + $0x188] sm:$0xff]
      %v2630 = vld [vmem:[%s9] sm:$0x3]
      %v2632 = vlaneseq
      %v2633 = vshrl.u32 %v2632, 7
      %v2634 = vsub.s32 0, %v2633
      %v2635 = vrot.slane %v2630, %v2634
      %v2636 = vlaneseq
      %v2637 = vshrl.u32 %v2636, 7
      %v2638 = vsub.s32 1, %v2637
      %v2639 = vrot.slane %v2630, %v2638
      %v2643 = vsel %vm1237, %v2531, 0
      %v2646 = vsel %vm1237, %v2533, 0
      %v2649 = vsel %vm1237, %v2535, 0
      %v2652 = vsel %vm1237, %v2537, 0
      %v2655 = vsel %vm1237, %v2539, 0
      %v2658 = vsel %vm1237, %v2541, 0
      %v2661 = vsel %vm1237, %v2543, 0
      %v2664 = vsel %vm1237, %v2545, 0
      %v2667 = vsel %vm1237, %v2547, 0
      %v2670 = vsel %vm1237, %v2549, 0
      %v2673 = vsel %vm1237, %v2551, 0
      %v2676 = vsel %vm1237, %v2553, 0
      %v2679 = vsel %vm1237, %v2555, 0
      %v2682 = vsel %vm1237, %v2557, 0
      %v2685 = vsel %vm1237, %v2559, 0
      %v2688 = vsel %vm1237, %v2561, 0
      %v2691 = vsel %vm1237, %v2563, 0
      %v2694 = vsel %vm1237, %v2565, 0
      %v2697 = vsel %vm1237, %v2567, 0
      %v2700 = vsel %vm1237, %v2569, 0
      %v2703 = vsel %vm1237, %v2571, 0
      %v2706 = vsel %vm1237, %v2573, 0
      %v2709 = vsel %vm1237, %v2575, 0
      %v2712 = vsel %vm1237, %v2577, 0
      %v2715 = vsel %vm1237, %v2579, 0
      %2717 = vmatprep.subr.mxu0 %v2581
      %2718 = vmatpush1.msra.mxu0 %v2580
      %2719 = vmatprep.subr.mxu0 %v2583
      %2720 = vmatpush1.msra.mxu0 %v2582
      %2721 = vmatprep.subr.mxu0 %v2585
      %2722 = vmatpush1.msra.mxu0 %v2584
      %2723 = vmatprep.subr.mxu0 %v2587
      %2724 = vmatpush1.msra.mxu0 %v2586
      %2725 = vmatprep.subr.mxu0 %v2589
      %2726 = vmatpush1.msra.mxu0 %v2588
      %2727 = vmatprep.subr.mxu0 %v2591
      %2728 = vmatpush1.msra.mxu0 %v2590
      %2729 = vmatprep.subr.mxu0 %v2593
      %2730 = vmatpush1.msra.mxu0 %v2592
      %2731 = vmatprep.subr.mxu0 %v2595
      %2732 = vmatpush1.msra.mxu0 %v2594
      %2733 = vmatprep.subr.mxu0 %v2597
      %2734 = vmatpush1.msra.mxu0 %v2596
      %2735 = vmatprep.subr.mxu0 %v2599
      %2736 = vmatpush1.msra.mxu0 %v2598
      %2737 = vmatprep.subr.mxu0 %v2601
      %2738 = vmatpush1.msra.mxu0 %v2600
      %2739 = vmatprep.subr.mxu0 %v2603
      %2740 = vmatpush1.msra.mxu0 %v2602
      %2741 = vmatprep.subr.mxu0 %v2605
      %2742 = vmatpush1.msra.mxu0 %v2604
      %2743 = vmatprep.subr.mxu0 %v2607
      %2744 = vmatpush1.msra.mxu0 %v2606
      %2745 = vmatprep.subr.mxu0 %v2609
      %2746 = vmatpush1.msra.mxu0 %v2608
      %2747 = vmatprep.subr.mxu0 %v2611
      %2748 = vmatpush1.msra.mxu0 %v2610
      %2749 = vmatprep.subr.mxu0 %v2613
      %2750 = vmatpush1.msra.mxu0 %v2612
      %2751 = vmatprep.subr.mxu0 %v2615
      %2752 = vmatpush1.msra.mxu0 %v2614
      %2753 = vmatprep.subr.mxu0 %v2617
      %2754 = vmatpush1.msra.mxu0 %v2616
      %2755 = vmatprep.subr.mxu0 %v2619
      %2756 = vmatpush1.msra.mxu0 %v2618
      %2757 = vmatprep.subr.mxu0 %v2621
      %2758 = vmatpush1.msra.mxu0 %v2620
      %2759 = vmatprep.subr.mxu0 %v2623
      %2760 = vmatpush1.msra.mxu0 %v2622
      %2761 = vmatprep.subr.mxu0 %v2625
      %2762 = vmatpush1.msra.mxu0 %v2624
      %2763 = vmatprep.subr.mxu0 %v2627
      %2764 = vmatpush1.msra.mxu0 %v2626
      %2765 = vmatprep.subr.mxu0 %v2629
      %2766 = vmatpush1.msra.mxu0 %v2628
      %2767 = vmatprep.subr.mxu0 0.0
      %2768 = vmatpush1.msra.mxu0 0.0
      %2769 = vmatprep.subr.mxu0 0.0
      %2770 = vmatpush1.msra.mxu0 0.0
      %2771 = vmatprep.subr.mxu0 0.0
      %2772 = vmatpush1.msra.mxu0 0.0
      %2773 = vmatprep.subr.mxu0 0.0
      %2774 = vmatpush1.msra.mxu0 0.0
      %2775 = vmatprep.subr.mxu0 0.0
      %2776 = vmatpush1.msra.mxu0 0.0
      %2777 = vmatprep.subr.mxu0 0.0
      %2778 = vmatpush1.msra.mxu0 0.0
      %2779 = vmatprep.subr.mxu0 0.0
      %2780 = vmatpush1.msra.mxu0 0.0
      %2781 = vmatprep.mubr.f32.mxu0 %v2643
      %2782 = vmatmul.mubr.f32.gmra.mrb[0].mxu0 %v2530
      %v2783 = vpop.f32.mrb[0].mxu0
      %v2784 = vadd.f32 %v2635, %v2783
      %v2785 = vpop.f32.mrb[0].mxu0
      %v2786 = vadd.f32 %v2639, %v2785
      %2787 = vmatprep.mubr.f32.mxu0 %v2646
      %2788 = vmatmul.mubr.f32.gmra.mrb[0].mxu0 %v2532
      %v2789 = vpop.f32.mrb[0].mxu0
      %v2790 = vadd.f32 %v2635, %v2789
      %v2791 = vpop.f32.mrb[0].mxu0
      %v2792 = vadd.f32 %v2639, %v2791
      %2793 = vmatprep.mubr.f32.mxu0 %v2649
      %2794 = vmatmul.mubr.f32.gmra.mrb[0].mxu0 %v2534
      %v2795 = vpop.f32.mrb[0].mxu0
      %v2796 = vadd.f32 %v2635, %v2795
      %v2797 = vpop.f32.mrb[0].mxu0
      %v2798 = vadd.f32 %v2639, %v2797
      %2799 = vmatprep.mubr.f32.mxu0 %v2652
      %2800 = vmatmul.mubr.f32.gmra.mrb[0].mxu0 %v2536
      %v2801 = vpop.f32.mrb[0].mxu0
      %v2802 = vadd.f32 %v2635, %v2801
      %v2803 = vpop.f32.mrb[0].mxu0
      %v2804 = vadd.f32 %v2639, %v2803
      %2805 = vmatprep.mubr.f32.mxu0 %v2655
      %2806 = vmatmul.mubr.f32.gmra.mrb[0].mxu0 %v2538
      %v2807 = vpop.f32.mrb[0].mxu0
      %v2808 = vadd.f32 %v2635, %v2807
      %v2809 = vpop.f32.mrb[0].mxu0
      %v2810 = vadd.f32 %v2639, %v2809
      %2811 = vmatprep.mubr.f32.mxu0 %v2658
      %2812 = vmatmul.mubr.f32.gmra.mrb[0].mxu0 %v2540
      %v2813 = vpop.f32.mrb[0].mxu0
      %v2814 = vadd.f32 %v2635, %v2813
      %v2815 = vpop.f32.mrb[0].mxu0
      %v2816 = vadd.f32 %v2639, %v2815
      %2817 = vmatprep.mubr.f32.mxu0 %v2661
      %2818 = vmatmul.mubr.f32.gmra.mrb[0].mxu0 %v2542
      %v2819 = vpop.f32.mrb[0].mxu0
      %v2820 = vadd.f32 %v2635, %v2819
      %v2821 = vpop.f32.mrb[0].mxu0
      %v2822 = vadd.f32 %v2639, %v2821
      %2823 = vmatprep.mubr.f32.mxu0 %v2664
      %2824 = vmatmul.mubr.f32.gmra.mrb[0].mxu0 %v2544
      %v2825 = vpop.f32.mrb[0].mxu0
      %v2826 = vadd.f32 %v2635, %v2825
      %v2827 = vpop.f32.mrb[0].mxu0
      %v2828 = vadd.f32 %v2639, %v2827
      %2829 = vmatprep.mubr.f32.mxu0 %v2667
      %2830 = vmatmul.mubr.f32.gmra.mrb[0].mxu0 %v2546
      %v2831 = vpop.f32.mrb[0].mxu0
      %v2832 = vadd.f32 %v2635, %v2831
      %v2833 = vpop.f32.mrb[0].mxu0
      %v2834 = vadd.f32 %v2639, %v2833
      %2835 = vmatprep.mubr.f32.mxu0 %v2670
      %2836 = vmatmul.mubr.f32.gmra.mrb[0].mxu0 %v2548
      %v2837 = vpop.f32.mrb[0].mxu0
      %v2838 = vadd.f32 %v2635, %v2837
      %v2839 = vpop.f32.mrb[0].mxu0
      %v2840 = vadd.f32 %v2639, %v2839
      %2841 = vmatprep.mubr.f32.mxu0 %v2673
      %2842 = vmatmul.mubr.f32.gmra.mrb[0].mxu0 %v2550
      %v2843 = vpop.f32.mrb[0].mxu0
      %v2844 = vadd.f32 %v2635, %v2843
      %v2845 = vpop.f32.mrb[0].mxu0
      %v2846 = vadd.f32 %v2639, %v2845
      %2847 = vmatprep.mubr.f32.mxu0 %v2676
      %2848 = vmatmul.mubr.f32.gmra.mrb[0].mxu0 %v2552
      %v2849 = vpop.f32.mrb[0].mxu0
      %v2850 = vadd.f32 %v2635, %v2849
      %v2851 = vpop.f32.mrb[0].mxu0
      %v2852 = vadd.f32 %v2639, %v2851
      %2853 = vmatprep.mubr.f32.mxu0 %v2679
      %2854 = vmatmul.mubr.f32.gmra.mrb[0].mxu0 %v2554
      %v2855 = vpop.f32.mrb[0].mxu0
      %v2856 = vadd.f32 %v2635, %v2855
      %v2857 = vpop.f32.mrb[0].mxu0
      %v2858 = vadd.f32 %v2639, %v2857
      %2859 = vmatprep.mubr.f32.mxu0 %v2682
      %2860 = vmatmul.mubr.f32.gmra.mrb[0].mxu0 %v2556
      %v2861 = vpop.f32.mrb[0].mxu0
      %v2862 = vadd.f32 %v2635, %v2861
      %v2863 = vpop.f32.mrb[0].mxu0
      %v2864 = vadd.f32 %v2639, %v2863
      %2865 = vmatprep.mubr.f32.mxu0 %v2685
      %2866 = vmatmul.mubr.f32.gmra.mrb[0].mxu0 %v2558
      %v2867 = vpop.f32.mrb[0].mxu0
      %v2868 = vadd.f32 %v2635, %v2867
      %v2869 = vpop.f32.mrb[0].mxu0
      %v2870 = vadd.f32 %v2639, %v2869
      %2871 = vmatprep.mubr.f32.mxu0 %v2688
      %2872 = vmatmul.mubr.f32.gmra.mrb[0].mxu0 %v2560
      %v2873 = vpop.f32.mrb[0].mxu0
      %v2874 = vadd.f32 %v2635, %v2873
      %v2875 = vpop.f32.mrb[0].mxu0
      %v2876 = vadd.f32 %v2639, %v2875
      %2877 = vmatprep.mubr.f32.mxu0 %v2691
      %2878 = vmatmul.mubr.f32.gmra.mrb[0].mxu0 %v2562
      %v2879 = vpop.f32.mrb[0].mxu0
      %v2880 = vadd.f32 %v2635, %v2879
      %v2881 = vpop.f32.mrb[0].mxu0
      %v2882 = vadd.f32 %v2639, %v2881
      %2883 = vmatprep.mubr.f32.mxu0 %v2694
      %2884 = vmatmul.mubr.f32.gmra.mrb[0].mxu0 %v2564
      %v2885 = vpop.f32.mrb[0].mxu0
      %v2886 = vadd.f32 %v2635, %v2885
      %v2887 = vpop.f32.mrb[0].mxu0
      %v2888 = vadd.f32 %v2639, %v2887
      %2889 = vmatprep.mubr.f32.mxu0 %v2697
      %2890 = vmatmul.mubr.f32.gmra.mrb[0].mxu0 %v2566
      %v2891 = vpop.f32.mrb[0].mxu0
      %v2892 = vadd.f32 %v2635, %v2891
      %v2893 = vpop.f32.mrb[0].mxu0
      %v2894 = vadd.f32 %v2639, %v2893
      %2895 = vmatprep.mubr.f32.mxu0 %v2700
      %2896 = vmatmul.mubr.f32.gmra.mrb[0].mxu0 %v2568
      %v2897 = vpop.f32.mrb[0].mxu0
      %v2898 = vadd.f32 %v2635, %v2897
      %v2899 = vpop.f32.mrb[0].mxu0
      %v2900 = vadd.f32 %v2639, %v2899
      %2901 = vmatprep.mubr.f32.mxu0 %v2703
      %2902 = vmatmul.mubr.f32.gmra.mrb[0].mxu0 %v2570
      %v2903 = vpop.f32.mrb[0].mxu0
      %v2904 = vadd.f32 %v2635, %v2903
      %v2905 = vpop.f32.mrb[0].mxu0
      %v2906 = vadd.f32 %v2639, %v2905
      %2907 = vmatprep.mubr.f32.mxu0 %v2706
      %2908 = vmatmul.mubr.f32.gmra.mrb[0].mxu0 %v2572
      %v2909 = vpop.f32.mrb[0].mxu0
      %v2910 = vadd.f32 %v2635, %v2909
      %v2911 = vpop.f32.mrb[0].mxu0
      %v2912 = vadd.f32 %v2639, %v2911
      %2913 = vmatprep.mubr.f32.mxu0 %v2709
      %2914 = vmatmul.mubr.f32.gmra.mrb[0].mxu0 %v2574
      %v2915 = vpop.f32.mrb[0].mxu0
      %v2916 = vadd.f32 %v2635, %v2915
      %v2917 = vpop.f32.mrb[0].mxu0
      %v2918 = vadd.f32 %v2639, %v2917
      %2919 = vmatprep.mubr.f32.mxu0 %v2712
      %2920 = vmatmul.mubr.f32.gmra.mrb[0].mxu0 %v2576
      %v2921 = vpop.f32.mrb[0].mxu0
      %v2922 = vadd.f32 %v2635, %v2921
      %v2923 = vpop.f32.mrb[0].mxu0
      %v2924 = vadd.f32 %v2639, %v2923
      %2925 = vmatprep.mubr.f32.mxu0 %v2715
      %2926 = vmatmul.mubr.f32.gmra.mrb[0].mxu0 %v2578
      %v2927 = vpop.f32.mrb[0].mxu0
      %v2928 = vadd.f32 %v2635, %v2927
      %v2929 = vpop.f32.mrb[0].mxu0
      %v2930 = vadd.f32 %v2639, %v2929
      %2931 = vdwg.mxu0
      %2932 = vset.pattern.permute.xlu0 6
      %2933 = vperm.xlu0 %2932, %v775
      %v2934 = vpop.permute.xlu0 %2933
      %2936 = vset.pattern.permute.xlu0 6
      %2937 = vperm.xlu0 %2936, %v776
      %v2938 = vpop.permute.xlu0 %2937
      %2940 = vset.pattern.permute.xlu0 6
      %2941 = vperm.xlu0 %2940, %v777
      %v2942 = vpop.permute.xlu0 %2941
      %2944 = vset.pattern.permute.xlu0 6
      %2945 = vperm.xlu0 %2944, %v778
      %v2946 = vpop.permute.xlu0 %2945
      %2948 = vset.pattern.permute.xlu0 6
      %2949 = vperm.xlu0 %2948, %v779
      %v2950 = vpop.permute.xlu0 %2949
      %2952 = vset.pattern.permute.xlu0 6
      %2953 = vperm.xlu0 %2952, %v780
      %v2954 = vpop.permute.xlu0 %2953
      %2956 = vset.pattern.permute.xlu0 6
      %2957 = vperm.xlu0 %2956, %v781
      %v2958 = vpop.permute.xlu0 %2957
      %2960 = vset.pattern.permute.xlu0 6
      %2961 = vperm.xlu0 %2960, %v782
      %v2962 = vpop.permute.xlu0 %2961
      %2964 = vset.pattern.permute.xlu0 6
      %2965 = vperm.xlu0 %2964, %v783
      %v2966 = vpop.permute.xlu0 %2965
      %2968 = vset.pattern.permute.xlu0 6
      %2969 = vperm.xlu0 %2968, %v784
      %v2970 = vpop.permute.xlu0 %2969
      %2972 = vset.pattern.permute.xlu0 6
      %2973 = vperm.xlu0 %2972, %v785
      %v2974 = vpop.permute.xlu0 %2973
      %2976 = vset.pattern.permute.xlu0 6
      %2977 = vperm.xlu0 %2976, %v786
      %v2978 = vpop.permute.xlu0 %2977
      %2980 = vset.pattern.permute.xlu0 6
      %2981 = vperm.xlu0 %2980, %v787
      %v2982 = vpop.permute.xlu0 %2981
      %2984 = vset.pattern.permute.xlu0 6
      %2985 = vperm.xlu0 %2984, %v788
      %v2986 = vpop.permute.xlu0 %2985
      %2988 = vset.pattern.permute.xlu0 6
      %2989 = vperm.xlu0 %2988, %v789
      %v2990 = vpop.permute.xlu0 %2989
      %2992 = vset.pattern.permute.xlu0 6
      %2993 = vperm.xlu0 %2992, %v790
      %v2994 = vpop.permute.xlu0 %2993
      %2996 = vset.pattern.permute.xlu0 6
      %2997 = vperm.xlu0 %2996, %v791
      %v2998 = vpop.permute.xlu0 %2997
      %3000 = vset.pattern.permute.xlu0 6
      %3001 = vperm.xlu0 %3000, %v792
      %v3002 = vpop.permute.xlu0 %3001
      %3004 = vset.pattern.permute.xlu0 6
      %3005 = vperm.xlu0 %3004, %v793
      %v3006 = vpop.permute.xlu0 %3005
      %3008 = vset.pattern.permute.xlu0 6
      %3009 = vperm.xlu0 %3008, %v794
      %v3010 = vpop.permute.xlu0 %3009
      %3012 = vset.pattern.permute.xlu0 6
      %3013 = vperm.xlu0 %3012, %v795
      %v3014 = vpop.permute.xlu0 %3013
      %3016 = vset.pattern.permute.xlu0 6
      %3017 = vperm.xlu0 %3016, %v796
      %v3018 = vpop.permute.xlu0 %3017
      %3020 = vset.pattern.permute.xlu0 6
      %3021 = vperm.xlu0 %3020, %v797
      %v3022 = vpop.permute.xlu0 %3021
      %3024 = vset.pattern.permute.xlu0 6
      %3025 = vperm.xlu0 %3024, %v798
      %v3026 = vpop.permute.xlu0 %3025
      %3028 = vset.pattern.permute.xlu0 6
      %3029 = vperm.xlu0 %3028, %v799
      %v3030 = vpop.permute.xlu0 %3029
      %v3032 = vmul.f32 %v2784, %v2934
      %v3033 = vmul.f32 %v2786, %v2934
      %v3034 = vmul.f32 %v2790, %v2938
      %v3035 = vmul.f32 %v2792, %v2938
      %v3036 = vmul.f32 %v2796, %v2942
      %v3037 = vmul.f32 %v2798, %v2942
      %v3038 = vmul.f32 %v2802, %v2946
      %v3039 = vmul.f32 %v2804, %v2946
      %v3040 = vmul.f32 %v2808, %v2950
      %v3041 = vmul.f32 %v2810, %v2950
      %v3042 = vmul.f32 %v2814, %v2954
      %v3043 = vmul.f32 %v2816, %v2954
      %v3044 = vmul.f32 %v2820, %v2958
      %v3045 = vmul.f32 %v2822, %v2958
      %v3046 = vmul.f32 %v2826, %v2962
      %v3047 = vmul.f32 %v2828, %v2962
      %v3048 = vmul.f32 %v2832, %v2966
      %v3049 = vmul.f32 %v2834, %v2966
      %v3050 = vmul.f32 %v2838, %v2970
      %v3051 = vmul.f32 %v2840, %v2970
      %v3052 = vmul.f32 %v2844, %v2974
      %v3053 = vmul.f32 %v2846, %v2974
      %v3054 = vmul.f32 %v2850, %v2978
      %v3055 = vmul.f32 %v2852, %v2978
      %v3056 = vmul.f32 %v2856, %v2982
      %v3057 = vmul.f32 %v2858, %v2982
      %v3058 = vmul.f32 %v2862, %v2986
      %v3059 = vmul.f32 %v2864, %v2986
      %v3060 = vmul.f32 %v2868, %v2990
      %v3061 = vmul.f32 %v2870, %v2990
      %v3062 = vmul.f32 %v2874, %v2994
      %v3063 = vmul.f32 %v2876, %v2994
      %v3064 = vmul.f32 %v2880, %v2998
      %v3065 = vmul.f32 %v2882, %v2998
      %v3066 = vmul.f32 %v2886, %v3002
      %v3067 = vmul.f32 %v2888, %v3002
      %v3068 = vmul.f32 %v2892, %v3006
      %v3069 = vmul.f32 %v2894, %v3006
      %v3070 = vmul.f32 %v2898, %v3010
      %v3071 = vmul.f32 %v2900, %v3010
      %v3072 = vmul.f32 %v2904, %v3014
      %v3073 = vmul.f32 %v2906, %v3014
      %v3074 = vmul.f32 %v2910, %v3018
      %v3075 = vmul.f32 %v2912, %v3018
      %v3076 = vmul.f32 %v2916, %v3022
      %v3077 = vmul.f32 %v2918, %v3022
      %v3078 = vmul.f32 %v2922, %v3026
      %v3079 = vmul.f32 %v2924, %v3026
      %v3080 = vmul.f32 %v2928, %v3030
      %v3081 = vmul.f32 %v2930, %v3030
      %3082 = vset.pattern.permute.xlu0 7
      %3083 = vperm.xlu0 %3082, %v775
      %v3084 = vpop.permute.xlu0 %3083
      %3086 = vset.pattern.permute.xlu0 7
      %3087 = vperm.xlu0 %3086, %v776
      %v3088 = vpop.permute.xlu0 %3087
      %3090 = vset.pattern.permute.xlu0 7
      %3091 = vperm.xlu0 %3090, %v777
      %v3092 = vpop.permute.xlu0 %3091
      %3094 = vset.pattern.permute.xlu0 7
      %3095 = vperm.xlu0 %3094, %v778
      %v3096 = vpop.permute.xlu0 %3095
      %3098 = vset.pattern.permute.xlu0 7
      %3099 = vperm.xlu0 %3098, %v779
      %v3100 = vpop.permute.xlu0 %3099
      %3102 = vset.pattern.permute.xlu0 7
      %3103 = vperm.xlu0 %3102, %v780
      %v3104 = vpop.permute.xlu0 %3103
      %3106 = vset.pattern.permute.xlu0 7
      %3107 = vperm.xlu0 %3106, %v781
      %v3108 = vpop.permute.xlu0 %3107
      %3110 = vset.pattern.permute.xlu0 7
      %3111 = vperm.xlu0 %3110, %v782
      %v3112 = vpop.permute.xlu0 %3111
      %3114 = vset.pattern.permute.xlu0 7
      %3115 = vperm.xlu0 %3114, %v783
      %v3116 = vpop.permute.xlu0 %3115
      %3118 = vset.pattern.permute.xlu0 7
      %3119 = vperm.xlu0 %3118, %v784
      %v3120 = vpop.permute.xlu0 %3119
      %3122 = vset.pattern.permute.xlu0 7
      %3123 = vperm.xlu0 %3122, %v785
      %v3124 = vpop.permute.xlu0 %3123
      %3126 = vset.pattern.permute.xlu0 7
      %3127 = vperm.xlu0 %3126, %v786
      %v3128 = vpop.permute.xlu0 %3127
      %3130 = vset.pattern.permute.xlu0 7
      %3131 = vperm.xlu0 %3130, %v787
      %v3132 = vpop.permute.xlu0 %3131
      %3134 = vset.pattern.permute.xlu0 7
      %3135 = vperm.xlu0 %3134, %v788
      %v3136 = vpop.permute.xlu0 %3135
      %3138 = vset.pattern.permute.xlu0 7
      %3139 = vperm.xlu0 %3138, %v789
      %v3140 = vpop.permute.xlu0 %3139
      %3142 = vset.pattern.permute.xlu0 7
      %3143 = vperm.xlu0 %3142, %v790
      %v3144 = vpop.permute.xlu0 %3143
      %3146 = vset.pattern.permute.xlu0 7
      %3147 = vperm.xlu0 %3146, %v791
      %v3148 = vpop.permute.xlu0 %3147
      %3150 = vset.pattern.permute.xlu0 7
      %3151 = vperm.xlu0 %3150, %v792
      %v3152 = vpop.permute.xlu0 %3151
      %3154 = vset.pattern.permute.xlu0 7
      %3155 = vperm.xlu0 %3154, %v793
      %v3156 = vpop.permute.xlu0 %3155
      %3158 = vset.pattern.permute.xlu0 7
      %3159 = vperm.xlu0 %3158, %v794
      %v3160 = vpop.permute.xlu0 %3159
      %3162 = vset.pattern.permute.xlu0 7
      %3163 = vperm.xlu0 %3162, %v795
      %v3164 = vpop.permute.xlu0 %3163
      %3166 = vset.pattern.permute.xlu0 7
      %3167 = vperm.xlu0 %3166, %v796
      %v3168 = vpop.permute.xlu0 %3167
      %3170 = vset.pattern.permute.xlu0 7
      %3171 = vperm.xlu0 %3170, %v797
      %v3172 = vpop.permute.xlu0 %3171
      %3174 = vset.pattern.permute.xlu0 7
      %3175 = vperm.xlu0 %3174, %v798
      %v3176 = vpop.permute.xlu0 %3175
      %3178 = vset.pattern.permute.xlu0 7
      %3179 = vperm.xlu0 %3178, %v799
      %v3180 = vpop.permute.xlu0 %3179
      %v3182 = vadd.f32 %v3032, %v3084
      %v3183 = vadd.f32 %v3033, %v3084
      %v3184 = vadd.f32 %v3034, %v3088
      %v3185 = vadd.f32 %v3035, %v3088
      %v3186 = vadd.f32 %v3036, %v3092
      %v3187 = vadd.f32 %v3037, %v3092
      %v3188 = vadd.f32 %v3038, %v3096
      %v3189 = vadd.f32 %v3039, %v3096
      %v3190 = vadd.f32 %v3040, %v3100
      %v3191 = vadd.f32 %v3041, %v3100
      %v3192 = vadd.f32 %v3042, %v3104
      %v3193 = vadd.f32 %v3043, %v3104
      %v3194 = vadd.f32 %v3044, %v3108
      %v3195 = vadd.f32 %v3045, %v3108
      %v3196 = vadd.f32 %v3046, %v3112
      %v3197 = vadd.f32 %v3047, %v3112
      %v3198 = vadd.f32 %v3048, %v3116
      %v3199 = vadd.f32 %v3049, %v3116
      %v3200 = vadd.f32 %v3050, %v3120
      %v3201 = vadd.f32 %v3051, %v3120
      %v3202 = vadd.f32 %v3052, %v3124
      %v3203 = vadd.f32 %v3053, %v3124
      %v3204 = vadd.f32 %v3054, %v3128
      %v3205 = vadd.f32 %v3055, %v3128
      %v3206 = vadd.f32 %v3056, %v3132
      %v3207 = vadd.f32 %v3057, %v3132
      %v3208 = vadd.f32 %v3058, %v3136
      %v3209 = vadd.f32 %v3059, %v3136
      %v3210 = vadd.f32 %v3060, %v3140
      %v3211 = vadd.f32 %v3061, %v3140
      %v3212 = vadd.f32 %v3062, %v3144
      %v3213 = vadd.f32 %v3063, %v3144
      %v3214 = vadd.f32 %v3064, %v3148
      %v3215 = vadd.f32 %v3065, %v3148
      %v3216 = vadd.f32 %v3066, %v3152
      %v3217 = vadd.f32 %v3067, %v3152
      %v3218 = vadd.f32 %v3068, %v3156
      %v3219 = vadd.f32 %v3069, %v3156
      %v3220 = vadd.f32 %v3070, %v3160
      %v3221 = vadd.f32 %v3071, %v3160
      %v3222 = vadd.f32 %v3072, %v3164
      %v3223 = vadd.f32 %v3073, %v3164
      %v3224 = vadd.f32 %v3074, %v3168
      %v3225 = vadd.f32 %v3075, %v3168
      %v3226 = vadd.f32 %v3076, %v3172
      %v3227 = vadd.f32 %v3077, %v3172
      %v3228 = vadd.f32 %v3078, %v3176
      %v3229 = vadd.f32 %v3079, %v3176
      %v3230 = vadd.f32 %v3080, %v3180
      %v3231 = vadd.f32 %v3081, %v3180
      %v3232 = vmax.f32 %v3182, 0.0
      %v3233 = vmax.f32 %v3183, 0.0
      %v3234 = vmax.f32 %v3184, 0.0
      %v3235 = vmax.f32 %v3185, 0.0
      %v3236 = vmax.f32 %v3186, 0.0
      %v3237 = vmax.f32 %v3187, 0.0
      %v3238 = vmax.f32 %v3188, 0.0
      %v3239 = vmax.f32 %v3189, 0.0
      %v3240 = vmax.f32 %v3190, 0.0
      %v3241 = vmax.f32 %v3191, 0.0
      %v3242 = vmax.f32 %v3192, 0.0
      %v3243 = vmax.f32 %v3193, 0.0
      %v3244 = vmax.f32 %v3194, 0.0
      %v3245 = vmax.f32 %v3195, 0.0
      %v3246 = vmax.f32 %v3196, 0.0
      %v3247 = vmax.f32 %v3197, 0.0
      %v3248 = vmax.f32 %v3198, 0.0
      %v3249 = vmax.f32 %v3199, 0.0
      %v3250 = vmax.f32 %v3200, 0.0
      %v3251 = vmax.f32 %v3201, 0.0
      %v3252 = vmax.f32 %v3202, 0.0
      %v3253 = vmax.f32 %v3203, 0.0
      %v3254 = vmax.f32 %v3204, 0.0
      %v3255 = vmax.f32 %v3205, 0.0
      %v3256 = vmax.f32 %v3206, 0.0
      %v3257 = vmax.f32 %v3207, 0.0
      %v3258 = vmax.f32 %v3208, 0.0
      %v3259 = vmax.f32 %v3209, 0.0
      %v3260 = vmax.f32 %v3210, 0.0
      %v3261 = vmax.f32 %v3211, 0.0
      %v3262 = vmax.f32 %v3212, 0.0
      %v3263 = vmax.f32 %v3213, 0.0
      %v3264 = vmax.f32 %v3214, 0.0
      %v3265 = vmax.f32 %v3215, 0.0
      %v3266 = vmax.f32 %v3216, 0.0
      %v3267 = vmax.f32 %v3217, 0.0
      %v3268 = vmax.f32 %v3218, 0.0
      %v3269 = vmax.f32 %v3219, 0.0
      %v3270 = vmax.f32 %v3220, 0.0
      %v3271 = vmax.f32 %v3221, 0.0
      %v3272 = vmax.f32 %v3222, 0.0
      %v3273 = vmax.f32 %v3223, 0.0
      %v3274 = vmax.f32 %v3224, 0.0
      %v3275 = vmax.f32 %v3225, 0.0
      %v3276 = vmax.f32 %v3226, 0.0
      %v3277 = vmax.f32 %v3227, 0.0
      %v3278 = vmax.f32 %v3228, 0.0
      %v3279 = vmax.f32 %v3229, 0.0
      %v3280 = vmax.f32 %v3230, 0.0
      %v3281 = vmax.f32 %v3231, 0.0
      %v3282 = vld [vmem:[%s10] sm:$0xff]
      %v3283 = vld [vmem:[%s10 + $0x8] sm:$0xff]
      %v3284 = vld [vmem:[%s10 + $0x10] sm:$0xff]
      %v3285 = vld [vmem:[%s10 + $0x18] sm:$0xff]
      %v3286 = vld [vmem:[%s10 + $0x20] sm:$0xff]
      %v3287 = vld [vmem:[%s10 + $0x28] sm:$0xff]
      %v3288 = vld [vmem:[%s10 + $0x30] sm:$0xff]
      %v3289 = vld [vmem:[%s10 + $0x38] sm:$0xff]
      %v3290 = vld [vmem:[%s10 + $0x40] sm:$0xff]
      %v3291 = vld [vmem:[%s10 + $0x48] sm:$0xff]
      %v3292 = vld [vmem:[%s10 + $0x50] sm:$0xff]
      %v3293 = vld [vmem:[%s10 + $0x58] sm:$0xff]
      %v3294 = vld [vmem:[%s10 + $0x60] sm:$0xff]
      %v3295 = vld [vmem:[%s10 + $0x68] sm:$0xff]
      %v3296 = vld [vmem:[%s10 + $0x70] sm:$0xff]
      %v3297 = vld [vmem:[%s10 + $0x78] sm:$0xff]
      %v3298 = vld [vmem:[%s10 + $0x80] sm:$0xff]
      %v3299 = vld [vmem:[%s10 + $0x88] sm:$0xff]
      %v3300 = vld [vmem:[%s10 + $0x90] sm:$0xff]
      %v3301 = vld [vmem:[%s10 + $0x98] sm:$0xff]
      %v3302 = vld [vmem:[%s10 + $0xa0] sm:$0xff]
      %v3303 = vld [vmem:[%s10 + $0xa8] sm:$0xff]
      %v3304 = vld [vmem:[%s10 + $0xb0] sm:$0xff]
      %v3305 = vld [vmem:[%s10 + $0xb8] sm:$0xff]
      %v3306 = vld [vmem:[%s10 + $0xc0] sm:$0xff]
      %v3307 = vld [vmem:[%s11] sm:$0x1]
      %v3309 = vlaneseq
      %v3310 = vshrl.u32 %v3309, 7
      %v3311 = vsub.s32 0, %v3310
      %v3312 = vrot.slane %v3307, %v3311
      %v3315 = vsel %vm1237, %v3233, 0
      %v3318 = vsel %vm1237, %v3235, 0
      %v3321 = vsel %vm1237, %v3237, 0
      %v3324 = vsel %vm1237, %v3239, 0
      %v3327 = vsel %vm1237, %v3241, 0
      %v3330 = vsel %vm1237, %v3243, 0
      %v3333 = vsel %vm1237, %v3245, 0
      %v3336 = vsel %vm1237, %v3247, 0
      %v3339 = vsel %vm1237, %v3249, 0
      %v3342 = vsel %vm1237, %v3251, 0
      %v3345 = vsel %vm1237, %v3253, 0
      %v3348 = vsel %vm1237, %v3255, 0
      %v3351 = vsel %vm1237, %v3257, 0
      %v3354 = vsel %vm1237, %v3259, 0
      %v3357 = vsel %vm1237, %v3261, 0
      %v3360 = vsel %vm1237, %v3263, 0
      %v3363 = vsel %vm1237, %v3265, 0
      %v3366 = vsel %vm1237, %v3267, 0
      %v3369 = vsel %vm1237, %v3269, 0
      %v3372 = vsel %vm1237, %v3271, 0
      %v3375 = vsel %vm1237, %v3273, 0
      %v3378 = vsel %vm1237, %v3275, 0
      %v3381 = vsel %vm1237, %v3277, 0
      %v3384 = vsel %vm1237, %v3279, 0
      %v3387 = vsel %vm1237, %v3281, 0
      %3389 = vmatprep.subr.mxu0 0.0
      %3390 = vmatpush1.msra.mxu0 %v3282
      %3391 = vmatprep.subr.mxu0 0.0
      %3392 = vmatpush1.msra.mxu0 %v3283
      %3393 = vmatprep.subr.mxu0 0.0
      %3394 = vmatpush1.msra.mxu0 %v3284
      %3395 = vmatprep.subr.mxu0 0.0
      %3396 = vmatpush1.msra.mxu0 %v3285
      %3397 = vmatprep.subr.mxu0 0.0
      %3398 = vmatpush1.msra.mxu0 %v3286
      %3399 = vmatprep.subr.mxu0 0.0
      %3400 = vmatpush1.msra.mxu0 %v3287
      %3401 = vmatprep.subr.mxu0 0.0
      %3402 = vmatpush1.msra.mxu0 %v3288
      %3403 = vmatprep.subr.mxu0 0.0
      %3404 = vmatpush1.msra.mxu0 %v3289
      %3405 = vmatprep.subr.mxu0 0.0
      %3406 = vmatpush1.msra.mxu0 %v3290
      %3407 = vmatprep.subr.mxu0 0.0
      %3408 = vmatpush1.msra.mxu0 %v3291
      %3409 = vmatprep.subr.mxu0 0.0
      %3410 = vmatpush1.msra.mxu0 %v3292
      %3411 = vmatprep.subr.mxu0 0.0
      %3412 = vmatpush1.msra.mxu0 %v3293
      %3413 = vmatprep.subr.mxu0 0.0
      %3414 = vmatpush1.msra.mxu0 %v3294
      %3415 = vmatprep.subr.mxu0 0.0
      %3416 = vmatpush1.msra.mxu0 %v3295
      %3417 = vmatprep.subr.mxu0 0.0
      %3418 = vmatpush1.msra.mxu0 %v3296
      %3419 = vmatprep.subr.mxu0 0.0
      %3420 = vmatpush1.msra.mxu0 %v3297
      %3421 = vmatprep.subr.mxu0 0.0
      %3422 = vmatpush1.msra.mxu0 %v3298
      %3423 = vmatprep.subr.mxu0 0.0
      %3424 = vmatpush1.msra.mxu0 %v3299
      %3425 = vmatprep.subr.mxu0 0.0
      %3426 = vmatpush1.msra.mxu0 %v3300
      %3427 = vmatprep.subr.mxu0 0.0
      %3428 = vmatpush1.msra.mxu0 %v3301
      %3429 = vmatprep.subr.mxu0 0.0
      %3430 = vmatpush1.msra.mxu0 %v3302
      %3431 = vmatprep.subr.mxu0 0.0
      %3432 = vmatpush1.msra.mxu0 %v3303
      %3433 = vmatprep.subr.mxu0 0.0
      %3434 = vmatpush1.msra.mxu0 %v3304
      %3435 = vmatprep.subr.mxu0 0.0
      %3436 = vmatpush1.msra.mxu0 %v3305
      %3437 = vmatprep.subr.mxu0 0.0
      %3438 = vmatpush1.msra.mxu0 %v3306
      %3439 = vmatprep.subr.mxu0 0.0
      %3440 = vmatpush1.msra.mxu0 0.0
      %3441 = vmatprep.subr.mxu0 0.0
      %3442 = vmatpush1.msra.mxu0 0.0
      %3443 = vmatprep.subr.mxu0 0.0
      %3444 = vmatpush1.msra.mxu0 0.0
      %3445 = vmatprep.subr.mxu0 0.0
      %3446 = vmatpush1.msra.mxu0 0.0
      %3447 = vmatprep.subr.mxu0 0.0
      %3448 = vmatpush1.msra.mxu0 0.0
      %3449 = vmatprep.subr.mxu0 0.0
      %3450 = vmatpush1.msra.mxu0 0.0
      %3451 = vmatprep.subr.mxu0 0.0
      %3452 = vmatpush1.msra.mxu0 0.0
      %3453 = vmatprep.mubr.f32.mxu0 %v3315
      %3454 = vmatmul.mubr.f32.gmra.mrb[0].mxu0 %v3232
      %v3455 = vpop.f32.mrb[0].mxu0
      %v3456 = vadd.f32 %v3312, %v3455
      %v3457 = vpop.f32.mrb[0].mxu0
      %3458 = vmatprep.mubr.f32.mxu0 %v3318
      %3459 = vmatmul.mubr.f32.gmra.mrb[0].mxu0 %v3234
      %v3460 = vpop.f32.mrb[0].mxu0
      %v3461 = vadd.f32 %v3312, %v3460
      %v3462 = vpop.f32.mrb[0].mxu0
      %3463 = vmatprep.mubr.f32.mxu0 %v3321
      %3464 = vmatmul.mubr.f32.gmra.mrb[0].mxu0 %v3236
      %v3465 = vpop.f32.mrb[0].mxu0
      %v3466 = vadd.f32 %v3312, %v3465
      %v3467 = vpop.f32.mrb[0].mxu0
      %3468 = vmatprep.mubr.f32.mxu0 %v3324
      %3469 = vmatmul.mubr.f32.gmra.mrb[0].mxu0 %v3238
      %v3470 = vpop.f32.mrb[0].mxu0
      %v3471 = vadd.f32 %v3312, %v3470
      %v3472 = vpop.f32.mrb[0].mxu0
      %3473 = vmatprep.mubr.f32.mxu0 %v3327
      %3474 = vmatmul.mubr.f32.gmra.mrb[0].mxu0 %v3240
      %v3475 = vpop.f32.mrb[0].mxu0
      %v3476 = vadd.f32 %v3312, %v3475
      %v3477 = vpop.f32.mrb[0].mxu0
      %3478 = vmatprep.mubr.f32.mxu0 %v3330
      %3479 = vmatmul.mubr.f32.gmra.mrb[0].mxu0 %v3242
      %v3480 = vpop.f32.mrb[0].mxu0
      %v3481 = vadd.f32 %v3312, %v3480
      %v3482 = vpop.f32.mrb[0].mxu0
      %3483 = vmatprep.mubr.f32.mxu0 %v3333
      %3484 = vmatmul.mubr.f32.gmra.mrb[0].mxu0 %v3244
      %v3485 = vpop.f32.mrb[0].mxu0
      %v3486 = vadd.f32 %v3312, %v3485
      %v3487 = vpop.f32.mrb[0].mxu0
      %3488 = vmatprep.mubr.f32.mxu0 %v3336
      %3489 = vmatmul.mubr.f32.gmra.mrb[0].mxu0 %v3246
      %v3490 = vpop.f32.mrb[0].mxu0
      %v3491 = vadd.f32 %v3312, %v3490
      %v3492 = vpop.f32.mrb[0].mxu0
      %3493 = vmatprep.mubr.f32.mxu0 %v3339
      %3494 = vmatmul.mubr.f32.gmra.mrb[0].mxu0 %v3248
      %v3495 = vpop.f32.mrb[0].mxu0
      %v3496 = vadd.f32 %v3312, %v3495
      %v3497 = vpop.f32.mrb[0].mxu0
      %3498 = vmatprep.mubr.f32.mxu0 %v3342
      %3499 = vmatmul.mubr.f32.gmra.mrb[0].mxu0 %v3250
      %v3500 = vpop.f32.mrb[0].mxu0
      %v3501 = vadd.f32 %v3312, %v3500
      %v3502 = vpop.f32.mrb[0].mxu0
      %3503 = vmatprep.mubr.f32.mxu0 %v3345
      %3504 = vmatmul.mubr.f32.gmra.mrb[0].mxu0 %v3252
      %v3505 = vpop.f32.mrb[0].mxu0
      %v3506 = vadd.f32 %v3312, %v3505
      %v3507 = vpop.f32.mrb[0].mxu0
      %3508 = vmatprep.mubr.f32.mxu0 %v3348
      %3509 = vmatmul.mubr.f32.gmra.mrb[0].mxu0 %v3254
      %v3510 = vpop.f32.mrb[0].mxu0
      %v3511 = vadd.f32 %v3312, %v3510
      %v3512 = vpop.f32.mrb[0].mxu0
      %3513 = vmatprep.mubr.f32.mxu0 %v3351
      %3514 = vmatmul.mubr.f32.gmra.mrb[0].mxu0 %v3256
      %v3515 = vpop.f32.mrb[0].mxu0
      %v3516 = vadd.f32 %v3312, %v3515
      %v3517 = vpop.f32.mrb[0].mxu0
      %3518 = vmatprep.mubr.f32.mxu0 %v3354
      %3519 = vmatmul.mubr.f32.gmra.mrb[0].mxu0 %v3258
      %v3520 = vpop.f32.mrb[0].mxu0
      %v3521 = vadd.f32 %v3312, %v3520
      %v3522 = vpop.f32.mrb[0].mxu0
      %3523 = vmatprep.mubr.f32.mxu0 %v3357
      %3524 = vmatmul.mubr.f32.gmra.mrb[0].mxu0 %v3260
      %v3525 = vpop.f32.mrb[0].mxu0
      %v3526 = vadd.f32 %v3312, %v3525
      %v3527 = vpop.f32.mrb[0].mxu0
      %3528 = vmatprep.mubr.f32.mxu0 %v3360
      %3529 = vmatmul.mubr.f32.gmra.mrb[0].mxu0 %v3262
      %v3530 = vpop.f32.mrb[0].mxu0
      %v3531 = vadd.f32 %v3312, %v3530
      %v3532 = vpop.f32.mrb[0].mxu0
      %3533 = vmatprep.mubr.f32.mxu0 %v3363
      %3534 = vmatmul.mubr.f32.gmra.mrb[0].mxu0 %v3264
      %v3535 = vpop.f32.mrb[0].mxu0
      %v3536 = vadd.f32 %v3312, %v3535
      %v3537 = vpop.f32.mrb[0].mxu0
      %3538 = vmatprep.mubr.f32.mxu0 %v3366
      %3539 = vmatmul.mubr.f32.gmra.mrb[0].mxu0 %v3266
      %v3540 = vpop.f32.mrb[0].mxu0
      %v3541 = vadd.f32 %v3312, %v3540
      %v3542 = vpop.f32.mrb[0].mxu0
      %3543 = vmatprep.mubr.f32.mxu0 %v3369
      %3544 = vmatmul.mubr.f32.gmra.mrb[0].mxu0 %v3268
      %v3545 = vpop.f32.mrb[0].mxu0
      %v3546 = vadd.f32 %v3312, %v3545
      %v3547 = vpop.f32.mrb[0].mxu0
      %3548 = vmatprep.mubr.f32.mxu0 %v3372
      %3549 = vmatmul.mubr.f32.gmra.mrb[0].mxu0 %v3270
      %v3550 = vpop.f32.mrb[0].mxu0
      %v3551 = vadd.f32 %v3312, %v3550
      %v3552 = vpop.f32.mrb[0].mxu0
      %3553 = vmatprep.mubr.f32.mxu0 %v3375
      %3554 = vmatmul.mubr.f32.gmra.mrb[0].mxu0 %v3272
      %v3555 = vpop.f32.mrb[0].mxu0
      %v3556 = vadd.f32 %v3312, %v3555
      %v3557 = vpop.f32.mrb[0].mxu0
      %3558 = vmatprep.mubr.f32.mxu0 %v3378
      %3559 = vmatmul.mubr.f32.gmra.mrb[0].mxu0 %v3274
      %v3560 = vpop.f32.mrb[0].mxu0
      %v3561 = vadd.f32 %v3312, %v3560
      %v3562 = vpop.f32.mrb[0].mxu0
      %3563 = vmatprep.mubr.f32.mxu0 %v3381
      %3564 = vmatmul.mubr.f32.gmra.mrb[0].mxu0 %v3276
      %v3565 = vpop.f32.mrb[0].mxu0
      %v3566 = vadd.f32 %v3312, %v3565
      %v3567 = vpop.f32.mrb[0].mxu0
      %3568 = vmatprep.mubr.f32.mxu0 %v3384
      %3569 = vmatmul.mubr.f32.gmra.mrb[0].mxu0 %v3278
      %v3570 = vpop.f32.mrb[0].mxu0
      %v3571 = vadd.f32 %v3312, %v3570
      %v3572 = vpop.f32.mrb[0].mxu0
      %3573 = vmatprep.mubr.f32.mxu0 %v3387
      %3574 = vmatmul.mubr.f32.gmra.mrb[0].mxu0 %v3280
      %v3575 = vpop.f32.mrb[0].mxu0
      %v3576 = vadd.f32 %v3312, %v3575
      %v3577 = vpop.f32.mrb[0].mxu0
      %3578 = vdwg.mxu0
      %vm3579 = vcmask 130048
      %3580 = vst.msk [vmem:[%s437] sm:$0xff] %vm3579, %v3456
      %3581 = vst.msk [vmem:[%s437 + $0x8] sm:$0xff] %vm3579, %v3461
      %3582 = vst.msk [vmem:[%s437 + $0x10] sm:$0xff] %vm3579, %v3466
      %3583 = vst.msk [vmem:[%s437 + $0x18] sm:$0xff] %vm3579, %v3471
      %3584 = vst.msk [vmem:[%s437 + $0x20] sm:$0xff] %vm3579, %v3476
      %3585 = vst.msk [vmem:[%s437 + $0x28] sm:$0xff] %vm3579, %v3481
      %3586 = vst.msk [vmem:[%s437 + $0x30] sm:$0xff] %vm3579, %v3486
      %3587 = vst.msk [vmem:[%s437 + $0x38] sm:$0xff] %vm3579, %v3491
      %3588 = vst.msk [vmem:[%s437 + $0x40] sm:$0xff] %vm3579, %v3496
      %3589 = vst.msk [vmem:[%s437 + $0x48] sm:$0xff] %vm3579, %v3501
      %3590 = vst.msk [vmem:[%s437 + $0x50] sm:$0xff] %vm3579, %v3506
      %3591 = vst.msk [vmem:[%s437 + $0x58] sm:$0xff] %vm3579, %v3511
      %3592 = vst.msk [vmem:[%s437 + $0x60] sm:$0xff] %vm3579, %v3516
      %3593 = vst.msk [vmem:[%s437 + $0x68] sm:$0xff] %vm3579, %v3521
      %3594 = vst.msk [vmem:[%s437 + $0x70] sm:$0xff] %vm3579, %v3526
      %3595 = vst.msk [vmem:[%s437 + $0x78] sm:$0xff] %vm3579, %v3531
      %3596 = vst.msk [vmem:[%s437 + $0x80] sm:$0xff] %vm3579, %v3536
      %3597 = vst.msk [vmem:[%s437 + $0x88] sm:$0xff] %vm3579, %v3541
      %3598 = vst.msk [vmem:[%s437 + $0x90] sm:$0xff] %vm3579, %v3546
      %3599 = vst.msk [vmem:[%s437 + $0x98] sm:$0xff] %vm3579, %v3551
      %3600 = vst.msk [vmem:[%s437 + $0xa0] sm:$0xff] %vm3579, %v3556
      %3601 = vst.msk [vmem:[%s437 + $0xa8] sm:$0xff] %vm3579, %v3561
      %3602 = vst.msk [vmem:[%s437 + $0xb0] sm:$0xff] %vm3579, %v3566
      %3603 = vst.msk [vmem:[%s437 + $0xb8] sm:$0xff] %vm3579, %v3571
      %3604 = vst.msk [vmem:[%s437 + $0xc0] sm:$0xff] %vm3579, %v3576
      %s3605 = smul.u32 25, %s23
      %p3606 = scmp.lt.s32.totalorder %s3605, 49
      %s3607 = scalar_select %p3606, %s3605, 49
      %s3608 = smul.addr %s3607, 8
      %s3609 = scalar_lea.vmem %s12, %s3608
      // Predicated region
      $region69: #{network_forward.3} parent=67 // pred_check
        %p3610 = pneg %p303
      $region70: #{network_forward.3} parent=67 // pred_check_branch
        %3612 = sbr.rel (%p3610) target = $region72
      $region71: #{network_forward.3} parent=67 // pred_region
        %s3613 = smul.u32 25, %s23
      $region72: #{network_forward.3} parent=67 // pred_fallthru
        _
    $region68: #{network_forward.3} parent=5 // pred_fallthru
      _
    %p3614 = scmp.le.s32.totalorder 2, %s18
    // Predicated region
    $region73: #{network_forward.3} parent=5 // pred_check
      %p3615 = pneg %p3614
    $region74: #{network_forward.3} parent=5 // pred_check_branch
      %3617 = sbr.rel (%p3615) target = $region76
    $region75: #{network_forward.3} parent=5 // pred_region
      %s3618 = ssub.s32 %s18, 2
      // Predicated region
      $region77: #{network_forward.3} parent=75 // pred_check
        %p3619 = pneg %p309
      $region78: #{network_forward.3} parent=75 // pred_check_branch
        %3621 = sbr.rel (%p3619) target = $region80
      $region79: #{network_forward.3} parent=75 // pred_region
        %s3622 = smul.u32 25, %s24
        %p3623 = scmp.lt.s32.totalorder %s3622, 49
        %s3624 = scalar_select %p3623, %s3622, 49
        %s3625 = smul.addr %s3624, 8
        %s3626 = scalar_lea.vmem %s12, %s3625
      $region80: #{network_forward.3} parent=75 // pred_fallthru
        _
    $region76: #{network_forward.3} parent=5 // pred_fallthru
      _
  $region6: #{network_forward.3} parent=0 // loop_footer
    %s22 = sadd.s32 1, %s18
  $region7: #{network_forward.3} parent=0 // loop_footer_branch
    %17 = sbr.rel target = $region3
  $region8: #{network_forward.3} parent=0 // loop_exit
    _

</llo_original>
